<compile_context>
chip_gen: v6e
topology: v6e:2x2x1
jax: 0.10.0
libtpu: 0.0.40
codegen_flags: <defaults>
</compile_context>

<pallas_src>
import functools

import jax
import jax.numpy as jnp
from jax import lax
from jax.experimental import pallas as pl
from jax.experimental.pallas import tpu as pltpu

NUM_CLASSES = 80
NUM_ANCHORS = 3
NUM_LAYERS = 3
OUT_CHANNELS = (4 + 1 + NUM_CLASSES) * NUM_ANCHORS  # 255
BN_EPS = 1e-5


def _round_up(x, m):
    return ((x + m - 1) // m) * m


# ----------------------------------------------------------------------------
# Pallas kernel: one decoder block for a small block of batch elements.
# ----------------------------------------------------------------------------
def _decoder_block_kernel(x_ref, w3_ref, b3_ref, w1_ref, b1_ref, o_ref, *,
                          wp, row_chunk):
    # x_ref : (NB, Np, C)   flattened zero-padded NHWC input, Np = (H+3)*(W+2)
    # w3_ref: (3, 3C, C)    3x3 conv weight (BN scale folded), row = kw*C + ci
    # b3_ref: (1, C)        BN-folded bias (f32)
    # w1_ref: (C, Cp)       1x1 conv weight, out channels zero-padded 255 -> Cp
    # b1_ref: (1, Cp)
    # o_ref : (NB, M, Cp)   M = H*(W+2) flat output rows (padding columns are
    #                       computed but sliced away in the wrapper)
    nb, m_total, _ = o_ref.shape

    for n in range(nb):
        m0 = 0
        while m0 < m_total:                       # static (unrolled) chunk loop
            tm = min(row_chunk, m_total - m0)

            # 3x3 conv: for each kernel row kh, gather the three kw-shifted
            # contiguous row windows (lane-aligned channel concat) and do one
            # (tm, 3C) @ (3C, C) MXU matmul.  All slice offsets are static.
            acc = None
            for kh in range(3):
                base = m0 + kh * wp
                xs = jnp.concatenate(
                    [x_ref[n, pl.ds(base + kw, tm), :] for kw in range(3)],
                    axis=1)
                part = jnp.dot(xs, w3_ref[kh],
                               preferred_element_type=jnp.float32)
                acc = part if acc is None else acc + part

            # Folded-BN bias + ReLU (VPU), then 1x1 conv matmul (MXU).
            y = jnp.maximum(acc + b3_ref[...], 0.0).astype(w1_ref.dtype)
            out = jnp.dot(y, w1_ref[...],
                          preferred_element_type=jnp.float32) + b1_ref[...]

            o_ref[n, pl.ds(m0, tm), :] = out.astype(o_ref.dtype)
            m0 += tm


# ----------------------------------------------------------------------------
# Wrapper: layout plumbing + pallas_call.
# ----------------------------------------------------------------------------
@functools.partial(jax.jit, static_argnames=("batch_block", "row_chunk"))
def decoder_block_pallas(x_nchw, operands, *, batch_block=1, row_chunk=512):
    """One decoder block.  x_nchw: (B, C, H, W) f32 -> (B, 255, H, W) f32."""
    w3, b3, w1, b1 = operands
    B, C, H, W = x_nchw.shape
    compute_dtype = w3.dtype
    Wp, Hp = W + 2, H + 3            # 1-px conv halo; extra bottom rows keep
    Np, M = Hp * Wp, H * Wp          # every tap slice of the flat array in-bounds
    Cp = w1.shape[-1]

    nb = batch_block if (B % batch_block == 0) else 1

    # NCHW -> NHWC (in the compute dtype), zero-pad, flatten the spatial dims
    # so each 3x3 tap is a single contiguous row shift of the flat array.
    x = jnp.transpose(x_nchw, (0, 2, 3, 1)).astype(compute_dtype)
    x = jnp.pad(x, ((0, 0), (1, 2), (1, 1), (0, 0)))
    x = x.reshape(B, Np, C)

    kernel = functools.partial(_decoder_block_kernel, wp=Wp,
                               row_chunk=row_chunk)
    out = pl.pallas_call(
        kernel,
        out_shape=jax.ShapeDtypeStruct((B, M, Cp), jnp.float32),
        grid=(B // nb,),
        in_specs=[
            pl.BlockSpec((nb, Np, C), lambda i: (i, 0, 0)),
            # Weights/biases: constant index_map -> fetched once, kept resident.
            pl.BlockSpec((3, 3 * C, C), lambda i: (0, 0, 0)),
            pl.BlockSpec((1, C), lambda i: (0, 0)),
            pl.BlockSpec((C, Cp), lambda i: (0, 0)),
            pl.BlockSpec((1, Cp), lambda i: (0, 0)),
        ],
        out_specs=pl.BlockSpec((nb, M, Cp), lambda i: (i, 0, 0)),
        compiler_params=pltpu.CompilerParams(
            dimension_semantics=("parallel",),
            vmem_limit_bytes=48 * 1024 * 1024),
    )(x, w3, b3, w1, b1)

    # Drop the W-padding columns and the 255->256 lane padding, back to NCHW.
    out = out.reshape(B, H, Wp, Cp)[:, :, :W, :OUT_CHANNELS]
    return jnp.transpose(out, (0, 3, 1, 2))


def yolov3_decoder_forward(feats, operands, *, batch_block=1, row_chunk=512):
    """feats: tensor or list of NCHW tensors -> list of NCHW predictions."""
    if not isinstance(feats, (tuple, list)):
        feats = (feats,)
    return [
        decoder_block_pallas(f, ops, batch_block=batch_block,
                             row_chunk=row_chunk)
        for f, ops in zip(feats, operands)
    ]


# ----------------------------------------------------------------------------
# Parameters: raw (PyTorch-like) params + kernel-operand preparation.
# ----------------------------------------------------------------------------
def init_decoder_params(key, in_channels):
    """kaiming_uniform_(a=1) conv weights, zero biases, default BN stats."""
    params = []
    for _ in range(NUM_LAYERS):
        key, k3, k1 = jax.random.split(key, 3)
        bound3 = (3.0 / (in_channels * 9)) ** 0.5
        w3_hwio = jax.random.uniform(
            k3, (3, 3, in_channels, in_channels), jnp.float32, -bound3, bound3)
        bound1 = (3.0 / in_channels) ** 0.5
        w1 = jax.random.uniform(
            k1, (in_channels, OUT_CHANNELS), jnp.float32, -bound1, bound1)
        params.append(dict(
            w3_hwio=w3_hwio,
            b3=jnp.zeros((in_channels,), jnp.float32),
            gamma=jnp.ones((in_channels,), jnp.float32),
            beta=jnp.zeros((in_channels,), jnp.float32),
            mean=jnp.zeros((in_channels,), jnp.float32),
            var=jnp.ones((in_channels,), jnp.float32),
            w1=w1,
            b1=jnp.zeros((OUT_CHANNELS,), jnp.float32),
        ))
    return params


def prepare_block_operands(raw, compute_dtype):
    """Fold eval-mode BN into the 3x3 conv, reshape/pad weights for the kernel."""
    w3 = raw["w3_hwio"]                                   # (3, 3, C, C)
    C = w3.shape[-1]
    scale = raw["gamma"] / jnp.sqrt(raw["var"] + BN_EPS)  # per out-channel
    w3f = (w3 * scale[None, None, None, :]).reshape(3, 3 * C, C)
    b3f = ((raw["b3"] - raw["mean"]) * scale + raw["beta"]).reshape(1, C)

    cp = _round_up(OUT_CHANNELS, 128)                     # 255 -> 256 lane pad
    w1p = jnp.zeros((C, cp), jnp.float32).at[:, :OUT_CHANNELS].set(raw["w1"])
    b1p = jnp.zeros((1, cp), jnp.float32).at[0, :OUT_CHANNELS].set(raw["b1"])

    return (w3f.astype(compute_dtype), b3f.astype(jnp.float32),
            w1p.astype(compute_dtype), b1p.astype(jnp.float32))


def prepare_decoder_operands(raw_params, compute_dtype=jnp.bfloat16):
    return [prepare_block_operands(r, compute_dtype) for r in raw_params]


# ----------------------------------------------------------------------------
# Pure-JAX reference (original, unfused module semantics; accurate f32).
# ----------------------------------------------------------------------------
def _ref_block(x_nchw, raw):
    x = jnp.transpose(x_nchw, (0, 2, 3, 1))
    y = lax.conv_general_dilated(
        x, raw["w3_hwio"], window_strides=(1, 1), padding="SAME",
        dimension_numbers=("NHWC", "HWIO", "NHWC"),
        precision=lax.Precision.HIGHEST)
    y = y + raw["b3"]
    y = (y - raw["mean"]) * (raw["gamma"] / jnp.sqrt(raw["var"] + BN_EPS))
    y = y + raw["beta"]
    y = jnp.maximum(y, 0.0)
    out = jnp.einsum("bhwc,cd->bhwd", y, raw["w1"],
                     precision=lax.Precision.HIGHEST) + raw["b1"]
    return jnp.transpose(out, (0, 3, 1, 2))


if __name__ == "__main__":
    key = jax.random.PRNGKey(0)
    in_channels = 256            # matches the module spec
    batch = 2
    spatial = [16, 8, 4]         # 3 small feature levels (stand-ins for 52/26/13)

    pkey, *fkeys = jax.random.split(key, NUM_LAYERS + 1)
    raw_params = init_decoder_params(pkey, in_channels)
    feats = [
        jax.random.normal(fk, (batch, in_channels, s, s), jnp.float32)
        for fk, s in zip(fkeys, spatial)
    ]

    # f32 compute path (grid over batch -> 2 parallel blocks).
    ops_f32 = prepare_decoder_operands(raw_params, jnp.float32)
    outs_f32 = yolov3_decoder_forward(feats, ops_f32, batch_block=1)
    outs_f32 = [jax.block_until_ready(o) for o in outs_f32]

    # Default fast path: bf16 matmul operands, f32 accumulation, batch packing.
    ops_bf16 = prepare_decoder_operands(raw_params, jnp.bfloat16)
    outs_bf16 = yolov3_decoder_forward(feats, ops_bf16, batch_block=batch)
    outs_bf16 = [jax.block_until_ready(o) for o in outs_bf16]

    # Tolerances accommodate TPU MXU operand rounding (bf16 operands and/or
    # reduced-precision f32 matmul modes); outputs have O(1) magnitude, so any
    # indexing/layout bug would show up as O(1) errors.
    ok = True
    for of, ob, f, raw, s in zip(outs_f32, outs_bf16, feats, raw_params,
                                 spatial):
        assert of.shape == (batch, OUT_CHANNELS, s, s), of.shape
        assert ob.shape == (batch, OUT_CHANNELS, s, s), ob.shape
        ref = _ref_block(f, raw)
        ok = ok and bool(jnp.allclose(of, ref, atol=1e-1, rtol=1e-1))
        ok = ok and bool(jnp.allclose(ob, ref, atol=1e-1, rtol=1e-1))

    print("KERNEL_OK" if ok else "MISMATCH")
</pallas_src>

<mosaic_0001>
module attributes {stable_mosaic.version = 11 : i64} {
  func.func @_decoder_block_kernel(%arg0: i32, %arg1: memref<1x342x256xf32, #tpu.memory_space<vmem>>, %arg2: memref<3x768x256xf32, #tpu.memory_space<vmem>>, %arg3: memref<1x256xf32, #tpu.memory_space<vmem>>, %arg4: memref<256x256xf32, #tpu.memory_space<vmem>>, %arg5: memref<1x256xf32, #tpu.memory_space<vmem>>, %arg6: memref<1x288x256xf32, #tpu.memory_space<vmem>>) attributes {dimension_semantics = [#tpu.dimension_semantics<parallel>], iteration_bounds = array<i64: 2>, scalar_prefetch = 0 : i64, scratch_operands = 0 : i64, tpu.core_type = #tpu.core_type<tc>, window_params = [{transform_indices = @transform_0, window_bounds = array<i64: 1, 342, 256>}, {pipeline_mode = #tpu.pipeline_mode<synchronous>, transform_indices = @transform_1, window_bounds = array<i64: 3, 768, 256>}, {pipeline_mode = #tpu.pipeline_mode<synchronous>, transform_indices = @transform_2, window_bounds = array<i64: 1, 256>}, {pipeline_mode = #tpu.pipeline_mode<synchronous>, transform_indices = @transform_3, window_bounds = array<i64: 256, 256>}, {pipeline_mode = #tpu.pipeline_mode<synchronous>, transform_indices = @transform_4, window_bounds = array<i64: 1, 256>}, {transform_indices = @transform_5, window_bounds = array<i64: 1, 288, 256>}]} {
    %c0 = arith.constant 0 : index
    %c0_0 = arith.constant 0 : index
    %c0_1 = arith.constant 0 : index
    %0 = vector.load %arg1[%c0, %c0_0, %c0_1] : memref<1x342x256xf32, #tpu.memory_space<vmem>>, vector<1x288x256xf32>
    %1 = vector.shape_cast %0 : vector<1x288x256xf32> to vector<288x256xf32>
    %c0_2 = arith.constant 0 : index
    %c1 = arith.constant 1 : index
    %c0_3 = arith.constant 0 : index
    %2 = vector.load %arg1[%c0_2, %c1, %c0_3] : memref<1x342x256xf32, #tpu.memory_space<vmem>>, vector<1x288x256xf32>
    %3 = vector.shape_cast %2 : vector<1x288x256xf32> to vector<288x256xf32>
    %c0_4 = arith.constant 0 : index
    %c2 = arith.constant 2 : index
    %c0_5 = arith.constant 0 : index
    %4 = vector.load %arg1[%c0_4, %c2, %c0_5] : memref<1x342x256xf32, #tpu.memory_space<vmem>>, vector<1x288x256xf32>
    %5 = vector.shape_cast %4 : vector<1x288x256xf32> to vector<288x256xf32>
    %6 = tpu.concatenate %1, %3, %5 in 1 : vector<288x256xf32>, vector<288x256xf32>, vector<288x256xf32> -> vector<288x768xf32>
    %c0_6 = arith.constant 0 : index
    %c0_7 = arith.constant 0 : index
    %c0_8 = arith.constant 0 : index
    %7 = vector.load %arg2[%c0_6, %c0_7, %c0_8] : memref<3x768x256xf32, #tpu.memory_space<vmem>>, vector<1x768x256xf32>
    %8 = vector.shape_cast %7 : vector<1x768x256xf32> to vector<768x256xf32>
    %cst = arith.constant dense<0.000000e+00> : vector<288x256xf32>
    %9 = tpu.matmul %6, %8, %cst {dimension_numbers = #tpu.dot_dimension_numbers<[1], [0], [0], [1], [0, 0, 1, 1], [], []>} : vector<288x768xf32>, vector<768x256xf32>, vector<288x256xf32> -> vector<288x256xf32>
    %c0_9 = arith.constant 0 : index
    %c18 = arith.constant 18 : index
    %c0_10 = arith.constant 0 : index
    %10 = vector.load %arg1[%c0_9, %c18, %c0_10] : memref<1x342x256xf32, #tpu.memory_space<vmem>>, vector<1x288x256xf32>
    %11 = vector.shape_cast %10 : vector<1x288x256xf32> to vector<288x256xf32>
    %c0_11 = arith.constant 0 : index
    %c19 = arith.constant 19 : index
    %c0_12 = arith.constant 0 : index
    %12 = vector.load %arg1[%c0_11, %c19, %c0_12] : memref<1x342x256xf32, #tpu.memory_space<vmem>>, vector<1x288x256xf32>
    %13 = vector.shape_cast %12 : vector<1x288x256xf32> to vector<288x256xf32>
    %c0_13 = arith.constant 0 : index
    %c20 = arith.constant 20 : index
    %c0_14 = arith.constant 0 : index
    %14 = vector.load %arg1[%c0_13, %c20, %c0_14] : memref<1x342x256xf32, #tpu.memory_space<vmem>>, vector<1x288x256xf32>
    %15 = vector.shape_cast %14 : vector<1x288x256xf32> to vector<288x256xf32>
    %16 = tpu.concatenate %11, %13, %15 in 1 : vector<288x256xf32>, vector<288x256xf32>, vector<288x256xf32> -> vector<288x768xf32>
    %c1_15 = arith.constant 1 : index
    %c0_16 = arith.constant 0 : index
    %c0_17 = arith.constant 0 : index
    %17 = vector.load %arg2[%c1_15, %c0_16, %c0_17] : memref<3x768x256xf32, #tpu.memory_space<vmem>>, vector<1x768x256xf32>
    %18 = vector.shape_cast %17 : vector<1x768x256xf32> to vector<768x256xf32>
    %cst_18 = arith.constant dense<0.000000e+00> : vector<288x256xf32>
    %19 = tpu.matmul %16, %18, %cst_18 {dimension_numbers = #tpu.dot_dimension_numbers<[1], [0], [0], [1], [0, 0, 1, 1], [], []>} : vector<288x768xf32>, vector<768x256xf32>, vector<288x256xf32> -> vector<288x256xf32>
    %20 = arith.addf %9, %19 : vector<288x256xf32>
    %c0_19 = arith.constant 0 : index
    %c36 = arith.constant 36 : index
    %c0_20 = arith.constant 0 : index
    %21 = vector.load %arg1[%c0_19, %c36, %c0_20] : memref<1x342x256xf32, #tpu.memory_space<vmem>>, vector<1x288x256xf32>
    %22 = vector.shape_cast %21 : vector<1x288x256xf32> to vector<288x256xf32>
    %c0_21 = arith.constant 0 : index
    %c37 = arith.constant 37 : index
    %c0_22 = arith.constant 0 : index
    %23 = vector.load %arg1[%c0_21, %c37, %c0_22] : memref<1x342x256xf32, #tpu.memory_space<vmem>>, vector<1x288x256xf32>
    %24 = vector.shape_cast %23 : vector<1x288x256xf32> to vector<288x256xf32>
    %c0_23 = arith.constant 0 : index
    %c38 = arith.constant 38 : index
    %c0_24 = arith.constant 0 : index
    %25 = vector.load %arg1[%c0_23, %c38, %c0_24] : memref<1x342x256xf32, #tpu.memory_space<vmem>>, vector<1x288x256xf32>
    %26 = vector.shape_cast %25 : vector<1x288x256xf32> to vector<288x256xf32>
    %27 = tpu.concatenate %22, %24, %26 in 1 : vector<288x256xf32>, vector<288x256xf32>, vector<288x256xf32> -> vector<288x768xf32>
    %c2_25 = arith.constant 2 : index
    %c0_26 = arith.constant 0 : index
    %c0_27 = arith.constant 0 : index
    %28 = vector.load %arg2[%c2_25, %c0_26, %c0_27] : memref<3x768x256xf32, #tpu.memory_space<vmem>>, vector<1x768x256xf32>
    %29 = vector.shape_cast %28 : vector<1x768x256xf32> to vector<768x256xf32>
    %cst_28 = arith.constant dense<0.000000e+00> : vector<288x256xf32>
    %30 = tpu.matmul %27, %29, %cst_28 {dimension_numbers = #tpu.dot_dimension_numbers<[1], [0], [0], [1], [0, 0, 1, 1], [], []>} : vector<288x768xf32>, vector<768x256xf32>, vector<288x256xf32> -> vector<288x256xf32>
    %31 = arith.addf %20, %30 : vector<288x256xf32>
    %c0_29 = arith.constant 0 : index
    %c0_30 = arith.constant 0 : index
    %32 = vector.load %arg3[%c0_29, %c0_30] : memref<1x256xf32, #tpu.memory_space<vmem>>, vector<1x256xf32>
    %33 = vector.broadcast %32 : vector<1x256xf32> to vector<288x256xf32>
    %34 = arith.addf %31, %33 : vector<288x256xf32>
    %cst_31 = arith.constant 0.000000e+00 : f32
    %35 = vector.broadcast %cst_31 : f32 to vector<288x256xf32>
    %36 = arith.maximumf %34, %35 : vector<288x256xf32>
    %c0_32 = arith.constant 0 : index
    %c0_33 = arith.constant 0 : index
    %37 = vector.load %arg4[%c0_32, %c0_33] : memref<256x256xf32, #tpu.memory_space<vmem>>, vector<256x256xf32>
    %cst_34 = arith.constant dense<0.000000e+00> : vector<288x256xf32>
    %38 = tpu.matmul %36, %37, %cst_34 {dimension_numbers = #tpu.dot_dimension_numbers<[1], [0], [0], [1], [0, 0, 1, 1], [], []>} : vector<288x256xf32>, vector<256x256xf32>, vector<288x256xf32> -> vector<288x256xf32>
    %c0_35 = arith.constant 0 : index
    %c0_36 = arith.constant 0 : index
    %39 = vector.load %arg5[%c0_35, %c0_36] : memref<1x256xf32, #tpu.memory_space<vmem>>, vector<1x256xf32>
    %40 = vector.broadcast %39 : vector<1x256xf32> to vector<288x256xf32>
    %41 = arith.addf %38, %40 : vector<288x256xf32>
    %c0_37 = arith.constant 0 : index
    %c0_38 = arith.constant 0 : index
    %c0_39 = arith.constant 0 : index
    %42 = vector.load %arg6[%c0_37, %c0_38, %c0_39] : memref<1x288x256xf32, #tpu.memory_space<vmem>>, vector<1x288x256xf32>
    %43 = vector.shape_cast %42 : vector<1x288x256xf32> to vector<288x256xf32>
    %44 = vector.shape_cast %41 : vector<288x256xf32> to vector<1x288x256xf32>
    tpu.vector_store %arg6[%c0_37, %c0_38, %c0_39], %44 {strides = array<i32>} : memref<1x288x256xf32, #tpu.memory_space<vmem>>, vector<1x288x256xf32>,
    return
  }
  func.func @transform_0(%arg0: i32) -> (i32, i32, i32) {
    %c0_i32 = arith.constant 0 : i32
    %c0_i32_0 = arith.constant 0 : i32
    %c0_i32_1 = arith.constant 0 : i32
    return %arg0, %c0_i32, %c0_i32_0 : i32, i32, i32
  }
  func.func @transform_1(%arg0: i32) -> (i32, i32, i32) {
    %c0_i32 = arith.constant 0 : i32
    %c0_i32_0 = arith.constant 0 : i32
    %c0_i32_1 = arith.constant 0 : i32
    %c0_i32_2 = arith.constant 0 : i32
    return %c0_i32, %c0_i32_0, %c0_i32_1 : i32, i32, i32
  }
  func.func @transform_2(%arg0: i32) -> (i32, i32) {
    %c0_i32 = arith.constant 0 : i32
    %c0_i32_0 = arith.constant 0 : i32
    %c0_i32_1 = arith.constant 0 : i32
    return %c0_i32, %c0_i32_0 : i32, i32
  }
  func.func @transform_3(%arg0: i32) -> (i32, i32) {
    %c0_i32 = arith.constant 0 : i32
    %c0_i32_0 = arith.constant 0 : i32
    %c0_i32_1 = arith.constant 0 : i32
    return %c0_i32, %c0_i32_0 : i32, i32
  }
  func.func @transform_4(%arg0: i32) -> (i32, i32) {
    %c0_i32 = arith.constant 0 : i32
    %c0_i32_0 = arith.constant 0 : i32
    %c0_i32_1 = arith.constant 0 : i32
    return %c0_i32, %c0_i32_0 : i32, i32
  }
  func.func @transform_5(%arg0: i32) -> (i32, i32, i32) {
    %c0_i32 = arith.constant 0 : i32
    %c0_i32_0 = arith.constant 0 : i32
    %c0_i32_1 = arith.constant 0 : i32
    return %arg0, %c0_i32, %c0_i32_0 : i32, i32, i32
  }
}

</mosaic_0001>

<llo_original>
// kernel: decoder_block_pallas.1
$region0: #{decoder_block_pallas.1}
  #allocation0 [shape = 'u32[]', space=smem, size = 0x4, offset = 0x4, fixed_abs, tag = 'smem constant byte address 0x4 - core index']
  #allocation1 [shape = 'u32[144,128]{1,0:T(1,128)}', space=vmem, size = 0x12000, scoped, tag = 'internal scratch']
  %s0 = inlined_call_operand.vmem [shape: f32[2,342,256], index: 0, kind: input, shape index: {}]
  %s1 = inlined_call_operand.vmem [shape: f32[3,768,256], index: 1, kind: input, shape index: {}]
  %s2 = inlined_call_operand.vmem [shape: f32[1,256], index: 2, kind: input, shape index: {}]
  %s3 = inlined_call_operand.vmem [shape: f32[256,256], index: 3, kind: input, shape index: {}]
  %s4 = inlined_call_operand.vmem [shape: f32[1,256], index: 4, kind: input, shape index: {}]
  %s5 = inlined_call_operand.vmem [shape: f32[2,288,256], index: 5, kind: output, shape index: {}]
  %s6 = sld [smem:[#allocation0]]
  $region53: #{decoder_block_pallas.1} parent=0
    _
  %s8 = ssub.s32 1, %s6
  %s9 = scalar_select 0, %s8, %s6
  loop: start=0, step=1, limit=4
  $region2: #{decoder_block_pallas.1} parent=0 // loop_pre_header
    _
  $region3: #{decoder_block_pallas.1} parent=0 // loop_header
    %s11 = sphi 0, %s15
    %p12 = scmp.ge.s32.totalorder %s11, 4
    %s21 = sphi 0, %s23
    %s24 = sphi 0, %s21
    %s25 = sphi 0, %s24
    %s41 = sphi 0, %s25
    %s45 = sphi 0, %s45
    %s47 = sphi 0, %s45
    %s48 = sphi 0, %s47
    %s62 = sphi 0, %s48
    %s66 = sphi 0, %s66
    %s68 = sphi 0, %s66
    %s69 = sphi 0, %s68
    %s83 = sphi 0, %s69
    %s87 = sphi 0, %s87
    %s89 = sphi 0, %s87
    %s90 = sphi 0, %s89
    %s104 = sphi 0, %s90
    %s108 = sphi 0, %s108
    %s110 = sphi 0, %s108
    %s111 = sphi 0, %s110
    %s125 = sphi 0, %s111
    %s131 = sphi 0, %s133
    %s134 = sphi 0, %s131
    %s135 = sphi 0, %s134
    %s151 = sphi 0, %s135
  $region4: #{decoder_block_pallas.1} parent=0 // loop_header_branch
    %14 = sbr.rel (%p12) target = $region8
  $region5: #{decoder_block_pallas.1} parent=0 // loop_body
    %s16 = ssub.s32 %s11, 1
    %s17 = ssub.s32 %s11, 2
    %s18 = sadd.s32 %s11, 1
    %s19 = ssub.s32 %s11, %s18
    %p20 = scmp.eq.s32.totalorder %s19, 0
    %s22 = sadd.s32 %s21, 1
    %s23 = scalar_select %p20, %s21, %s22
    %p26 = pneg %p20
    %p27 = scmp.eq.s32.totalorder %s11, 1
    %p28 = por %p26, %p27
    %p29 = scmp.ne.s32.totalorder %s21, %s24
    %p30 = scmp.eq.s32.totalorder %s11, 0
    %p31 = por %p29, %p30
    %p32 = scmp.ne.s32.totalorder %s21, %s24
    %p33 = scmp.eq.s32.totalorder %s16, 1
    %p34 = por %p32, %p33
    %p35 = scmp.ne.s32.totalorder %s24, %s25
    %p36 = scmp.eq.s32.totalorder %s16, 0
    %p37 = por %p35, %p36
    %p38 = scmp.ne.s32.totalorder %s24, %s25
    %p39 = scmp.eq.s32.totalorder %s17, 1
    %p40 = por %p38, %p39
    %p42 = scmp.ne.s32.totalorder %s25, %s41
    %p43 = scmp.eq.s32.totalorder %s17, 0
    %p44 = por %p42, %p43
    %s46 = sadd.s32 %s45, 1
    %p49 = scmp.eq.s32.totalorder %s11, 1
    %p50 = scmp.ne.s32.totalorder %s45, %s47
    %p51 = scmp.eq.s32.totalorder %s11, 0
    %p52 = por %p50, %p51
    %p53 = scmp.ne.s32.totalorder %s45, %s47
    %p54 = scmp.eq.s32.totalorder %s16, 1
    %p55 = por %p53, %p54
    %p56 = scmp.ne.s32.totalorder %s47, %s48
    %p57 = scmp.eq.s32.totalorder %s16, 0
    %p58 = por %p56, %p57
    %p59 = scmp.ne.s32.totalorder %s47, %s48
    %p60 = scmp.eq.s32.totalorder %s17, 1
    %p61 = por %p59, %p60
    %p63 = scmp.ne.s32.totalorder %s48, %s62
    %p64 = scmp.eq.s32.totalorder %s17, 0
    %p65 = por %p63, %p64
    %s67 = sadd.s32 %s66, 1
    %p70 = scmp.eq.s32.totalorder %s11, 1
    %p71 = scmp.ne.s32.totalorder %s66, %s68
    %p72 = scmp.eq.s32.totalorder %s11, 0
    %p73 = por %p71, %p72
    %p74 = scmp.ne.s32.totalorder %s66, %s68
    %p75 = scmp.eq.s32.totalorder %s16, 1
    %p76 = por %p74, %p75
    %p77 = scmp.ne.s32.totalorder %s68, %s69
    %p78 = scmp.eq.s32.totalorder %s16, 0
    %p79 = por %p77, %p78
    %p80 = scmp.ne.s32.totalorder %s68, %s69
    %p81 = scmp.eq.s32.totalorder %s17, 1
    %p82 = por %p80, %p81
    %p84 = scmp.ne.s32.totalorder %s69, %s83
    %p85 = scmp.eq.s32.totalorder %s17, 0
    %p86 = por %p84, %p85
    %s88 = sadd.s32 %s87, 1
    %p91 = scmp.eq.s32.totalorder %s11, 1
    %p92 = scmp.ne.s32.totalorder %s87, %s89
    %p93 = scmp.eq.s32.totalorder %s11, 0
    %p94 = por %p92, %p93
    %p95 = scmp.ne.s32.totalorder %s87, %s89
    %p96 = scmp.eq.s32.totalorder %s16, 1
    %p97 = por %p95, %p96
    %p98 = scmp.ne.s32.totalorder %s89, %s90
    %p99 = scmp.eq.s32.totalorder %s16, 0
    %p100 = por %p98, %p99
    %p101 = scmp.ne.s32.totalorder %s89, %s90
    %p102 = scmp.eq.s32.totalorder %s17, 1
    %p103 = por %p101, %p102
    %p105 = scmp.ne.s32.totalorder %s90, %s104
    %p106 = scmp.eq.s32.totalorder %s17, 0
    %p107 = por %p105, %p106
    %s109 = sadd.s32 %s108, 1
    %p112 = scmp.eq.s32.totalorder %s11, 1
    %p113 = scmp.ne.s32.totalorder %s108, %s110
    %p114 = scmp.eq.s32.totalorder %s11, 0
    %p115 = por %p113, %p114
    %p116 = scmp.ne.s32.totalorder %s108, %s110
    %p117 = scmp.eq.s32.totalorder %s16, 1
    %p118 = por %p116, %p117
    %p119 = scmp.ne.s32.totalorder %s110, %s111
    %p120 = scmp.eq.s32.totalorder %s16, 0
    %p121 = por %p119, %p120
    %p122 = scmp.ne.s32.totalorder %s110, %s111
    %p123 = scmp.eq.s32.totalorder %s17, 1
    %p124 = por %p122, %p123
    %p126 = scmp.ne.s32.totalorder %s111, %s125
    %p127 = scmp.eq.s32.totalorder %s17, 0
    %p128 = por %p126, %p127
    %s129 = ssub.s32 %s11, %s18
    %p130 = scmp.eq.s32.totalorder %s129, 0
    %s132 = sadd.s32 %s131, 1
    %s133 = scalar_select %p130, %s131, %s132
    %p136 = pneg %p130
    %p137 = scmp.eq.s32.totalorder %s11, 1
    %p138 = por %p136, %p137
    %p139 = scmp.ne.s32.totalorder %s131, %s134
    %p140 = scmp.eq.s32.totalorder %s11, 0
    %p141 = por %p139, %p140
    %p142 = scmp.ne.s32.totalorder %s131, %s134
    %p143 = scmp.eq.s32.totalorder %s16, 1
    %p144 = por %p142, %p143
    %p145 = scmp.ne.s32.totalorder %s134, %s135
    %p146 = scmp.eq.s32.totalorder %s16, 0
    %p147 = por %p145, %p146
    %p148 = scmp.ne.s32.totalorder %s134, %s135
    %p149 = scmp.eq.s32.totalorder %s17, 1
    %p150 = por %p148, %p149
    %p152 = scmp.ne.s32.totalorder %s135, %s151
    %p153 = scmp.eq.s32.totalorder %s17, 0
    %p154 = por %p152, %p153
    %p155 = scmp.le.s32.totalorder 1, %s11
    %p156 = scmp.lt.s32.totalorder %s11, 3
    %p157 = pnand %p155, %p156
    %p158 = pneg %p157
    // Predicated region
    $region9: #{decoder_block_pallas.1} parent=5 // pred_check
      _
    $region10: #{decoder_block_pallas.1} parent=5 // pred_check_branch
      %160 = sbr.rel (%p157) target = $region12
    $region11: #{decoder_block_pallas.1} parent=5 // pred_region
      %s161 = ssub.s32 %s11, 1
      // Predicated region
      $region13: #{decoder_block_pallas.1} parent=11 // pred_check
        %p162 = pneg %p58
      $region14: #{decoder_block_pallas.1} parent=11 // pred_check_branch
        %164 = sbr.rel (%p162) target = $region16
      $region15: #{decoder_block_pallas.1} parent=11 // pred_region
        _
      $region16: #{decoder_block_pallas.1} parent=11 // pred_fallthru
        _
      // Predicated region
      $region17: #{decoder_block_pallas.1} parent=11 // pred_check
        %p165 = pneg %p79
      $region18: #{decoder_block_pallas.1} parent=11 // pred_check_branch
        %167 = sbr.rel (%p165) target = $region20
      $region19: #{decoder_block_pallas.1} parent=11 // pred_region
        _
      $region20: #{decoder_block_pallas.1} parent=11 // pred_fallthru
        _
      // Predicated region
      $region21: #{decoder_block_pallas.1} parent=11 // pred_check
        %p168 = pneg %p100
      $region22: #{decoder_block_pallas.1} parent=11 // pred_check_branch
        %170 = sbr.rel (%p168) target = $region24
      $region23: #{decoder_block_pallas.1} parent=11 // pred_region
        _
      $region24: #{decoder_block_pallas.1} parent=11 // pred_fallthru
        _
      // Predicated region
      $region25: #{decoder_block_pallas.1} parent=11 // pred_check
        %p171 = pneg %p121
      $region26: #{decoder_block_pallas.1} parent=11 // pred_check_branch
        %173 = sbr.rel (%p171) target = $region28
      $region27: #{decoder_block_pallas.1} parent=11 // pred_region
        _
      $region28: #{decoder_block_pallas.1} parent=11 // pred_fallthru
        _
    $region12: #{decoder_block_pallas.1} parent=5 // pred_fallthru
      _
    %p174 = scmp.lt.s32.totalorder %s11, 2
    // Predicated region
    $region29: #{decoder_block_pallas.1} parent=5 // pred_check
      %p175 = pneg %p174
    $region30: #{decoder_block_pallas.1} parent=5 // pred_check_branch
      %177 = sbr.rel (%p175) target = $region32
    $region31: #{decoder_block_pallas.1} parent=5 // pred_region
      // Predicated region
      $region33: #{decoder_block_pallas.1} parent=31 // pred_check
        %p178 = pneg %p31
      $region34: #{decoder_block_pallas.1} parent=31 // pred_check_branch
        %180 = sbr.rel (%p178) target = $region36
      $region35: #{decoder_block_pallas.1} parent=31 // pred_region
        %p181 = scmp.lt.s32.totalorder %s11, 1
        %s182 = scalar_select %p181, %s11, 1
        %s183 = smul.addr %s182, 86
        %s184 = smul.addr %s183, 8
        %s185 = scalar_lea.vmem %s0, %s184
      $region36: #{decoder_block_pallas.1} parent=31 // pred_fallthru
        _
    $region32: #{decoder_block_pallas.1} parent=5 // pred_fallthru
      _
    %p186 = scmp.le.s32.totalorder 1, %s11
    %p187 = scmp.lt.s32.totalorder %s11, 3
    %p188 = pnand %p186, %p187
    %p189 = pneg %p188
    // Predicated region
    $region37: #{decoder_block_pallas.1} parent=5 // pred_check
      _
    $region38: #{decoder_block_pallas.1} parent=5 // pred_check_branch
      %191 = sbr.rel (%p188) target = $region40
    $region39: #{decoder_block_pallas.1} parent=5 // pred_region
      %s192 = ssub.s32 %s11, 1
      %p193 = scmp.lt.s32.totalorder %s16, 1
      %s194 = scalar_select %p193, %s16, 1
      %s195 = smul.addr %s194, 86
      %s196 = smul.addr %s195, 8
      %s197 = scalar_lea.vmem %s0, %s196
      %p198 = pneg %p37
      %p199 = pneg %p34
      %p200 = pneg %p58
      %p201 = pneg %p55
      %p202 = pneg %p79
      %p203 = pneg %p76
      %p204 = pneg %p100
      %p205 = pneg %p97
      %p206 = pneg %p121
      %p207 = pneg %p118
      %p208 = pneg %p147
      %p209 = pneg %p144
      %p210 = scmp.lt.s32.totalorder %s16, 1
      %s211 = scalar_select %p210, %s16, 1
      %s212 = smul.addr %s211, 72
      %s213 = smul.addr %s212, 8
      %s214 = scalar_lea.vmem %s5, %s213
      %p215 = scmp.lt.s32.totalorder %s16, 1
      %s216 = scalar_select %p215, %s16, 1
      %s217 = smul.addr %s216, 86
      %s218 = smul.addr %s217, 8
      %s219 = scalar_lea.vmem %s0, %s218
      %p220 = scmp.lt.s32.totalorder %s16, 1
      %s221 = scalar_select %p220, %s16, 1
      %s222 = smul.addr %s221, 72
      %s223 = smul.addr %s222, 8
      %s224 = scalar_lea.vmem %s5, %s223
      %v225 = vld [vmem:[%s219] sm:$0xff]
      %v226 = vld [vmem:[%s219 + $0x8] sm:$0xff]
      %v227 = vld [vmem:[%s219 + $0x10] sm:$0xff]
      %v228 = vld [vmem:[%s219 + $0x18] sm:$0xff]
      %v229 = vld [vmem:[%s219 + $0x20] sm:$0xff]
      %v230 = vld [vmem:[%s219 + $0x28] sm:$0xff]
      %v231 = vld [vmem:[%s219 + $0x30] sm:$0xff]
      %v232 = vld [vmem:[%s219 + $0x38] sm:$0xff]
      %v233 = vld [vmem:[%s219 + $0x40] sm:$0xff]
      %v234 = vld [vmem:[%s219 + $0x48] sm:$0xff]
      %v235 = vld [vmem:[%s219 + $0x50] sm:$0xff]
      %v236 = vld [vmem:[%s219 + $0x58] sm:$0xff]
      %v237 = vld [vmem:[%s219 + $0x60] sm:$0xff]
      %v238 = vld [vmem:[%s219 + $0x68] sm:$0xff]
      %v239 = vld [vmem:[%s219 + $0x70] sm:$0xff]
      %v240 = vld [vmem:[%s219 + $0x78] sm:$0xff]
      %v241 = vld [vmem:[%s219 + $0x80] sm:$0xff]
      %v242 = vld [vmem:[%s219 + $0x88] sm:$0xff]
      %v243 = vld [vmem:[%s219 + $0x90] sm:$0xff]
      %v244 = vld [vmem:[%s219 + $0x98] sm:$0xff]
      %v245 = vld [vmem:[%s219 + $0xa0] sm:$0xff]
      %v246 = vld [vmem:[%s219 + $0xa8] sm:$0xff]
      %v247 = vld [vmem:[%s219 + $0xb0] sm:$0xff]
      %v248 = vld [vmem:[%s219 + $0xb8] sm:$0xff]
      %v249 = vld [vmem:[%s219 + $0xc0] sm:$0xff]
      %v250 = vld [vmem:[%s219 + $0xc8] sm:$0xff]
      %v251 = vld [vmem:[%s219 + $0xd0] sm:$0xff]
      %v252 = vld [vmem:[%s219 + $0xd8] sm:$0xff]
      %v253 = vld [vmem:[%s219 + $0xe0] sm:$0xff]
      %v254 = vld [vmem:[%s219 + $0xe8] sm:$0xff]
      %v255 = vld [vmem:[%s219 + $0xf0] sm:$0xff]
      %v256 = vld [vmem:[%s219 + $0xf8] sm:$0xff]
      %v257 = vld [vmem:[%s219 + $0x100] sm:$0xff]
      %v258 = vld [vmem:[%s219 + $0x108] sm:$0xff]
      %v259 = vld [vmem:[%s219 + $0x110] sm:$0xff]
      %v260 = vld [vmem:[%s219 + $0x118] sm:$0xff]
      %v261 = vld [vmem:[%s219 + $0x120] sm:$0xff]
      %v262 = vld [vmem:[%s219 + $0x128] sm:$0xff]
      %v263 = vld [vmem:[%s219 + $0x130] sm:$0xff]
      %v264 = vld [vmem:[%s219 + $0x138] sm:$0xff]
      %v265 = vld [vmem:[%s219 + $0x140] sm:$0xff]
      %v266 = vld [vmem:[%s219 + $0x148] sm:$0xff]
      %v267 = vld [vmem:[%s219 + $0x150] sm:$0xff]
      %v268 = vld [vmem:[%s219 + $0x158] sm:$0xff]
      %v269 = vld [vmem:[%s219 + $0x160] sm:$0xff]
      %v270 = vld [vmem:[%s219 + $0x168] sm:$0xff]
      %v271 = vld [vmem:[%s219 + $0x170] sm:$0xff]
      %v272 = vld [vmem:[%s219 + $0x178] sm:$0xff]
      %v273 = vld [vmem:[%s219 + $0x180] sm:$0xff]
      %v274 = vld [vmem:[%s219 + $0x188] sm:$0xff]
      %v275 = vld [vmem:[%s219 + $0x190] sm:$0xff]
      %v276 = vld [vmem:[%s219 + $0x198] sm:$0xff]
      %v277 = vld [vmem:[%s219 + $0x1a0] sm:$0xff]
      %v278 = vld [vmem:[%s219 + $0x1a8] sm:$0xff]
      %v279 = vld [vmem:[%s219 + $0x1b0] sm:$0xff]
      %v280 = vld [vmem:[%s219 + $0x1b8] sm:$0xff]
      %v281 = vld [vmem:[%s219 + $0x1c0] sm:$0xff]
      %v282 = vld [vmem:[%s219 + $0x1c8] sm:$0xff]
      %v283 = vld [vmem:[%s219 + $0x1d0] sm:$0xff]
      %v284 = vld [vmem:[%s219 + $0x1d8] sm:$0xff]
      %v285 = vld [vmem:[%s219 + $0x1e0] sm:$0xff]
      %v286 = vld [vmem:[%s219 + $0x1e8] sm:$0xff]
      %v287 = vld [vmem:[%s219 + $0x1f0] sm:$0xff]
      %v288 = vld [vmem:[%s219 + $0x1f8] sm:$0xff]
      %v289 = vld [vmem:[%s219 + $0x200] sm:$0xff]
      %v290 = vld [vmem:[%s219 + $0x208] sm:$0xff]
      %v291 = vld [vmem:[%s219 + $0x210] sm:$0xff]
      %v292 = vld [vmem:[%s219 + $0x218] sm:$0xff]
      %v293 = vld [vmem:[%s219 + $0x220] sm:$0xff]
      %v294 = vld [vmem:[%s219 + $0x228] sm:$0xff]
      %v295 = vld [vmem:[%s219 + $0x230] sm:$0xff]
      %v296 = vld [vmem:[%s219 + $0x238] sm:$0xff]
      %v297 = vld [vmem:[%s219] sm:$0xfe]
      %v298 = vld [vmem:[%s219 + $0x8] sm:$0xfe]
      %v299 = vld [vmem:[%s219 + $0x240] sm:$0x1]
      %v300 = vld [vmem:[%s219 + $0x248] sm:$0x1]
      %v301 = vld [vmem:[%s219] sm:$0xfc]
      %v302 = vld [vmem:[%s219 + $0x8] sm:$0xfc]
      %v303 = vld [vmem:[%s219 + $0x240] sm:$0x3]
      %v304 = vld [vmem:[%s219 + $0x248] sm:$0x3]
      %vm379 = vcmask 1046528
      %v380 = vrot.slane %v297, 1
      %v381 = vrot.slane %v227, 1
      %v382 = vsel %vm379, %v380, %v381
      %v383 = vrot.slane %v298, 1
      %v384 = vrot.slane %v228, 1
      %v385 = vsel %vm379, %v383, %v384
      %v386 = vrot.slane %v229, 1
      %v387 = vsel %vm379, %v381, %v386
      %v388 = vrot.slane %v230, 1
      %v389 = vsel %vm379, %v384, %v388
      %v390 = vrot.slane %v231, 1
      %v391 = vsel %vm379, %v386, %v390
      %v392 = vrot.slane %v232, 1
      %v393 = vsel %vm379, %v388, %v392
      %v394 = vrot.slane %v233, 1
      %v395 = vsel %vm379, %v390, %v394
      %v396 = vrot.slane %v234, 1
      %v397 = vsel %vm379, %v392, %v396
      %v398 = vrot.slane %v235, 1
      %v399 = vsel %vm379, %v394, %v398
      %v400 = vrot.slane %v236, 1
      %v401 = vsel %vm379, %v396, %v400
      %v402 = vrot.slane %v237, 1
      %v403 = vsel %vm379, %v398, %v402
      %v404 = vrot.slane %v238, 1
      %v405 = vsel %vm379, %v400, %v404
      %v406 = vrot.slane %v239, 1
      %v407 = vsel %vm379, %v402, %v406
      %v408 = vrot.slane %v240, 1
      %v409 = vsel %vm379, %v404, %v408
      %v410 = vrot.slane %v241, 1
      %v411 = vsel %vm379, %v406, %v410
      %v412 = vrot.slane %v242, 1
      %v413 = vsel %vm379, %v408, %v412
      %v414 = vrot.slane %v243, 1
      %v415 = vsel %vm379, %v410, %v414
      %v416 = vrot.slane %v244, 1
      %v417 = vsel %vm379, %v412, %v416
      %v418 = vrot.slane %v245, 1
      %v419 = vsel %vm379, %v414, %v418
      %v420 = vrot.slane %v246, 1
      %v421 = vsel %vm379, %v416, %v420
      %v422 = vrot.slane %v247, 1
      %v423 = vsel %vm379, %v418, %v422
      %v424 = vrot.slane %v248, 1
      %v425 = vsel %vm379, %v420, %v424
      %v426 = vrot.slane %v249, 1
      %v427 = vsel %vm379, %v422, %v426
      %v428 = vrot.slane %v250, 1
      %v429 = vsel %vm379, %v424, %v428
      %v430 = vrot.slane %v251, 1
      %v431 = vsel %vm379, %v426, %v430
      %v432 = vrot.slane %v252, 1
      %v433 = vsel %vm379, %v428, %v432
      %v434 = vrot.slane %v253, 1
      %v435 = vsel %vm379, %v430, %v434
      %v436 = vrot.slane %v254, 1
      %v437 = vsel %vm379, %v432, %v436
      %v438 = vrot.slane %v255, 1
      %v439 = vsel %vm379, %v434, %v438
      %v440 = vrot.slane %v256, 1
      %v441 = vsel %vm379, %v436, %v440
      %v442 = vrot.slane %v257, 1
      %v443 = vsel %vm379, %v438, %v442
      %v444 = vrot.slane %v258, 1
      %v445 = vsel %vm379, %v440, %v444
      %v446 = vrot.slane %v259, 1
      %v447 = vsel %vm379, %v442, %v446
      %v448 = vrot.slane %v260, 1
      %v449 = vsel %vm379, %v444, %v448
      %v450 = vrot.slane %v261, 1
      %v451 = vsel %vm379, %v446, %v450
      %v452 = vrot.slane %v262, 1
      %v453 = vsel %vm379, %v448, %v452
      %v454 = vrot.slane %v263, 1
      %v455 = vsel %vm379, %v450, %v454
      %v456 = vrot.slane %v264, 1
      %v457 = vsel %vm379, %v452, %v456
      %v458 = vrot.slane %v265, 1
      %v459 = vsel %vm379, %v454, %v458
      %v460 = vrot.slane %v266, 1
      %v461 = vsel %vm379, %v456, %v460
      %v462 = vrot.slane %v267, 1
      %v463 = vsel %vm379, %v458, %v462
      %v464 = vrot.slane %v268, 1
      %v465 = vsel %vm379, %v460, %v464
      %v466 = vrot.slane %v269, 1
      %v467 = vsel %vm379, %v462, %v466
      %v468 = vrot.slane %v270, 1
      %v469 = vsel %vm379, %v464, %v468
      %v470 = vrot.slane %v271, 1
      %v471 = vsel %vm379, %v466, %v470
      %v472 = vrot.slane %v272, 1
      %v473 = vsel %vm379, %v468, %v472
      %v474 = vrot.slane %v273, 1
      %v475 = vsel %vm379, %v470, %v474
      %v476 = vrot.slane %v274, 1
      %v477 = vsel %vm379, %v472, %v476
      %v478 = vrot.slane %v275, 1
      %v479 = vsel %vm379, %v474, %v478
      %v480 = vrot.slane %v276, 1
      %v481 = vsel %vm379, %v476, %v480
      %v482 = vrot.slane %v277, 1
      %v483 = vsel %vm379, %v478, %v482
      %v484 = vrot.slane %v278, 1
      %v485 = vsel %vm379, %v480, %v484
      %v486 = vrot.slane %v279, 1
      %v487 = vsel %vm379, %v482, %v486
      %v488 = vrot.slane %v280, 1
      %v489 = vsel %vm379, %v484, %v488
      %v490 = vrot.slane %v281, 1
      %v491 = vsel %vm379, %v486, %v490
      %v492 = vrot.slane %v282, 1
      %v493 = vsel %vm379, %v488, %v492
      %v494 = vrot.slane %v283, 1
      %v495 = vsel %vm379, %v490, %v494
      %v496 = vrot.slane %v284, 1
      %v497 = vsel %vm379, %v492, %v496
      %v498 = vrot.slane %v285, 1
      %v499 = vsel %vm379, %v494, %v498
      %v500 = vrot.slane %v286, 1
      %v501 = vsel %vm379, %v496, %v500
      %v502 = vrot.slane %v287, 1
      %v503 = vsel %vm379, %v498, %v502
      %v504 = vrot.slane %v288, 1
      %v505 = vsel %vm379, %v500, %v504
      %v506 = vrot.slane %v289, 1
      %v507 = vsel %vm379, %v502, %v506
      %v508 = vrot.slane %v290, 1
      %v509 = vsel %vm379, %v504, %v508
      %v510 = vrot.slane %v291, 1
      %v511 = vsel %vm379, %v506, %v510
      %v512 = vrot.slane %v292, 1
      %v513 = vsel %vm379, %v508, %v512
      %v514 = vrot.slane %v293, 1
      %v515 = vsel %vm379, %v510, %v514
      %v516 = vrot.slane %v294, 1
      %v517 = vsel %vm379, %v512, %v516
      %v518 = vrot.slane %v295, 1
      %v519 = vsel %vm379, %v514, %v518
      %v520 = vrot.slane %v296, 1
      %v521 = vsel %vm379, %v516, %v520
      %v522 = vrot.slane %v299, 1
      %v523 = vsel %vm379, %v518, %v522
      %v524 = vrot.slane %v300, 1
      %v525 = vsel %vm379, %v520, %v524
      %vm602 = vcmask 1045504
      %v603 = vrot.slane %v301, 2
      %v604 = vrot.slane %v227, 2
      %v605 = vsel %vm602, %v603, %v604
      %v606 = vrot.slane %v302, 2
      %v607 = vrot.slane %v228, 2
      %v608 = vsel %vm602, %v606, %v607
      %v609 = vrot.slane %v229, 2
      %v610 = vsel %vm602, %v604, %v609
      %v611 = vrot.slane %v230, 2
      %v612 = vsel %vm602, %v607, %v611
      %v613 = vrot.slane %v231, 2
      %v614 = vsel %vm602, %v609, %v613
      %v615 = vrot.slane %v232, 2
      %v616 = vsel %vm602, %v611, %v615
      %v617 = vrot.slane %v233, 2
      %v618 = vsel %vm602, %v613, %v617
      %v619 = vrot.slane %v234, 2
      %v620 = vsel %vm602, %v615, %v619
      %v621 = vrot.slane %v235, 2
      %v622 = vsel %vm602, %v617, %v621
      %v623 = vrot.slane %v236, 2
      %v624 = vsel %vm602, %v619, %v623
      %v625 = vrot.slane %v237, 2
      %v626 = vsel %vm602, %v621, %v625
      %v627 = vrot.slane %v238, 2
      %v628 = vsel %vm602, %v623, %v627
      %v629 = vrot.slane %v239, 2
      %v630 = vsel %vm602, %v625, %v629
      %v631 = vrot.slane %v240, 2
      %v632 = vsel %vm602, %v627, %v631
      %v633 = vrot.slane %v241, 2
      %v634 = vsel %vm602, %v629, %v633
      %v635 = vrot.slane %v242, 2
      %v636 = vsel %vm602, %v631, %v635
      %v637 = vrot.slane %v243, 2
      %v638 = vsel %vm602, %v633, %v637
      %v639 = vrot.slane %v244, 2
      %v640 = vsel %vm602, %v635, %v639
      %v641 = vrot.slane %v245, 2
      %v642 = vsel %vm602, %v637, %v641
      %v643 = vrot.slane %v246, 2
      %v644 = vsel %vm602, %v639, %v643
      %v645 = vrot.slane %v247, 2
      %v646 = vsel %vm602, %v641, %v645
      %v647 = vrot.slane %v248, 2
      %v648 = vsel %vm602, %v643, %v647
      %v649 = vrot.slane %v249, 2
      %v650 = vsel %vm602, %v645, %v649
      %v651 = vrot.slane %v250, 2
      %v652 = vsel %vm602, %v647, %v651
      %v653 = vrot.slane %v251, 2
      %v654 = vsel %vm602, %v649, %v653
      %v655 = vrot.slane %v252, 2
      %v656 = vsel %vm602, %v651, %v655
      %v657 = vrot.slane %v253, 2
      %v658 = vsel %vm602, %v653, %v657
      %v659 = vrot.slane %v254, 2
      %v660 = vsel %vm602, %v655, %v659
      %v661 = vrot.slane %v255, 2
      %v662 = vsel %vm602, %v657, %v661
      %v663 = vrot.slane %v256, 2
      %v664 = vsel %vm602, %v659, %v663
      %v665 = vrot.slane %v257, 2
      %v666 = vsel %vm602, %v661, %v665
      %v667 = vrot.slane %v258, 2
      %v668 = vsel %vm602, %v663, %v667
      %v669 = vrot.slane %v259, 2
      %v670 = vsel %vm602, %v665, %v669
      %v671 = vrot.slane %v260, 2
      %v672 = vsel %vm602, %v667, %v671
      %v673 = vrot.slane %v261, 2
      %v674 = vsel %vm602, %v669, %v673
      %v675 = vrot.slane %v262, 2
      %v676 = vsel %vm602, %v671, %v675
      %v677 = vrot.slane %v263, 2
      %v678 = vsel %vm602, %v673, %v677
      %v679 = vrot.slane %v264, 2
      %v680 = vsel %vm602, %v675, %v679
      %v681 = vrot.slane %v265, 2
      %v682 = vsel %vm602, %v677, %v681
      %v683 = vrot.slane %v266, 2
      %v684 = vsel %vm602, %v679, %v683
      %v685 = vrot.slane %v267, 2
      %v686 = vsel %vm602, %v681, %v685
      %v687 = vrot.slane %v268, 2
      %v688 = vsel %vm602, %v683, %v687
      %v689 = vrot.slane %v269, 2
      %v690 = vsel %vm602, %v685, %v689
      %v691 = vrot.slane %v270, 2
      %v692 = vsel %vm602, %v687, %v691
      %v693 = vrot.slane %v271, 2
      %v694 = vsel %vm602, %v689, %v693
      %v695 = vrot.slane %v272, 2
      %v696 = vsel %vm602, %v691, %v695
      %v697 = vrot.slane %v273, 2
      %v698 = vsel %vm602, %v693, %v697
      %v699 = vrot.slane %v274, 2
      %v700 = vsel %vm602, %v695, %v699
      %v701 = vrot.slane %v275, 2
      %v702 = vsel %vm602, %v697, %v701
      %v703 = vrot.slane %v276, 2
      %v704 = vsel %vm602, %v699, %v703
      %v705 = vrot.slane %v277, 2
      %v706 = vsel %vm602, %v701, %v705
      %v707 = vrot.slane %v278, 2
      %v708 = vsel %vm602, %v703, %v707
      %v709 = vrot.slane %v279, 2
      %v710 = vsel %vm602, %v705, %v709
      %v711 = vrot.slane %v280, 2
      %v712 = vsel %vm602, %v707, %v711
      %v713 = vrot.slane %v281, 2
      %v714 = vsel %vm602, %v709, %v713
      %v715 = vrot.slane %v282, 2
      %v716 = vsel %vm602, %v711, %v715
      %v717 = vrot.slane %v283, 2
      %v718 = vsel %vm602, %v713, %v717
      %v719 = vrot.slane %v284, 2
      %v720 = vsel %vm602, %v715, %v719
      %v721 = vrot.slane %v285, 2
      %v722 = vsel %vm602, %v717, %v721
      %v723 = vrot.slane %v286, 2
      %v724 = vsel %vm602, %v719, %v723
      %v725 = vrot.slane %v287, 2
      %v726 = vsel %vm602, %v721, %v725
      %v727 = vrot.slane %v288, 2
      %v728 = vsel %vm602, %v723, %v727
      %v729 = vrot.slane %v289, 2
      %v730 = vsel %vm602, %v725, %v729
      %v731 = vrot.slane %v290, 2
      %v732 = vsel %vm602, %v727, %v731
      %v733 = vrot.slane %v291, 2
      %v734 = vsel %vm602, %v729, %v733
      %v735 = vrot.slane %v292, 2
      %v736 = vsel %vm602, %v731, %v735
      %v737 = vrot.slane %v293, 2
      %v738 = vsel %vm602, %v733, %v737
      %v739 = vrot.slane %v294, 2
      %v740 = vsel %vm602, %v735, %v739
      %v741 = vrot.slane %v295, 2
      %v742 = vsel %vm602, %v737, %v741
      %v743 = vrot.slane %v296, 2
      %v744 = vsel %vm602, %v739, %v743
      %v745 = vrot.slane %v303, 2
      %v746 = vsel %vm602, %v741, %v745
      %v747 = vrot.slane %v304, 2
      %v748 = vsel %vm602, %v743, %v747
      %v821 = vld [vmem:[%s1] sm:$0xff]
      %v822 = vld [vmem:[%s1 + $0x8] sm:$0xff]
      %v823 = vld [vmem:[%s1 + $0x10] sm:$0xff]
      %v824 = vld [vmem:[%s1 + $0x18] sm:$0xff]
      %v825 = vld [vmem:[%s1 + $0x20] sm:$0xff]
      %v826 = vld [vmem:[%s1 + $0x28] sm:$0xff]
      %v827 = vld [vmem:[%s1 + $0x30] sm:$0xff]
      %v828 = vld [vmem:[%s1 + $0x38] sm:$0xff]
      %v829 = vld [vmem:[%s1 + $0x40] sm:$0xff]
      %v830 = vld [vmem:[%s1 + $0x48] sm:$0xff]
      %v831 = vld [vmem:[%s1 + $0x50] sm:$0xff]
      %v832 = vld [vmem:[%s1 + $0x58] sm:$0xff]
      %v833 = vld [vmem:[%s1 + $0x60] sm:$0xff]
      %v834 = vld [vmem:[%s1 + $0x68] sm:$0xff]
      %v835 = vld [vmem:[%s1 + $0x70] sm:$0xff]
      %v836 = vld [vmem:[%s1 + $0x78] sm:$0xff]
      %v837 = vld [vmem:[%s1 + $0x80] sm:$0xff]
      %v838 = vld [vmem:[%s1 + $0x88] sm:$0xff]
      %v839 = vld [vmem:[%s1 + $0x90] sm:$0xff]
      %v840 = vld [vmem:[%s1 + $0x98] sm:$0xff]
      %v841 = vld [vmem:[%s1 + $0xa0] sm:$0xff]
      %v842 = vld [vmem:[%s1 + $0xa8] sm:$0xff]
      %v843 = vld [vmem:[%s1 + $0xb0] sm:$0xff]
      %v844 = vld [vmem:[%s1 + $0xb8] sm:$0xff]
      %v845 = vld [vmem:[%s1 + $0xc0] sm:$0xff]
      %v846 = vld [vmem:[%s1 + $0xc8] sm:$0xff]
      %v847 = vld [vmem:[%s1 + $0xd0] sm:$0xff]
      %v848 = vld [vmem:[%s1 + $0xd8] sm:$0xff]
      %v849 = vld [vmem:[%s1 + $0xe0] sm:$0xff]
      %v850 = vld [vmem:[%s1 + $0xe8] sm:$0xff]
      %v851 = vld [vmem:[%s1 + $0xf0] sm:$0xff]
      %v852 = vld [vmem:[%s1 + $0xf8] sm:$0xff]
      %v853 = vld [vmem:[%s1 + $0x100] sm:$0xff]
      %v854 = vld [vmem:[%s1 + $0x108] sm:$0xff]
      %v855 = vld [vmem:[%s1 + $0x110] sm:$0xff]
      %v856 = vld [vmem:[%s1 + $0x118] sm:$0xff]
      %v857 = vld [vmem:[%s1 + $0x120] sm:$0xff]
      %v858 = vld [vmem:[%s1 + $0x128] sm:$0xff]
      %v859 = vld [vmem:[%s1 + $0x130] sm:$0xff]
      %v860 = vld [vmem:[%s1 + $0x138] sm:$0xff]
      %v861 = vld [vmem:[%s1 + $0x140] sm:$0xff]
      %v862 = vld [vmem:[%s1 + $0x148] sm:$0xff]
      %v863 = vld [vmem:[%s1 + $0x150] sm:$0xff]
      %v864 = vld [vmem:[%s1 + $0x158] sm:$0xff]
      %v865 = vld [vmem:[%s1 + $0x160] sm:$0xff]
      %v866 = vld [vmem:[%s1 + $0x168] sm:$0xff]
      %v867 = vld [vmem:[%s1 + $0x170] sm:$0xff]
      %v868 = vld [vmem:[%s1 + $0x178] sm:$0xff]
      %v869 = vld [vmem:[%s1 + $0x180] sm:$0xff]
      %v870 = vld [vmem:[%s1 + $0x188] sm:$0xff]
      %v871 = vld [vmem:[%s1 + $0x190] sm:$0xff]
      %v872 = vld [vmem:[%s1 + $0x198] sm:$0xff]
      %v873 = vld [vmem:[%s1 + $0x1a0] sm:$0xff]
      %v874 = vld [vmem:[%s1 + $0x1a8] sm:$0xff]
      %v875 = vld [vmem:[%s1 + $0x1b0] sm:$0xff]
      %v876 = vld [vmem:[%s1 + $0x1b8] sm:$0xff]
      %v877 = vld [vmem:[%s1 + $0x1c0] sm:$0xff]
      %v878 = vld [vmem:[%s1 + $0x1c8] sm:$0xff]
      %v879 = vld [vmem:[%s1 + $0x1d0] sm:$0xff]
      %v880 = vld [vmem:[%s1 + $0x1d8] sm:$0xff]
      %v881 = vld [vmem:[%s1 + $0x1e0] sm:$0xff]
      %v882 = vld [vmem:[%s1 + $0x1e8] sm:$0xff]
      %v883 = vld [vmem:[%s1 + $0x1f0] sm:$0xff]
      %v884 = vld [vmem:[%s1 + $0x1f8] sm:$0xff]
      %v885 = vld [vmem:[%s1 + $0x200] sm:$0xff]
      %v886 = vld [vmem:[%s1 + $0x208] sm:$0xff]
      %v887 = vld [vmem:[%s1 + $0x210] sm:$0xff]
      %v888 = vld [vmem:[%s1 + $0x218] sm:$0xff]
      %v889 = vld [vmem:[%s1 + $0x220] sm:$0xff]
      %v890 = vld [vmem:[%s1 + $0x228] sm:$0xff]
      %v891 = vld [vmem:[%s1 + $0x230] sm:$0xff]
      %v892 = vld [vmem:[%s1 + $0x238] sm:$0xff]
      %v893 = vld [vmem:[%s1 + $0x240] sm:$0xff]
      %v894 = vld [vmem:[%s1 + $0x248] sm:$0xff]
      %v895 = vld [vmem:[%s1 + $0x250] sm:$0xff]
      %v896 = vld [vmem:[%s1 + $0x258] sm:$0xff]
      %v897 = vld [vmem:[%s1 + $0x260] sm:$0xff]
      %v898 = vld [vmem:[%s1 + $0x268] sm:$0xff]
      %v899 = vld [vmem:[%s1 + $0x270] sm:$0xff]
      %v900 = vld [vmem:[%s1 + $0x278] sm:$0xff]
      %v901 = vld [vmem:[%s1 + $0x280] sm:$0xff]
      %v902 = vld [vmem:[%s1 + $0x288] sm:$0xff]
      %v903 = vld [vmem:[%s1 + $0x290] sm:$0xff]
      %v904 = vld [vmem:[%s1 + $0x298] sm:$0xff]
      %v905 = vld [vmem:[%s1 + $0x2a0] sm:$0xff]
      %v906 = vld [vmem:[%s1 + $0x2a8] sm:$0xff]
      %v907 = vld [vmem:[%s1 + $0x2b0] sm:$0xff]
      %v908 = vld [vmem:[%s1 + $0x2b8] sm:$0xff]
      %v909 = vld [vmem:[%s1 + $0x2c0] sm:$0xff]
      %v910 = vld [vmem:[%s1 + $0x2c8] sm:$0xff]
      %v911 = vld [vmem:[%s1 + $0x2d0] sm:$0xff]
      %v912 = vld [vmem:[%s1 + $0x2d8] sm:$0xff]
      %v913 = vld [vmem:[%s1 + $0x2e0] sm:$0xff]
      %v914 = vld [vmem:[%s1 + $0x2e8] sm:$0xff]
      %v915 = vld [vmem:[%s1 + $0x2f0] sm:$0xff]
      %v916 = vld [vmem:[%s1 + $0x2f8] sm:$0xff]
      %v917 = vld [vmem:[%s1 + $0x300] sm:$0xff]
      %v918 = vld [vmem:[%s1 + $0x308] sm:$0xff]
      %v919 = vld [vmem:[%s1 + $0x310] sm:$0xff]
      %v920 = vld [vmem:[%s1 + $0x318] sm:$0xff]
      %v921 = vld [vmem:[%s1 + $0x320] sm:$0xff]
      %v922 = vld [vmem:[%s1 + $0x328] sm:$0xff]
      %v923 = vld [vmem:[%s1 + $0x330] sm:$0xff]
      %v924 = vld [vmem:[%s1 + $0x338] sm:$0xff]
      %v925 = vld [vmem:[%s1 + $0x340] sm:$0xff]
      %v926 = vld [vmem:[%s1 + $0x348] sm:$0xff]
      %v927 = vld [vmem:[%s1 + $0x350] sm:$0xff]
      %v928 = vld [vmem:[%s1 + $0x358] sm:$0xff]
      %v929 = vld [vmem:[%s1 + $0x360] sm:$0xff]
      %v930 = vld [vmem:[%s1 + $0x368] sm:$0xff]
      %v931 = vld [vmem:[%s1 + $0x370] sm:$0xff]
      %v932 = vld [vmem:[%s1 + $0x378] sm:$0xff]
      %v933 = vld [vmem:[%s1 + $0x380] sm:$0xff]
      %v934 = vld [vmem:[%s1 + $0x388] sm:$0xff]
      %v935 = vld [vmem:[%s1 + $0x390] sm:$0xff]
      %v936 = vld [vmem:[%s1 + $0x398] sm:$0xff]
      %v937 = vld [vmem:[%s1 + $0x3a0] sm:$0xff]
      %v938 = vld [vmem:[%s1 + $0x3a8] sm:$0xff]
      %v939 = vld [vmem:[%s1 + $0x3b0] sm:$0xff]
      %v940 = vld [vmem:[%s1 + $0x3b8] sm:$0xff]
      %v941 = vld [vmem:[%s1 + $0x3c0] sm:$0xff]
      %v942 = vld [vmem:[%s1 + $0x3c8] sm:$0xff]
      %v943 = vld [vmem:[%s1 + $0x3d0] sm:$0xff]
      %v944 = vld [vmem:[%s1 + $0x3d8] sm:$0xff]
      %v945 = vld [vmem:[%s1 + $0x3e0] sm:$0xff]
      %v946 = vld [vmem:[%s1 + $0x3e8] sm:$0xff]
      %v947 = vld [vmem:[%s1 + $0x3f0] sm:$0xff]
      %v948 = vld [vmem:[%s1 + $0x3f8] sm:$0xff]
      %v949 = vld [vmem:[%s1 + $0x400] sm:$0xff]
      %v950 = vld [vmem:[%s1 + $0x408] sm:$0xff]
      %v951 = vld [vmem:[%s1 + $0x410] sm:$0xff]
      %v952 = vld [vmem:[%s1 + $0x418] sm:$0xff]
      %v953 = vld [vmem:[%s1 + $0x420] sm:$0xff]
      %v954 = vld [vmem:[%s1 + $0x428] sm:$0xff]
      %v955 = vld [vmem:[%s1 + $0x430] sm:$0xff]
      %v956 = vld [vmem:[%s1 + $0x438] sm:$0xff]
      %v957 = vld [vmem:[%s1 + $0x440] sm:$0xff]
      %v958 = vld [vmem:[%s1 + $0x448] sm:$0xff]
      %v959 = vld [vmem:[%s1 + $0x450] sm:$0xff]
      %v960 = vld [vmem:[%s1 + $0x458] sm:$0xff]
      %v961 = vld [vmem:[%s1 + $0x460] sm:$0xff]
      %v962 = vld [vmem:[%s1 + $0x468] sm:$0xff]
      %v963 = vld [vmem:[%s1 + $0x470] sm:$0xff]
      %v964 = vld [vmem:[%s1 + $0x478] sm:$0xff]
      %v965 = vld [vmem:[%s1 + $0x480] sm:$0xff]
      %v966 = vld [vmem:[%s1 + $0x488] sm:$0xff]
      %v967 = vld [vmem:[%s1 + $0x490] sm:$0xff]
      %v968 = vld [vmem:[%s1 + $0x498] sm:$0xff]
      %v969 = vld [vmem:[%s1 + $0x4a0] sm:$0xff]
      %v970 = vld [vmem:[%s1 + $0x4a8] sm:$0xff]
      %v971 = vld [vmem:[%s1 + $0x4b0] sm:$0xff]
      %v972 = vld [vmem:[%s1 + $0x4b8] sm:$0xff]
      %v973 = vld [vmem:[%s1 + $0x4c0] sm:$0xff]
      %v974 = vld [vmem:[%s1 + $0x4c8] sm:$0xff]
      %v975 = vld [vmem:[%s1 + $0x4d0] sm:$0xff]
      %v976 = vld [vmem:[%s1 + $0x4d8] sm:$0xff]
      %v977 = vld [vmem:[%s1 + $0x4e0] sm:$0xff]
      %v978 = vld [vmem:[%s1 + $0x4e8] sm:$0xff]
      %v979 = vld [vmem:[%s1 + $0x4f0] sm:$0xff]
      %v980 = vld [vmem:[%s1 + $0x4f8] sm:$0xff]
      %v981 = vld [vmem:[%s1 + $0x500] sm:$0xff]
      %v982 = vld [vmem:[%s1 + $0x508] sm:$0xff]
      %v983 = vld [vmem:[%s1 + $0x510] sm:$0xff]
      %v984 = vld [vmem:[%s1 + $0x518] sm:$0xff]
      %v985 = vld [vmem:[%s1 + $0x520] sm:$0xff]
      %v986 = vld [vmem:[%s1 + $0x528] sm:$0xff]
      %v987 = vld [vmem:[%s1 + $0x530] sm:$0xff]
      %v988 = vld [vmem:[%s1 + $0x538] sm:$0xff]
      %v989 = vld [vmem:[%s1 + $0x540] sm:$0xff]
      %v990 = vld [vmem:[%s1 + $0x548] sm:$0xff]
      %v991 = vld [vmem:[%s1 + $0x550] sm:$0xff]
      %v992 = vld [vmem:[%s1 + $0x558] sm:$0xff]
      %v993 = vld [vmem:[%s1 + $0x560] sm:$0xff]
      %v994 = vld [vmem:[%s1 + $0x568] sm:$0xff]
      %v995 = vld [vmem:[%s1 + $0x570] sm:$0xff]
      %v996 = vld [vmem:[%s1 + $0x578] sm:$0xff]
      %v997 = vld [vmem:[%s1 + $0x580] sm:$0xff]
      %v998 = vld [vmem:[%s1 + $0x588] sm:$0xff]
      %v999 = vld [vmem:[%s1 + $0x590] sm:$0xff]
      %v1000 = vld [vmem:[%s1 + $0x598] sm:$0xff]
      %v1001 = vld [vmem:[%s1 + $0x5a0] sm:$0xff]
      %v1002 = vld [vmem:[%s1 + $0x5a8] sm:$0xff]
      %v1003 = vld [vmem:[%s1 + $0x5b0] sm:$0xff]
      %v1004 = vld [vmem:[%s1 + $0x5b8] sm:$0xff]
      %v1005 = vld [vmem:[%s1 + $0x5c0] sm:$0xff]
      %v1006 = vld [vmem:[%s1 + $0x5c8] sm:$0xff]
      %v1007 = vld [vmem:[%s1 + $0x5d0] sm:$0xff]
      %v1008 = vld [vmem:[%s1 + $0x5d8] sm:$0xff]
      %v1009 = vld [vmem:[%s1 + $0x5e0] sm:$0xff]
      %v1010 = vld [vmem:[%s1 + $0x5e8] sm:$0xff]
      %v1011 = vld [vmem:[%s1 + $0x5f0] sm:$0xff]
      %v1012 = vld [vmem:[%s1 + $0x5f8] sm:$0xff]
      %v1013 = vld [vmem:[%s219 + $0x20] sm:$0xfc]
      %v1014 = vld [vmem:[%s219 + $0x28] sm:$0xfc]
      %v1015 = vld [vmem:[%s219 + $0x240] sm:$0xff]
      %v1016 = vld [vmem:[%s219 + $0x248] sm:$0xff]
      %v1017 = vld [vmem:[%s219 + $0x250] sm:$0xff]
      %v1018 = vld [vmem:[%s219 + $0x258] sm:$0xff]
      %v1019 = vld [vmem:[%s219 + $0x260] sm:$0x3]
      %v1020 = vld [vmem:[%s219 + $0x268] sm:$0x3]
      %v1021 = vld [vmem:[%s219 + $0x20] sm:$0xf8]
      %v1022 = vld [vmem:[%s219 + $0x28] sm:$0xf8]
      %v1023 = vld [vmem:[%s219 + $0x260] sm:$0x7]
      %v1024 = vld [vmem:[%s219 + $0x268] sm:$0x7]
      %v1025 = vld [vmem:[%s219 + $0x20] sm:$0xf0]
      %v1026 = vld [vmem:[%s219 + $0x28] sm:$0xf0]
      %v1027 = vld [vmem:[%s219 + $0x260] sm:$0xf]
      %v1028 = vld [vmem:[%s219 + $0x268] sm:$0xf]
      %v1037 = vrot.slane %v1021, 1
      %v1038 = vsel %vm379, %v1037, %v390
      %v1039 = vrot.slane %v1022, 1
      %v1040 = vsel %vm379, %v1039, %v392
      %v1041 = vrot.slane %v1015, 1
      %v1042 = vsel %vm379, %v518, %v1041
      %v1043 = vrot.slane %v1016, 1
      %v1044 = vsel %vm379, %v520, %v1043
      %v1045 = vrot.slane %v1017, 1
      %v1046 = vsel %vm379, %v1041, %v1045
      %v1047 = vrot.slane %v1018, 1
      %v1048 = vsel %vm379, %v1043, %v1047
      %v1049 = vrot.slane %v1023, 1
      %v1050 = vsel %vm379, %v1045, %v1049
      %v1051 = vrot.slane %v1024, 1
      %v1052 = vsel %vm379, %v1047, %v1051
      %v1057 = vrot.slane %v1025, 2
      %v1058 = vsel %vm602, %v1057, %v613
      %v1059 = vrot.slane %v1026, 2
      %v1060 = vsel %vm602, %v1059, %v615
      %v1061 = vrot.slane %v1015, 2
      %v1062 = vsel %vm602, %v741, %v1061
      %v1063 = vrot.slane %v1016, 2
      %v1064 = vsel %vm602, %v743, %v1063
      %v1065 = vrot.slane %v1017, 2
      %v1066 = vsel %vm602, %v1061, %v1065
      %v1067 = vrot.slane %v1018, 2
      %v1068 = vsel %vm602, %v1063, %v1067
      %v1069 = vrot.slane %v1027, 2
      %v1070 = vsel %vm602, %v1065, %v1069
      %v1071 = vrot.slane %v1028, 2
      %v1072 = vsel %vm602, %v1067, %v1071
      %s1073 = scalar_lea.vmem %s1, 1536
      %v1074 = vld [vmem:[%s1073] sm:$0xff]
      %v1075 = vld [vmem:[%s1073 + $0x8] sm:$0xff]
      %v1076 = vld [vmem:[%s1073 + $0x10] sm:$0xff]
      %v1077 = vld [vmem:[%s1073 + $0x18] sm:$0xff]
      %v1078 = vld [vmem:[%s1073 + $0x20] sm:$0xff]
      %v1079 = vld [vmem:[%s1073 + $0x28] sm:$0xff]
      %v1080 = vld [vmem:[%s1073 + $0x30] sm:$0xff]
      %v1081 = vld [vmem:[%s1073 + $0x38] sm:$0xff]
      %v1082 = vld [vmem:[%s1073 + $0x40] sm:$0xff]
      %v1083 = vld [vmem:[%s1073 + $0x48] sm:$0xff]
      %v1084 = vld [vmem:[%s1073 + $0x50] sm:$0xff]
      %v1085 = vld [vmem:[%s1073 + $0x58] sm:$0xff]
      %v1086 = vld [vmem:[%s1073 + $0x60] sm:$0xff]
      %v1087 = vld [vmem:[%s1073 + $0x68] sm:$0xff]
      %v1088 = vld [vmem:[%s1073 + $0x70] sm:$0xff]
      %v1089 = vld [vmem:[%s1073 + $0x78] sm:$0xff]
      %v1090 = vld [vmem:[%s1073 + $0x80] sm:$0xff]
      %v1091 = vld [vmem:[%s1073 + $0x88] sm:$0xff]
      %v1092 = vld [vmem:[%s1073 + $0x90] sm:$0xff]
      %v1093 = vld [vmem:[%s1073 + $0x98] sm:$0xff]
      %v1094 = vld [vmem:[%s1073 + $0xa0] sm:$0xff]
      %v1095 = vld [vmem:[%s1073 + $0xa8] sm:$0xff]
      %v1096 = vld [vmem:[%s1073 + $0xb0] sm:$0xff]
      %v1097 = vld [vmem:[%s1073 + $0xb8] sm:$0xff]
      %v1098 = vld [vmem:[%s1073 + $0xc0] sm:$0xff]
      %v1099 = vld [vmem:[%s1073 + $0xc8] sm:$0xff]
      %v1100 = vld [vmem:[%s1073 + $0xd0] sm:$0xff]
      %v1101 = vld [vmem:[%s1073 + $0xd8] sm:$0xff]
      %v1102 = vld [vmem:[%s1073 + $0xe0] sm:$0xff]
      %v1103 = vld [vmem:[%s1073 + $0xe8] sm:$0xff]
      %v1104 = vld [vmem:[%s1073 + $0xf0] sm:$0xff]
      %v1105 = vld [vmem:[%s1073 + $0xf8] sm:$0xff]
      %v1106 = vld [vmem:[%s1073 + $0x100] sm:$0xff]
      %v1107 = vld [vmem:[%s1073 + $0x108] sm:$0xff]
      %v1108 = vld [vmem:[%s1073 + $0x110] sm:$0xff]
      %v1109 = vld [vmem:[%s1073 + $0x118] sm:$0xff]
      %v1110 = vld [vmem:[%s1073 + $0x120] sm:$0xff]
      %v1111 = vld [vmem:[%s1073 + $0x128] sm:$0xff]
      %v1112 = vld [vmem:[%s1073 + $0x130] sm:$0xff]
      %v1113 = vld [vmem:[%s1073 + $0x138] sm:$0xff]
      %v1114 = vld [vmem:[%s1073 + $0x140] sm:$0xff]
      %v1115 = vld [vmem:[%s1073 + $0x148] sm:$0xff]
      %v1116 = vld [vmem:[%s1073 + $0x150] sm:$0xff]
      %v1117 = vld [vmem:[%s1073 + $0x158] sm:$0xff]
      %v1118 = vld [vmem:[%s1073 + $0x160] sm:$0xff]
      %v1119 = vld [vmem:[%s1073 + $0x168] sm:$0xff]
      %v1120 = vld [vmem:[%s1073 + $0x170] sm:$0xff]
      %v1121 = vld [vmem:[%s1073 + $0x178] sm:$0xff]
      %v1122 = vld [vmem:[%s1073 + $0x180] sm:$0xff]
      %v1123 = vld [vmem:[%s1073 + $0x188] sm:$0xff]
      %v1124 = vld [vmem:[%s1073 + $0x190] sm:$0xff]
      %v1125 = vld [vmem:[%s1073 + $0x198] sm:$0xff]
      %v1126 = vld [vmem:[%s1073 + $0x1a0] sm:$0xff]
      %v1127 = vld [vmem:[%s1073 + $0x1a8] sm:$0xff]
      %v1128 = vld [vmem:[%s1073 + $0x1b0] sm:$0xff]
      %v1129 = vld [vmem:[%s1073 + $0x1b8] sm:$0xff]
      %v1130 = vld [vmem:[%s1073 + $0x1c0] sm:$0xff]
      %v1131 = vld [vmem:[%s1073 + $0x1c8] sm:$0xff]
      %v1132 = vld [vmem:[%s1073 + $0x1d0] sm:$0xff]
      %v1133 = vld [vmem:[%s1073 + $0x1d8] sm:$0xff]
      %v1134 = vld [vmem:[%s1073 + $0x1e0] sm:$0xff]
      %v1135 = vld [vmem:[%s1073 + $0x1e8] sm:$0xff]
      %v1136 = vld [vmem:[%s1073 + $0x1f0] sm:$0xff]
      %v1137 = vld [vmem:[%s1073 + $0x1f8] sm:$0xff]
      %v1138 = vld [vmem:[%s1073 + $0x200] sm:$0xff]
      %v1139 = vld [vmem:[%s1073 + $0x208] sm:$0xff]
      %v1140 = vld [vmem:[%s1073 + $0x210] sm:$0xff]
      %v1141 = vld [vmem:[%s1073 + $0x218] sm:$0xff]
      %v1142 = vld [vmem:[%s1073 + $0x220] sm:$0xff]
      %v1143 = vld [vmem:[%s1073 + $0x228] sm:$0xff]
      %v1144 = vld [vmem:[%s1073 + $0x230] sm:$0xff]
      %v1145 = vld [vmem:[%s1073 + $0x238] sm:$0xff]
      %v1146 = vld [vmem:[%s1073 + $0x240] sm:$0xff]
      %v1147 = vld [vmem:[%s1073 + $0x248] sm:$0xff]
      %v1148 = vld [vmem:[%s1073 + $0x250] sm:$0xff]
      %v1149 = vld [vmem:[%s1073 + $0x258] sm:$0xff]
      %v1150 = vld [vmem:[%s1073 + $0x260] sm:$0xff]
      %v1151 = vld [vmem:[%s1073 + $0x268] sm:$0xff]
      %v1152 = vld [vmem:[%s1073 + $0x270] sm:$0xff]
      %v1153 = vld [vmem:[%s1073 + $0x278] sm:$0xff]
      %v1154 = vld [vmem:[%s1073 + $0x280] sm:$0xff]
      %v1155 = vld [vmem:[%s1073 + $0x288] sm:$0xff]
      %v1156 = vld [vmem:[%s1073 + $0x290] sm:$0xff]
      %v1157 = vld [vmem:[%s1073 + $0x298] sm:$0xff]
      %v1158 = vld [vmem:[%s1073 + $0x2a0] sm:$0xff]
      %v1159 = vld [vmem:[%s1073 + $0x2a8] sm:$0xff]
      %v1160 = vld [vmem:[%s1073 + $0x2b0] sm:$0xff]
      %v1161 = vld [vmem:[%s1073 + $0x2b8] sm:$0xff]
      %v1162 = vld [vmem:[%s1073 + $0x2c0] sm:$0xff]
      %v1163 = vld [vmem:[%s1073 + $0x2c8] sm:$0xff]
      %v1164 = vld [vmem:[%s1073 + $0x2d0] sm:$0xff]
      %v1165 = vld [vmem:[%s1073 + $0x2d8] sm:$0xff]
      %v1166 = vld [vmem:[%s1073 + $0x2e0] sm:$0xff]
      %v1167 = vld [vmem:[%s1073 + $0x2e8] sm:$0xff]
      %v1168 = vld [vmem:[%s1073 + $0x2f0] sm:$0xff]
      %v1169 = vld [vmem:[%s1073 + $0x2f8] sm:$0xff]
      %v1170 = vld [vmem:[%s1073 + $0x300] sm:$0xff]
      %v1171 = vld [vmem:[%s1073 + $0x308] sm:$0xff]
      %v1172 = vld [vmem:[%s1073 + $0x310] sm:$0xff]
      %v1173 = vld [vmem:[%s1073 + $0x318] sm:$0xff]
      %v1174 = vld [vmem:[%s1073 + $0x320] sm:$0xff]
      %v1175 = vld [vmem:[%s1073 + $0x328] sm:$0xff]
      %v1176 = vld [vmem:[%s1073 + $0x330] sm:$0xff]
      %v1177 = vld [vmem:[%s1073 + $0x338] sm:$0xff]
      %v1178 = vld [vmem:[%s1073 + $0x340] sm:$0xff]
      %v1179 = vld [vmem:[%s1073 + $0x348] sm:$0xff]
      %v1180 = vld [vmem:[%s1073 + $0x350] sm:$0xff]
      %v1181 = vld [vmem:[%s1073 + $0x358] sm:$0xff]
      %v1182 = vld [vmem:[%s1073 + $0x360] sm:$0xff]
      %v1183 = vld [vmem:[%s1073 + $0x368] sm:$0xff]
      %v1184 = vld [vmem:[%s1073 + $0x370] sm:$0xff]
      %v1185 = vld [vmem:[%s1073 + $0x378] sm:$0xff]
      %v1186 = vld [vmem:[%s1073 + $0x380] sm:$0xff]
      %v1187 = vld [vmem:[%s1073 + $0x388] sm:$0xff]
      %v1188 = vld [vmem:[%s1073 + $0x390] sm:$0xff]
      %v1189 = vld [vmem:[%s1073 + $0x398] sm:$0xff]
      %v1190 = vld [vmem:[%s1073 + $0x3a0] sm:$0xff]
      %v1191 = vld [vmem:[%s1073 + $0x3a8] sm:$0xff]
      %v1192 = vld [vmem:[%s1073 + $0x3b0] sm:$0xff]
      %v1193 = vld [vmem:[%s1073 + $0x3b8] sm:$0xff]
      %v1194 = vld [vmem:[%s1073 + $0x3c0] sm:$0xff]
      %v1195 = vld [vmem:[%s1073 + $0x3c8] sm:$0xff]
      %v1196 = vld [vmem:[%s1073 + $0x3d0] sm:$0xff]
      %v1197 = vld [vmem:[%s1073 + $0x3d8] sm:$0xff]
      %v1198 = vld [vmem:[%s1073 + $0x3e0] sm:$0xff]
      %v1199 = vld [vmem:[%s1073 + $0x3e8] sm:$0xff]
      %v1200 = vld [vmem:[%s1073 + $0x3f0] sm:$0xff]
      %v1201 = vld [vmem:[%s1073 + $0x3f8] sm:$0xff]
      %v1202 = vld [vmem:[%s1073 + $0x400] sm:$0xff]
      %v1203 = vld [vmem:[%s1073 + $0x408] sm:$0xff]
      %v1204 = vld [vmem:[%s1073 + $0x410] sm:$0xff]
      %v1205 = vld [vmem:[%s1073 + $0x418] sm:$0xff]
      %v1206 = vld [vmem:[%s1073 + $0x420] sm:$0xff]
      %v1207 = vld [vmem:[%s1073 + $0x428] sm:$0xff]
      %v1208 = vld [vmem:[%s1073 + $0x430] sm:$0xff]
      %v1209 = vld [vmem:[%s1073 + $0x438] sm:$0xff]
      %v1210 = vld [vmem:[%s1073 + $0x440] sm:$0xff]
      %v1211 = vld [vmem:[%s1073 + $0x448] sm:$0xff]
      %v1212 = vld [vmem:[%s1073 + $0x450] sm:$0xff]
      %v1213 = vld [vmem:[%s1073 + $0x458] sm:$0xff]
      %v1214 = vld [vmem:[%s1073 + $0x460] sm:$0xff]
      %v1215 = vld [vmem:[%s1073 + $0x468] sm:$0xff]
      %v1216 = vld [vmem:[%s1073 + $0x470] sm:$0xff]
      %v1217 = vld [vmem:[%s1073 + $0x478] sm:$0xff]
      %v1218 = vld [vmem:[%s1073 + $0x480] sm:$0xff]
      %v1219 = vld [vmem:[%s1073 + $0x488] sm:$0xff]
      %v1220 = vld [vmem:[%s1073 + $0x490] sm:$0xff]
      %v1221 = vld [vmem:[%s1073 + $0x498] sm:$0xff]
      %v1222 = vld [vmem:[%s1073 + $0x4a0] sm:$0xff]
      %v1223 = vld [vmem:[%s1073 + $0x4a8] sm:$0xff]
      %v1224 = vld [vmem:[%s1073 + $0x4b0] sm:$0xff]
      %v1225 = vld [vmem:[%s1073 + $0x4b8] sm:$0xff]
      %v1226 = vld [vmem:[%s1073 + $0x4c0] sm:$0xff]
      %v1227 = vld [vmem:[%s1073 + $0x4c8] sm:$0xff]
      %v1228 = vld [vmem:[%s1073 + $0x4d0] sm:$0xff]
      %v1229 = vld [vmem:[%s1073 + $0x4d8] sm:$0xff]
      %v1230 = vld [vmem:[%s1073 + $0x4e0] sm:$0xff]
      %v1231 = vld [vmem:[%s1073 + $0x4e8] sm:$0xff]
      %v1232 = vld [vmem:[%s1073 + $0x4f0] sm:$0xff]
      %v1233 = vld [vmem:[%s1073 + $0x4f8] sm:$0xff]
      %v1234 = vld [vmem:[%s1073 + $0x500] sm:$0xff]
      %v1235 = vld [vmem:[%s1073 + $0x508] sm:$0xff]
      %v1236 = vld [vmem:[%s1073 + $0x510] sm:$0xff]
      %v1237 = vld [vmem:[%s1073 + $0x518] sm:$0xff]
      %v1238 = vld [vmem:[%s1073 + $0x520] sm:$0xff]
      %v1239 = vld [vmem:[%s1073 + $0x528] sm:$0xff]
      %v1240 = vld [vmem:[%s1073 + $0x530] sm:$0xff]
      %v1241 = vld [vmem:[%s1073 + $0x538] sm:$0xff]
      %v1242 = vld [vmem:[%s1073 + $0x540] sm:$0xff]
      %v1243 = vld [vmem:[%s1073 + $0x548] sm:$0xff]
      %v1244 = vld [vmem:[%s1073 + $0x550] sm:$0xff]
      %v1245 = vld [vmem:[%s1073 + $0x558] sm:$0xff]
      %v1246 = vld [vmem:[%s1073 + $0x560] sm:$0xff]
      %v1247 = vld [vmem:[%s1073 + $0x568] sm:$0xff]
      %v1248 = vld [vmem:[%s1073 + $0x570] sm:$0xff]
      %v1249 = vld [vmem:[%s1073 + $0x578] sm:$0xff]
      %v1250 = vld [vmem:[%s1073 + $0x580] sm:$0xff]
      %v1251 = vld [vmem:[%s1073 + $0x588] sm:$0xff]
      %v1252 = vld [vmem:[%s1073 + $0x590] sm:$0xff]
      %v1253 = vld [vmem:[%s1073 + $0x598] sm:$0xff]
      %v1254 = vld [vmem:[%s1073 + $0x5a0] sm:$0xff]
      %v1255 = vld [vmem:[%s1073 + $0x5a8] sm:$0xff]
      %v1256 = vld [vmem:[%s1073 + $0x5b0] sm:$0xff]
      %v1257 = vld [vmem:[%s1073 + $0x5b8] sm:$0xff]
      %v1258 = vld [vmem:[%s1073 + $0x5c0] sm:$0xff]
      %v1259 = vld [vmem:[%s1073 + $0x5c8] sm:$0xff]
      %v1260 = vld [vmem:[%s1073 + $0x5d0] sm:$0xff]
      %v1261 = vld [vmem:[%s1073 + $0x5d8] sm:$0xff]
      %v1262 = vld [vmem:[%s1073 + $0x5e0] sm:$0xff]
      %v1263 = vld [vmem:[%s1073 + $0x5e8] sm:$0xff]
      %v1264 = vld [vmem:[%s1073 + $0x5f0] sm:$0xff]
      %v1265 = vld [vmem:[%s1073 + $0x5f8] sm:$0xff]
      %v1270 = vrot.slane %v1013, 2
      %v1271 = vsel %vm602, %v1270, %v613
      %v1272 = vrot.slane %v1014, 2
      %v1273 = vsel %vm602, %v1272, %v615
      %v1274 = vrot.slane %v1038, 2
      %v1275 = vrot.slane %v395, 2
      %v1276 = vsel %vm602, %v1274, %v1275
      %v1277 = vrot.slane %v1040, 2
      %v1278 = vrot.slane %v397, 2
      %v1279 = vsel %vm602, %v1277, %v1278
      %v1280 = vrot.slane %v1058, 2
      %v1281 = vrot.slane %v618, 2
      %v1282 = vsel %vm602, %v1280, %v1281
      %v1283 = vrot.slane %v1060, 2
      %v1284 = vrot.slane %v620, 2
      %v1285 = vsel %vm602, %v1283, %v1284
      %v1286 = vrot.slane %v399, 2
      %v1287 = vsel %vm602, %v1275, %v1286
      %v1288 = vrot.slane %v401, 2
      %v1289 = vsel %vm602, %v1278, %v1288
      %v1290 = vrot.slane %v622, 2
      %v1291 = vsel %vm602, %v1281, %v1290
      %v1292 = vrot.slane %v624, 2
      %v1293 = vsel %vm602, %v1284, %v1292
      %v1294 = vrot.slane %v403, 2
      %v1295 = vsel %vm602, %v1286, %v1294
      %v1296 = vrot.slane %v405, 2
      %v1297 = vsel %vm602, %v1288, %v1296
      %v1298 = vrot.slane %v626, 2
      %v1299 = vsel %vm602, %v1290, %v1298
      %v1300 = vrot.slane %v628, 2
      %v1301 = vsel %vm602, %v1292, %v1300
      %v1302 = vrot.slane %v407, 2
      %v1303 = vsel %vm602, %v1294, %v1302
      %v1304 = vrot.slane %v409, 2
      %v1305 = vsel %vm602, %v1296, %v1304
      %v1306 = vrot.slane %v630, 2
      %v1307 = vsel %vm602, %v1298, %v1306
      %v1308 = vrot.slane %v632, 2
      %v1309 = vsel %vm602, %v1300, %v1308
      %v1310 = vrot.slane %v411, 2
      %v1311 = vsel %vm602, %v1302, %v1310
      %v1312 = vrot.slane %v413, 2
      %v1313 = vsel %vm602, %v1304, %v1312
      %v1314 = vrot.slane %v634, 2
      %v1315 = vsel %vm602, %v1306, %v1314
      %v1316 = vrot.slane %v636, 2
      %v1317 = vsel %vm602, %v1308, %v1316
      %v1318 = vrot.slane %v415, 2
      %v1319 = vsel %vm602, %v1310, %v1318
      %v1320 = vrot.slane %v417, 2
      %v1321 = vsel %vm602, %v1312, %v1320
      %v1322 = vrot.slane %v638, 2
      %v1323 = vsel %vm602, %v1314, %v1322
      %v1324 = vrot.slane %v640, 2
      %v1325 = vsel %vm602, %v1316, %v1324
      %v1326 = vrot.slane %v419, 2
      %v1327 = vsel %vm602, %v1318, %v1326
      %v1328 = vrot.slane %v421, 2
      %v1329 = vsel %vm602, %v1320, %v1328
      %v1330 = vrot.slane %v642, 2
      %v1331 = vsel %vm602, %v1322, %v1330
      %v1332 = vrot.slane %v644, 2
      %v1333 = vsel %vm602, %v1324, %v1332
      %v1334 = vrot.slane %v423, 2
      %v1335 = vsel %vm602, %v1326, %v1334
      %v1336 = vrot.slane %v425, 2
      %v1337 = vsel %vm602, %v1328, %v1336
      %v1338 = vrot.slane %v646, 2
      %v1339 = vsel %vm602, %v1330, %v1338
      %v1340 = vrot.slane %v648, 2
      %v1341 = vsel %vm602, %v1332, %v1340
      %v1342 = vrot.slane %v427, 2
      %v1343 = vsel %vm602, %v1334, %v1342
      %v1344 = vrot.slane %v429, 2
      %v1345 = vsel %vm602, %v1336, %v1344
      %v1346 = vrot.slane %v650, 2
      %v1347 = vsel %vm602, %v1338, %v1346
      %v1348 = vrot.slane %v652, 2
      %v1349 = vsel %vm602, %v1340, %v1348
      %v1350 = vrot.slane %v431, 2
      %v1351 = vsel %vm602, %v1342, %v1350
      %v1352 = vrot.slane %v433, 2
      %v1353 = vsel %vm602, %v1344, %v1352
      %v1354 = vrot.slane %v654, 2
      %v1355 = vsel %vm602, %v1346, %v1354
      %v1356 = vrot.slane %v656, 2
      %v1357 = vsel %vm602, %v1348, %v1356
      %v1358 = vrot.slane %v435, 2
      %v1359 = vsel %vm602, %v1350, %v1358
      %v1360 = vrot.slane %v437, 2
      %v1361 = vsel %vm602, %v1352, %v1360
      %v1362 = vrot.slane %v658, 2
      %v1363 = vsel %vm602, %v1354, %v1362
      %v1364 = vrot.slane %v660, 2
      %v1365 = vsel %vm602, %v1356, %v1364
      %v1366 = vrot.slane %v439, 2
      %v1367 = vsel %vm602, %v1358, %v1366
      %v1368 = vrot.slane %v441, 2
      %v1369 = vsel %vm602, %v1360, %v1368
      %v1370 = vrot.slane %v662, 2
      %v1371 = vsel %vm602, %v1362, %v1370
      %v1372 = vrot.slane %v664, 2
      %v1373 = vsel %vm602, %v1364, %v1372
      %v1374 = vrot.slane %v443, 2
      %v1375 = vsel %vm602, %v1366, %v1374
      %v1376 = vrot.slane %v445, 2
      %v1377 = vsel %vm602, %v1368, %v1376
      %v1378 = vrot.slane %v666, 2
      %v1379 = vsel %vm602, %v1370, %v1378
      %v1380 = vrot.slane %v668, 2
      %v1381 = vsel %vm602, %v1372, %v1380
      %v1382 = vrot.slane %v447, 2
      %v1383 = vsel %vm602, %v1374, %v1382
      %v1384 = vrot.slane %v449, 2
      %v1385 = vsel %vm602, %v1376, %v1384
      %v1386 = vrot.slane %v670, 2
      %v1387 = vsel %vm602, %v1378, %v1386
      %v1388 = vrot.slane %v672, 2
      %v1389 = vsel %vm602, %v1380, %v1388
      %v1390 = vrot.slane %v451, 2
      %v1391 = vsel %vm602, %v1382, %v1390
      %v1392 = vrot.slane %v453, 2
      %v1393 = vsel %vm602, %v1384, %v1392
      %v1394 = vrot.slane %v674, 2
      %v1395 = vsel %vm602, %v1386, %v1394
      %v1396 = vrot.slane %v676, 2
      %v1397 = vsel %vm602, %v1388, %v1396
      %v1398 = vrot.slane %v455, 2
      %v1399 = vsel %vm602, %v1390, %v1398
      %v1400 = vrot.slane %v457, 2
      %v1401 = vsel %vm602, %v1392, %v1400
      %v1402 = vrot.slane %v678, 2
      %v1403 = vsel %vm602, %v1394, %v1402
      %v1404 = vrot.slane %v680, 2
      %v1405 = vsel %vm602, %v1396, %v1404
      %v1406 = vrot.slane %v459, 2
      %v1407 = vsel %vm602, %v1398, %v1406
      %v1408 = vrot.slane %v461, 2
      %v1409 = vsel %vm602, %v1400, %v1408
      %v1410 = vrot.slane %v682, 2
      %v1411 = vsel %vm602, %v1402, %v1410
      %v1412 = vrot.slane %v684, 2
      %v1413 = vsel %vm602, %v1404, %v1412
      %v1414 = vrot.slane %v463, 2
      %v1415 = vsel %vm602, %v1406, %v1414
      %v1416 = vrot.slane %v465, 2
      %v1417 = vsel %vm602, %v1408, %v1416
      %v1418 = vrot.slane %v686, 2
      %v1419 = vsel %vm602, %v1410, %v1418
      %v1420 = vrot.slane %v688, 2
      %v1421 = vsel %vm602, %v1412, %v1420
      %v1422 = vrot.slane %v467, 2
      %v1423 = vsel %vm602, %v1414, %v1422
      %v1424 = vrot.slane %v469, 2
      %v1425 = vsel %vm602, %v1416, %v1424
      %v1426 = vrot.slane %v690, 2
      %v1427 = vsel %vm602, %v1418, %v1426
      %v1428 = vrot.slane %v692, 2
      %v1429 = vsel %vm602, %v1420, %v1428
      %v1430 = vrot.slane %v471, 2
      %v1431 = vsel %vm602, %v1422, %v1430
      %v1432 = vrot.slane %v473, 2
      %v1433 = vsel %vm602, %v1424, %v1432
      %v1434 = vrot.slane %v694, 2
      %v1435 = vsel %vm602, %v1426, %v1434
      %v1436 = vrot.slane %v696, 2
      %v1437 = vsel %vm602, %v1428, %v1436
      %v1438 = vrot.slane %v475, 2
      %v1439 = vsel %vm602, %v1430, %v1438
      %v1440 = vrot.slane %v477, 2
      %v1441 = vsel %vm602, %v1432, %v1440
      %v1442 = vrot.slane %v698, 2
      %v1443 = vsel %vm602, %v1434, %v1442
      %v1444 = vrot.slane %v700, 2
      %v1445 = vsel %vm602, %v1436, %v1444
      %v1446 = vrot.slane %v479, 2
      %v1447 = vsel %vm602, %v1438, %v1446
      %v1448 = vrot.slane %v481, 2
      %v1449 = vsel %vm602, %v1440, %v1448
      %v1450 = vrot.slane %v702, 2
      %v1451 = vsel %vm602, %v1442, %v1450
      %v1452 = vrot.slane %v704, 2
      %v1453 = vsel %vm602, %v1444, %v1452
      %v1454 = vrot.slane %v483, 2
      %v1455 = vsel %vm602, %v1446, %v1454
      %v1456 = vrot.slane %v485, 2
      %v1457 = vsel %vm602, %v1448, %v1456
      %v1458 = vrot.slane %v706, 2
      %v1459 = vsel %vm602, %v1450, %v1458
      %v1460 = vrot.slane %v708, 2
      %v1461 = vsel %vm602, %v1452, %v1460
      %v1462 = vrot.slane %v487, 2
      %v1463 = vsel %vm602, %v1454, %v1462
      %v1464 = vrot.slane %v489, 2
      %v1465 = vsel %vm602, %v1456, %v1464
      %v1466 = vrot.slane %v710, 2
      %v1467 = vsel %vm602, %v1458, %v1466
      %v1468 = vrot.slane %v712, 2
      %v1469 = vsel %vm602, %v1460, %v1468
      %v1470 = vrot.slane %v491, 2
      %v1471 = vsel %vm602, %v1462, %v1470
      %v1472 = vrot.slane %v493, 2
      %v1473 = vsel %vm602, %v1464, %v1472
      %v1474 = vrot.slane %v714, 2
      %v1475 = vsel %vm602, %v1466, %v1474
      %v1476 = vrot.slane %v716, 2
      %v1477 = vsel %vm602, %v1468, %v1476
      %v1478 = vrot.slane %v495, 2
      %v1479 = vsel %vm602, %v1470, %v1478
      %v1480 = vrot.slane %v497, 2
      %v1481 = vsel %vm602, %v1472, %v1480
      %v1482 = vrot.slane %v718, 2
      %v1483 = vsel %vm602, %v1474, %v1482
      %v1484 = vrot.slane %v720, 2
      %v1485 = vsel %vm602, %v1476, %v1484
      %v1486 = vrot.slane %v499, 2
      %v1487 = vsel %vm602, %v1478, %v1486
      %v1488 = vrot.slane %v501, 2
      %v1489 = vsel %vm602, %v1480, %v1488
      %v1490 = vrot.slane %v722, 2
      %v1491 = vsel %vm602, %v1482, %v1490
      %v1492 = vrot.slane %v724, 2
      %v1493 = vsel %vm602, %v1484, %v1492
      %v1494 = vrot.slane %v503, 2
      %v1495 = vsel %vm602, %v1486, %v1494
      %v1496 = vrot.slane %v505, 2
      %v1497 = vsel %vm602, %v1488, %v1496
      %v1498 = vrot.slane %v726, 2
      %v1499 = vsel %vm602, %v1490, %v1498
      %v1500 = vrot.slane %v728, 2
      %v1501 = vsel %vm602, %v1492, %v1500
      %v1502 = vrot.slane %v507, 2
      %v1503 = vsel %vm602, %v1494, %v1502
      %v1504 = vrot.slane %v509, 2
      %v1505 = vsel %vm602, %v1496, %v1504
      %v1506 = vrot.slane %v730, 2
      %v1507 = vsel %vm602, %v1498, %v1506
      %v1508 = vrot.slane %v732, 2
      %v1509 = vsel %vm602, %v1500, %v1508
      %v1510 = vrot.slane %v511, 2
      %v1511 = vsel %vm602, %v1502, %v1510
      %v1512 = vrot.slane %v513, 2
      %v1513 = vsel %vm602, %v1504, %v1512
      %v1514 = vrot.slane %v734, 2
      %v1515 = vsel %vm602, %v1506, %v1514
      %v1516 = vrot.slane %v736, 2
      %v1517 = vsel %vm602, %v1508, %v1516
      %v1518 = vrot.slane %v515, 2
      %v1519 = vsel %vm602, %v1510, %v1518
      %v1520 = vrot.slane %v517, 2
      %v1521 = vsel %vm602, %v1512, %v1520
      %v1522 = vrot.slane %v738, 2
      %v1523 = vsel %vm602, %v1514, %v1522
      %v1524 = vrot.slane %v740, 2
      %v1525 = vsel %vm602, %v1516, %v1524
      %v1526 = vrot.slane %v519, 2
      %v1527 = vsel %vm602, %v1518, %v1526
      %v1528 = vrot.slane %v521, 2
      %v1529 = vsel %vm602, %v1520, %v1528
      %v1530 = vrot.slane %v742, 2
      %v1531 = vsel %vm602, %v1522, %v1530
      %v1532 = vrot.slane %v744, 2
      %v1533 = vsel %vm602, %v1524, %v1532
      %v1534 = vrot.slane %v1042, 2
      %v1535 = vsel %vm602, %v1526, %v1534
      %v1536 = vrot.slane %v1044, 2
      %v1537 = vsel %vm602, %v1528, %v1536
      %v1538 = vrot.slane %v1062, 2
      %v1539 = vsel %vm602, %v1530, %v1538
      %v1540 = vrot.slane %v1064, 2
      %v1541 = vsel %vm602, %v1532, %v1540
      %v1542 = vrot.slane %v1046, 2
      %v1543 = vsel %vm602, %v1534, %v1542
      %v1544 = vrot.slane %v1048, 2
      %v1545 = vsel %vm602, %v1536, %v1544
      %v1546 = vrot.slane %v1066, 2
      %v1547 = vsel %vm602, %v1538, %v1546
      %v1548 = vrot.slane %v1068, 2
      %v1549 = vsel %vm602, %v1540, %v1548
      %v1550 = vrot.slane %v1050, 2
      %v1551 = vsel %vm602, %v1542, %v1550
      %v1552 = vrot.slane %v1052, 2
      %v1553 = vsel %vm602, %v1544, %v1552
      %v1554 = vrot.slane %v1070, 2
      %v1555 = vsel %vm602, %v1546, %v1554
      %v1556 = vrot.slane %v1072, 2
      %v1557 = vsel %vm602, %v1548, %v1556
      %v1558 = vrot.slane %v1019, 2
      %v1559 = vsel %vm602, %v1065, %v1558
      %v1560 = vrot.slane %v1020, 2
      %v1561 = vsel %vm602, %v1067, %v1560
      %v1562 = vrot.slane %v1049, 2
      %v1563 = vsel %vm602, %v1550, %v1562
      %v1564 = vrot.slane %v1051, 2
      %v1565 = vsel %vm602, %v1552, %v1564
      %v1566 = vrot.slane %v1069, 2
      %v1567 = vsel %vm602, %v1554, %v1566
      %v1568 = vrot.slane %v1071, 2
      %v1569 = vsel %vm602, %v1556, %v1568
      %1722 = vmatprep.subr.mxu0 %v1105
      %1723 = vmatpush1.msra.mxu0 %v1104
      %1724 = vmatprep.subr.mxu0 %v1103
      %1725 = vmatpush1.msra.mxu0 %v1102
      %1726 = vmatprep.subr.mxu0 %v1101
      %1727 = vmatpush1.msra.mxu0 %v1100
      %1728 = vmatprep.subr.mxu0 %v1099
      %1729 = vmatpush1.msra.mxu0 %v1098
      %1730 = vmatprep.subr.mxu0 %v1097
      %1731 = vmatpush1.msra.mxu0 %v1096
      %1732 = vmatprep.subr.mxu0 %v1095
      %1733 = vmatpush1.msra.mxu0 %v1094
      %1734 = vmatprep.subr.mxu0 %v1093
      %1735 = vmatpush1.msra.mxu0 %v1092
      %1736 = vmatprep.subr.mxu0 %v1091
      %1737 = vmatpush1.msra.mxu0 %v1090
      %1738 = vmatprep.subr.mxu0 %v1089
      %1739 = vmatpush1.msra.mxu0 %v1088
      %1740 = vmatprep.subr.mxu0 %v1087
      %1741 = vmatpush1.msra.mxu0 %v1086
      %1742 = vmatprep.subr.mxu0 %v1085
      %1743 = vmatpush1.msra.mxu0 %v1084
      %1744 = vmatprep.subr.mxu0 %v1083
      %1745 = vmatpush1.msra.mxu0 %v1082
      %1746 = vmatprep.subr.mxu0 %v1081
      %1747 = vmatpush1.msra.mxu0 %v1080
      %1748 = vmatprep.subr.mxu0 %v1079
      %1749 = vmatpush1.msra.mxu0 %v1078
      %1750 = vmatprep.subr.mxu0 %v1077
      %1751 = vmatpush1.msra.mxu0 %v1076
      %1752 = vmatprep.subr.mxu0 %v1075
      %1753 = vmatpush1.msra.mxu0 %v1074
      %1754 = vmatprep.subr.mxu0 %v1137
      %1755 = vmatpush2.msra.mxu0 %v1136
      %1756 = vmatprep.subr.mxu0 %v1135
      %1757 = vmatpush2.msra.mxu0 %v1134
      %1758 = vmatprep.subr.mxu0 %v1133
      %1759 = vmatpush2.msra.mxu0 %v1132
      %1760 = vmatprep.subr.mxu0 %v1131
      %1761 = vmatpush2.msra.mxu0 %v1130
      %1762 = vmatprep.subr.mxu0 %v1129
      %1763 = vmatpush2.msra.mxu0 %v1128
      %1764 = vmatprep.subr.mxu0 %v1127
      %1765 = vmatpush2.msra.mxu0 %v1126
      %1766 = vmatprep.subr.mxu0 %v1125
      %1767 = vmatpush2.msra.mxu0 %v1124
      %1768 = vmatprep.subr.mxu0 %v1123
      %1769 = vmatpush2.msra.mxu0 %v1122
      %1770 = vmatprep.subr.mxu0 %v1121
      %1771 = vmatpush2.msra.mxu0 %v1120
      %1772 = vmatprep.subr.mxu0 %v1119
      %1773 = vmatpush2.msra.mxu0 %v1118
      %1774 = vmatprep.subr.mxu0 %v1117
      %1775 = vmatpush2.msra.mxu0 %v1116
      %1776 = vmatprep.subr.mxu0 %v1115
      %1777 = vmatpush2.msra.mxu0 %v1114
      %1778 = vmatprep.subr.mxu0 %v1113
      %1779 = vmatpush2.msra.mxu0 %v1112
      %1780 = vmatprep.subr.mxu0 %v1111
      %1781 = vmatpush2.msra.mxu0 %v1110
      %1782 = vmatprep.subr.mxu0 %v1109
      %1783 = vmatpush2.msra.mxu0 %v1108
      %1784 = vmatprep.subr.mxu0 %v1107
      %1785 = vmatpush2.msra.mxu0 %v1106
      %1786 = vmatprep.mubr.f32.mxu0 %v1273
      %1787 = vmatmul.mubr.f32.gmra.mxu0 %v1271
      %v1788 = vpop.f32.mrf.mxu0
      %v1789 = vadd.f32 0.0, %v1788
      %v1790 = vpop.f32.mrf.mxu0
      %v1791 = vadd.f32 0.0, %v1790
      %1792 = vmatprep.mubr.f32.mxu0 %v620
      %1793 = vmatmul.mubr.f32.gmra.mxu0 %v618
      %v1794 = vpop.f32.mrf.mxu0
      %v1795 = vadd.f32 0.0, %v1794
      %v1796 = vpop.f32.mrf.mxu0
      %v1797 = vadd.f32 0.0, %v1796
      %1798 = vmatprep.mubr.f32.mxu0 %v624
      %1799 = vmatmul.mubr.f32.gmra.mxu0 %v622
      %v1800 = vpop.f32.mrf.mxu0
      %v1801 = vadd.f32 0.0, %v1800
      %v1802 = vpop.f32.mrf.mxu0
      %v1803 = vadd.f32 0.0, %v1802
      %1804 = vmatprep.mubr.f32.mxu0 %v628
      %1805 = vmatmul.mubr.f32.gmra.mxu0 %v626
      %v1806 = vpop.f32.mrf.mxu0
      %v1807 = vadd.f32 0.0, %v1806
      %v1808 = vpop.f32.mrf.mxu0
      %v1809 = vadd.f32 0.0, %v1808
      %1810 = vmatprep.mubr.f32.mxu0 %v632
      %1811 = vmatmul.mubr.f32.gmra.mxu0 %v630
      %v1812 = vpop.f32.mrf.mxu0
      %v1813 = vadd.f32 0.0, %v1812
      %v1814 = vpop.f32.mrf.mxu0
      %v1815 = vadd.f32 0.0, %v1814
      %1816 = vmatprep.mubr.f32.mxu0 %v636
      %1817 = vmatmul.mubr.f32.gmra.mxu0 %v634
      %v1818 = vpop.f32.mrf.mxu0
      %v1819 = vadd.f32 0.0, %v1818
      %v1820 = vpop.f32.mrf.mxu0
      %v1821 = vadd.f32 0.0, %v1820
      %1822 = vmatprep.mubr.f32.mxu0 %v640
      %1823 = vmatmul.mubr.f32.gmra.mxu0 %v638
      %v1824 = vpop.f32.mrf.mxu0
      %v1825 = vadd.f32 0.0, %v1824
      %v1826 = vpop.f32.mrf.mxu0
      %v1827 = vadd.f32 0.0, %v1826
      %1828 = vmatprep.mubr.f32.mxu0 %v644
      %1829 = vmatmul.mubr.f32.gmra.mxu0 %v642
      %v1830 = vpop.f32.mrf.mxu0
      %v1831 = vadd.f32 0.0, %v1830
      %v1832 = vpop.f32.mrf.mxu0
      %v1833 = vadd.f32 0.0, %v1832
      %1834 = vmatprep.mubr.f32.mxu0 %v648
      %1835 = vmatmul.mubr.f32.gmra.mxu0 %v646
      %v1836 = vpop.f32.mrf.mxu0
      %v1837 = vadd.f32 0.0, %v1836
      %v1838 = vpop.f32.mrf.mxu0
      %v1839 = vadd.f32 0.0, %v1838
      %1840 = vmatprep.mubr.f32.mxu0 %v652
      %1841 = vmatmul.mubr.f32.gmra.mxu0 %v650
      %v1842 = vpop.f32.mrf.mxu0
      %v1843 = vadd.f32 0.0, %v1842
      %v1844 = vpop.f32.mrf.mxu0
      %v1845 = vadd.f32 0.0, %v1844
      %1846 = vmatprep.mubr.f32.mxu0 %v656
      %1847 = vmatmul.mubr.f32.gmra.mxu0 %v654
      %v1848 = vpop.f32.mrf.mxu0
      %v1849 = vadd.f32 0.0, %v1848
      %v1850 = vpop.f32.mrf.mxu0
      %v1851 = vadd.f32 0.0, %v1850
      %1852 = vmatprep.mubr.f32.mxu0 %v660
      %1853 = vmatmul.mubr.f32.gmra.mxu0 %v658
      %v1854 = vpop.f32.mrf.mxu0
      %v1855 = vadd.f32 0.0, %v1854
      %v1856 = vpop.f32.mrf.mxu0
      %v1857 = vadd.f32 0.0, %v1856
      %1858 = vmatprep.mubr.f32.mxu0 %v664
      %1859 = vmatmul.mubr.f32.gmra.mxu0 %v662
      %v1860 = vpop.f32.mrf.mxu0
      %v1861 = vadd.f32 0.0, %v1860
      %v1862 = vpop.f32.mrf.mxu0
      %v1863 = vadd.f32 0.0, %v1862
      %1864 = vmatprep.mubr.f32.mxu0 %v668
      %1865 = vmatmul.mubr.f32.gmra.mxu0 %v666
      %v1866 = vpop.f32.mrf.mxu0
      %v1867 = vadd.f32 0.0, %v1866
      %v1868 = vpop.f32.mrf.mxu0
      %v1869 = vadd.f32 0.0, %v1868
      %1870 = vmatprep.mubr.f32.mxu0 %v672
      %1871 = vmatmul.mubr.f32.gmra.mxu0 %v670
      %v1872 = vpop.f32.mrf.mxu0
      %v1873 = vadd.f32 0.0, %v1872
      %v1874 = vpop.f32.mrf.mxu0
      %v1875 = vadd.f32 0.0, %v1874
      %1876 = vmatprep.mubr.f32.mxu0 %v676
      %1877 = vmatmul.mubr.f32.gmra.mxu0 %v674
      %v1878 = vpop.f32.mrf.mxu0
      %v1879 = vadd.f32 0.0, %v1878
      %v1880 = vpop.f32.mrf.mxu0
      %v1881 = vadd.f32 0.0, %v1880
      %1882 = vmatprep.mubr.f32.mxu0 %v680
      %1883 = vmatmul.mubr.f32.gmra.mxu0 %v678
      %v1884 = vpop.f32.mrf.mxu0
      %v1885 = vadd.f32 0.0, %v1884
      %v1886 = vpop.f32.mrf.mxu0
      %v1887 = vadd.f32 0.0, %v1886
      %1888 = vmatprep.mubr.f32.mxu0 %v684
      %1889 = vmatmul.mubr.f32.gmra.mxu0 %v682
      %v1890 = vpop.f32.mrf.mxu0
      %v1891 = vadd.f32 0.0, %v1890
      %v1892 = vpop.f32.mrf.mxu0
      %v1893 = vadd.f32 0.0, %v1892
      %1894 = vmatprep.mubr.f32.mxu0 %v688
      %1895 = vmatmul.mubr.f32.gmra.mxu0 %v686
      %v1896 = vpop.f32.mrf.mxu0
      %v1897 = vadd.f32 0.0, %v1896
      %v1898 = vpop.f32.mrf.mxu0
      %v1899 = vadd.f32 0.0, %v1898
      %1900 = vmatprep.mubr.f32.mxu0 %v692
      %1901 = vmatmul.mubr.f32.gmra.mxu0 %v690
      %v1902 = vpop.f32.mrf.mxu0
      %v1903 = vadd.f32 0.0, %v1902
      %v1904 = vpop.f32.mrf.mxu0
      %v1905 = vadd.f32 0.0, %v1904
      %1906 = vmatprep.mubr.f32.mxu0 %v696
      %1907 = vmatmul.mubr.f32.gmra.mxu0 %v694
      %v1908 = vpop.f32.mrf.mxu0
      %v1909 = vadd.f32 0.0, %v1908
      %v1910 = vpop.f32.mrf.mxu0
      %v1911 = vadd.f32 0.0, %v1910
      %1912 = vmatprep.mubr.f32.mxu0 %v700
      %1913 = vmatmul.mubr.f32.gmra.mxu0 %v698
      %v1914 = vpop.f32.mrf.mxu0
      %v1915 = vadd.f32 0.0, %v1914
      %v1916 = vpop.f32.mrf.mxu0
      %v1917 = vadd.f32 0.0, %v1916
      %1918 = vmatprep.mubr.f32.mxu0 %v704
      %1919 = vmatmul.mubr.f32.gmra.mxu0 %v702
      %v1920 = vpop.f32.mrf.mxu0
      %v1921 = vadd.f32 0.0, %v1920
      %v1922 = vpop.f32.mrf.mxu0
      %v1923 = vadd.f32 0.0, %v1922
      %1924 = vmatprep.mubr.f32.mxu0 %v708
      %1925 = vmatmul.mubr.f32.gmra.mxu0 %v706
      %v1926 = vpop.f32.mrf.mxu0
      %v1927 = vadd.f32 0.0, %v1926
      %v1928 = vpop.f32.mrf.mxu0
      %v1929 = vadd.f32 0.0, %v1928
      %1930 = vmatprep.mubr.f32.mxu0 %v712
      %1931 = vmatmul.mubr.f32.gmra.mxu0 %v710
      %v1932 = vpop.f32.mrf.mxu0
      %v1933 = vadd.f32 0.0, %v1932
      %v1934 = vpop.f32.mrf.mxu0
      %v1935 = vadd.f32 0.0, %v1934
      %1936 = vmatprep.mubr.f32.mxu0 %v716
      %1937 = vmatmul.mubr.f32.gmra.mxu0 %v714
      %v1938 = vpop.f32.mrf.mxu0
      %v1939 = vadd.f32 0.0, %v1938
      %v1940 = vpop.f32.mrf.mxu0
      %v1941 = vadd.f32 0.0, %v1940
      %1942 = vmatprep.mubr.f32.mxu0 %v720
      %1943 = vmatmul.mubr.f32.gmra.mxu0 %v718
      %v1944 = vpop.f32.mrf.mxu0
      %v1945 = vadd.f32 0.0, %v1944
      %v1946 = vpop.f32.mrf.mxu0
      %v1947 = vadd.f32 0.0, %v1946
      %1948 = vmatprep.mubr.f32.mxu0 %v724
      %1949 = vmatmul.mubr.f32.gmra.mxu0 %v722
      %v1950 = vpop.f32.mrf.mxu0
      %v1951 = vadd.f32 0.0, %v1950
      %v1952 = vpop.f32.mrf.mxu0
      %v1953 = vadd.f32 0.0, %v1952
      %1954 = vmatprep.mubr.f32.mxu0 %v728
      %1955 = vmatmul.mubr.f32.gmra.mxu0 %v726
      %v1956 = vpop.f32.mrf.mxu0
      %v1957 = vadd.f32 0.0, %v1956
      %v1958 = vpop.f32.mrf.mxu0
      %v1959 = vadd.f32 0.0, %v1958
      %1960 = vmatprep.mubr.f32.mxu0 %v732
      %1961 = vmatmul.mubr.f32.gmra.mxu0 %v730
      %v1962 = vpop.f32.mrf.mxu0
      %v1963 = vadd.f32 0.0, %v1962
      %v1964 = vpop.f32.mrf.mxu0
      %v1965 = vadd.f32 0.0, %v1964
      %1966 = vmatprep.mubr.f32.mxu0 %v736
      %1967 = vmatmul.mubr.f32.gmra.mxu0 %v734
      %v1968 = vpop.f32.mrf.mxu0
      %v1969 = vadd.f32 0.0, %v1968
      %v1970 = vpop.f32.mrf.mxu0
      %v1971 = vadd.f32 0.0, %v1970
      %1972 = vmatprep.mubr.f32.mxu0 %v740
      %1973 = vmatmul.mubr.f32.gmra.mxu0 %v738
      %v1974 = vpop.f32.mrf.mxu0
      %v1975 = vadd.f32 0.0, %v1974
      %v1976 = vpop.f32.mrf.mxu0
      %v1977 = vadd.f32 0.0, %v1976
      %1978 = vmatprep.mubr.f32.mxu0 %v744
      %1979 = vmatmul.mubr.f32.gmra.mxu0 %v742
      %v1980 = vpop.f32.mrf.mxu0
      %v1981 = vadd.f32 0.0, %v1980
      %v1982 = vpop.f32.mrf.mxu0
      %v1983 = vadd.f32 0.0, %v1982
      %1984 = vmatprep.mubr.f32.mxu0 %v1064
      %1985 = vmatmul.mubr.f32.gmra.mxu0 %v1062
      %v1986 = vpop.f32.mrf.mxu0
      %v1987 = vadd.f32 0.0, %v1986
      %v1988 = vpop.f32.mrf.mxu0
      %v1989 = vadd.f32 0.0, %v1988
      %1990 = vmatprep.mubr.f32.mxu0 %v1068
      %1991 = vmatmul.mubr.f32.gmra.mxu0 %v1066
      %v1992 = vpop.f32.mrf.mxu0
      %v1993 = vadd.f32 0.0, %v1992
      %v1994 = vpop.f32.mrf.mxu0
      %v1995 = vadd.f32 0.0, %v1994
      %1996 = vmatprep.mubr.f32.mxu0 %v1561
      %1997 = vmatmul.mubr.f32.gmra.mxu0 %v1559
      %v1998 = vpop.f32.mrf.mxu0
      %v1999 = vadd.f32 0.0, %v1998
      %v2000 = vpop.f32.mrf.mxu0
      %v2001 = vadd.f32 0.0, %v2000
      %2002 = vdwg.mxu0
      %2003 = vmatprep.subr.mxu0 %v1169
      %2004 = vmatpush1.msra.mxu0 %v1168
      %2005 = vmatprep.subr.mxu0 %v1167
      %2006 = vmatpush1.msra.mxu0 %v1166
      %2007 = vmatprep.subr.mxu0 %v1165
      %2008 = vmatpush1.msra.mxu0 %v1164
      %2009 = vmatprep.subr.mxu0 %v1163
      %2010 = vmatpush1.msra.mxu0 %v1162
      %2011 = vmatprep.subr.mxu0 %v1161
      %2012 = vmatpush1.msra.mxu0 %v1160
      %2013 = vmatprep.subr.mxu0 %v1159
      %2014 = vmatpush1.msra.mxu0 %v1158
      %2015 = vmatprep.subr.mxu0 %v1157
      %2016 = vmatpush1.msra.mxu0 %v1156
      %2017 = vmatprep.subr.mxu0 %v1155
      %2018 = vmatpush1.msra.mxu0 %v1154
      %2019 = vmatprep.subr.mxu0 %v1153
      %2020 = vmatpush1.msra.mxu0 %v1152
      %2021 = vmatprep.subr.mxu0 %v1151
      %2022 = vmatpush1.msra.mxu0 %v1150
      %2023 = vmatprep.subr.mxu0 %v1149
      %2024 = vmatpush1.msra.mxu0 %v1148
      %2025 = vmatprep.subr.mxu0 %v1147
      %2026 = vmatpush1.msra.mxu0 %v1146
      %2027 = vmatprep.subr.mxu0 %v1145
      %2028 = vmatpush1.msra.mxu0 %v1144
      %2029 = vmatprep.subr.mxu0 %v1143
      %2030 = vmatpush1.msra.mxu0 %v1142
      %2031 = vmatprep.subr.mxu0 %v1141
      %2032 = vmatpush1.msra.mxu0 %v1140
      %2033 = vmatprep.subr.mxu0 %v1139
      %2034 = vmatpush1.msra.mxu0 %v1138
      %2035 = vmatprep.subr.mxu0 %v1201
      %2036 = vmatpush2.msra.mxu0 %v1200
      %2037 = vmatprep.subr.mxu0 %v1199
      %2038 = vmatpush2.msra.mxu0 %v1198
      %2039 = vmatprep.subr.mxu0 %v1197
      %2040 = vmatpush2.msra.mxu0 %v1196
      %2041 = vmatprep.subr.mxu0 %v1195
      %2042 = vmatpush2.msra.mxu0 %v1194
      %2043 = vmatprep.subr.mxu0 %v1193
      %2044 = vmatpush2.msra.mxu0 %v1192
      %2045 = vmatprep.subr.mxu0 %v1191
      %2046 = vmatpush2.msra.mxu0 %v1190
      %2047 = vmatprep.subr.mxu0 %v1189
      %2048 = vmatpush2.msra.mxu0 %v1188
      %2049 = vmatprep.subr.mxu0 %v1187
      %2050 = vmatpush2.msra.mxu0 %v1186
      %2051 = vmatprep.subr.mxu0 %v1185
      %2052 = vmatpush2.msra.mxu0 %v1184
      %2053 = vmatprep.subr.mxu0 %v1183
      %2054 = vmatpush2.msra.mxu0 %v1182
      %2055 = vmatprep.subr.mxu0 %v1181
      %2056 = vmatpush2.msra.mxu0 %v1180
      %2057 = vmatprep.subr.mxu0 %v1179
      %2058 = vmatpush2.msra.mxu0 %v1178
      %2059 = vmatprep.subr.mxu0 %v1177
      %2060 = vmatpush2.msra.mxu0 %v1176
      %2061 = vmatprep.subr.mxu0 %v1175
      %2062 = vmatpush2.msra.mxu0 %v1174
      %2063 = vmatprep.subr.mxu0 %v1173
      %2064 = vmatpush2.msra.mxu0 %v1172
      %2065 = vmatprep.subr.mxu0 %v1171
      %2066 = vmatpush2.msra.mxu0 %v1170
      %2067 = vmatprep.mubr.f32.mxu0 %v1279
      %2068 = vmatmul.mubr.f32.gmra.mxu0 %v1276
      %v2069 = vpop.f32.mrf.mxu0
      %v2070 = vadd.f32 %v1789, %v2069
      %v2071 = vpop.f32.mrf.mxu0
      %v2072 = vadd.f32 %v1791, %v2071
      %2073 = vmatprep.mubr.f32.mxu0 %v1289
      %2074 = vmatmul.mubr.f32.gmra.mxu0 %v1287
      %v2075 = vpop.f32.mrf.mxu0
      %v2076 = vadd.f32 %v1795, %v2075
      %v2077 = vpop.f32.mrf.mxu0
      %v2078 = vadd.f32 %v1797, %v2077
      %2079 = vmatprep.mubr.f32.mxu0 %v1297
      %2080 = vmatmul.mubr.f32.gmra.mxu0 %v1295
      %v2081 = vpop.f32.mrf.mxu0
      %v2082 = vadd.f32 %v1801, %v2081
      %v2083 = vpop.f32.mrf.mxu0
      %v2084 = vadd.f32 %v1803, %v2083
      %2085 = vmatprep.mubr.f32.mxu0 %v1305
      %2086 = vmatmul.mubr.f32.gmra.mxu0 %v1303
      %v2087 = vpop.f32.mrf.mxu0
      %v2088 = vadd.f32 %v1807, %v2087
      %v2089 = vpop.f32.mrf.mxu0
      %v2090 = vadd.f32 %v1809, %v2089
      %2091 = vmatprep.mubr.f32.mxu0 %v1313
      %2092 = vmatmul.mubr.f32.gmra.mxu0 %v1311
      %v2093 = vpop.f32.mrf.mxu0
      %v2094 = vadd.f32 %v1813, %v2093
      %v2095 = vpop.f32.mrf.mxu0
      %v2096 = vadd.f32 %v1815, %v2095
      %2097 = vmatprep.mubr.f32.mxu0 %v1321
      %2098 = vmatmul.mubr.f32.gmra.mxu0 %v1319
      %v2099 = vpop.f32.mrf.mxu0
      %v2100 = vadd.f32 %v1819, %v2099
      %v2101 = vpop.f32.mrf.mxu0
      %v2102 = vadd.f32 %v1821, %v2101
      %2103 = vmatprep.mubr.f32.mxu0 %v1329
      %2104 = vmatmul.mubr.f32.gmra.mxu0 %v1327
      %v2105 = vpop.f32.mrf.mxu0
      %v2106 = vadd.f32 %v1825, %v2105
      %v2107 = vpop.f32.mrf.mxu0
      %v2108 = vadd.f32 %v1827, %v2107
      %2109 = vmatprep.mubr.f32.mxu0 %v1337
      %2110 = vmatmul.mubr.f32.gmra.mxu0 %v1335
      %v2111 = vpop.f32.mrf.mxu0
      %v2112 = vadd.f32 %v1831, %v2111
      %v2113 = vpop.f32.mrf.mxu0
      %v2114 = vadd.f32 %v1833, %v2113
      %2115 = vmatprep.mubr.f32.mxu0 %v1345
      %2116 = vmatmul.mubr.f32.gmra.mxu0 %v1343
      %v2117 = vpop.f32.mrf.mxu0
      %v2118 = vadd.f32 %v1837, %v2117
      %v2119 = vpop.f32.mrf.mxu0
      %v2120 = vadd.f32 %v1839, %v2119
      %2121 = vmatprep.mubr.f32.mxu0 %v1353
      %2122 = vmatmul.mubr.f32.gmra.mxu0 %v1351
      %v2123 = vpop.f32.mrf.mxu0
      %v2124 = vadd.f32 %v1843, %v2123
      %v2125 = vpop.f32.mrf.mxu0
      %v2126 = vadd.f32 %v1845, %v2125
      %2127 = vmatprep.mubr.f32.mxu0 %v1361
      %2128 = vmatmul.mubr.f32.gmra.mxu0 %v1359
      %v2129 = vpop.f32.mrf.mxu0
      %v2130 = vadd.f32 %v1849, %v2129
      %v2131 = vpop.f32.mrf.mxu0
      %v2132 = vadd.f32 %v1851, %v2131
      %2133 = vmatprep.mubr.f32.mxu0 %v1369
      %2134 = vmatmul.mubr.f32.gmra.mxu0 %v1367
      %v2135 = vpop.f32.mrf.mxu0
      %v2136 = vadd.f32 %v1855, %v2135
      %v2137 = vpop.f32.mrf.mxu0
      %v2138 = vadd.f32 %v1857, %v2137
      %2139 = vmatprep.mubr.f32.mxu0 %v1377
      %2140 = vmatmul.mubr.f32.gmra.mxu0 %v1375
      %v2141 = vpop.f32.mrf.mxu0
      %v2142 = vadd.f32 %v1861, %v2141
      %v2143 = vpop.f32.mrf.mxu0
      %v2144 = vadd.f32 %v1863, %v2143
      %2145 = vmatprep.mubr.f32.mxu0 %v1385
      %2146 = vmatmul.mubr.f32.gmra.mxu0 %v1383
      %v2147 = vpop.f32.mrf.mxu0
      %v2148 = vadd.f32 %v1867, %v2147
      %v2149 = vpop.f32.mrf.mxu0
      %v2150 = vadd.f32 %v1869, %v2149
      %2151 = vmatprep.mubr.f32.mxu0 %v1393
      %2152 = vmatmul.mubr.f32.gmra.mxu0 %v1391
      %v2153 = vpop.f32.mrf.mxu0
      %v2154 = vadd.f32 %v1873, %v2153
      %v2155 = vpop.f32.mrf.mxu0
      %v2156 = vadd.f32 %v1875, %v2155
      %2157 = vmatprep.mubr.f32.mxu0 %v1401
      %2158 = vmatmul.mubr.f32.gmra.mxu0 %v1399
      %v2159 = vpop.f32.mrf.mxu0
      %v2160 = vadd.f32 %v1879, %v2159
      %v2161 = vpop.f32.mrf.mxu0
      %v2162 = vadd.f32 %v1881, %v2161
      %2163 = vmatprep.mubr.f32.mxu0 %v1409
      %2164 = vmatmul.mubr.f32.gmra.mxu0 %v1407
      %v2165 = vpop.f32.mrf.mxu0
      %v2166 = vadd.f32 %v1885, %v2165
      %v2167 = vpop.f32.mrf.mxu0
      %v2168 = vadd.f32 %v1887, %v2167
      %2169 = vmatprep.mubr.f32.mxu0 %v1417
      %2170 = vmatmul.mubr.f32.gmra.mxu0 %v1415
      %v2171 = vpop.f32.mrf.mxu0
      %v2172 = vadd.f32 %v1891, %v2171
      %v2173 = vpop.f32.mrf.mxu0
      %v2174 = vadd.f32 %v1893, %v2173
      %2175 = vmatprep.mubr.f32.mxu0 %v1425
      %2176 = vmatmul.mubr.f32.gmra.mxu0 %v1423
      %v2177 = vpop.f32.mrf.mxu0
      %v2178 = vadd.f32 %v1897, %v2177
      %v2179 = vpop.f32.mrf.mxu0
      %v2180 = vadd.f32 %v1899, %v2179
      %2181 = vmatprep.mubr.f32.mxu0 %v1433
      %2182 = vmatmul.mubr.f32.gmra.mxu0 %v1431
      %v2183 = vpop.f32.mrf.mxu0
      %v2184 = vadd.f32 %v1903, %v2183
      %v2185 = vpop.f32.mrf.mxu0
      %v2186 = vadd.f32 %v1905, %v2185
      %2187 = vmatprep.mubr.f32.mxu0 %v1441
      %2188 = vmatmul.mubr.f32.gmra.mxu0 %v1439
      %v2189 = vpop.f32.mrf.mxu0
      %v2190 = vadd.f32 %v1909, %v2189
      %v2191 = vpop.f32.mrf.mxu0
      %v2192 = vadd.f32 %v1911, %v2191
      %2193 = vmatprep.mubr.f32.mxu0 %v1449
      %2194 = vmatmul.mubr.f32.gmra.mxu0 %v1447
      %v2195 = vpop.f32.mrf.mxu0
      %v2196 = vadd.f32 %v1915, %v2195
      %v2197 = vpop.f32.mrf.mxu0
      %v2198 = vadd.f32 %v1917, %v2197
      %2199 = vmatprep.mubr.f32.mxu0 %v1457
      %2200 = vmatmul.mubr.f32.gmra.mxu0 %v1455
      %v2201 = vpop.f32.mrf.mxu0
      %v2202 = vadd.f32 %v1921, %v2201
      %v2203 = vpop.f32.mrf.mxu0
      %v2204 = vadd.f32 %v1923, %v2203
      %2205 = vmatprep.mubr.f32.mxu0 %v1465
      %2206 = vmatmul.mubr.f32.gmra.mxu0 %v1463
      %v2207 = vpop.f32.mrf.mxu0
      %v2208 = vadd.f32 %v1927, %v2207
      %v2209 = vpop.f32.mrf.mxu0
      %v2210 = vadd.f32 %v1929, %v2209
      %2211 = vmatprep.mubr.f32.mxu0 %v1473
      %2212 = vmatmul.mubr.f32.gmra.mxu0 %v1471
      %v2213 = vpop.f32.mrf.mxu0
      %v2214 = vadd.f32 %v1933, %v2213
      %v2215 = vpop.f32.mrf.mxu0
      %v2216 = vadd.f32 %v1935, %v2215
      %2217 = vmatprep.mubr.f32.mxu0 %v1481
      %2218 = vmatmul.mubr.f32.gmra.mxu0 %v1479
      %v2219 = vpop.f32.mrf.mxu0
      %v2220 = vadd.f32 %v1939, %v2219
      %v2221 = vpop.f32.mrf.mxu0
      %v2222 = vadd.f32 %v1941, %v2221
      %2223 = vmatprep.mubr.f32.mxu0 %v1489
      %2224 = vmatmul.mubr.f32.gmra.mxu0 %v1487
      %v2225 = vpop.f32.mrf.mxu0
      %v2226 = vadd.f32 %v1945, %v2225
      %v2227 = vpop.f32.mrf.mxu0
      %v2228 = vadd.f32 %v1947, %v2227
      %2229 = vmatprep.mubr.f32.mxu0 %v1497
      %2230 = vmatmul.mubr.f32.gmra.mxu0 %v1495
      %v2231 = vpop.f32.mrf.mxu0
      %v2232 = vadd.f32 %v1951, %v2231
      %v2233 = vpop.f32.mrf.mxu0
      %v2234 = vadd.f32 %v1953, %v2233
      %2235 = vmatprep.mubr.f32.mxu0 %v1505
      %2236 = vmatmul.mubr.f32.gmra.mxu0 %v1503
      %v2237 = vpop.f32.mrf.mxu0
      %v2238 = vadd.f32 %v1957, %v2237
      %v2239 = vpop.f32.mrf.mxu0
      %v2240 = vadd.f32 %v1959, %v2239
      %2241 = vmatprep.mubr.f32.mxu0 %v1513
      %2242 = vmatmul.mubr.f32.gmra.mxu0 %v1511
      %v2243 = vpop.f32.mrf.mxu0
      %v2244 = vadd.f32 %v1963, %v2243
      %v2245 = vpop.f32.mrf.mxu0
      %v2246 = vadd.f32 %v1965, %v2245
      %2247 = vmatprep.mubr.f32.mxu0 %v1521
      %2248 = vmatmul.mubr.f32.gmra.mxu0 %v1519
      %v2249 = vpop.f32.mrf.mxu0
      %v2250 = vadd.f32 %v1969, %v2249
      %v2251 = vpop.f32.mrf.mxu0
      %v2252 = vadd.f32 %v1971, %v2251
      %2253 = vmatprep.mubr.f32.mxu0 %v1529
      %2254 = vmatmul.mubr.f32.gmra.mxu0 %v1527
      %v2255 = vpop.f32.mrf.mxu0
      %v2256 = vadd.f32 %v1975, %v2255
      %v2257 = vpop.f32.mrf.mxu0
      %v2258 = vadd.f32 %v1977, %v2257
      %2259 = vmatprep.mubr.f32.mxu0 %v1537
      %2260 = vmatmul.mubr.f32.gmra.mxu0 %v1535
      %v2261 = vpop.f32.mrf.mxu0
      %v2262 = vadd.f32 %v1981, %v2261
      %v2263 = vpop.f32.mrf.mxu0
      %v2264 = vadd.f32 %v1983, %v2263
      %2265 = vmatprep.mubr.f32.mxu0 %v1545
      %2266 = vmatmul.mubr.f32.gmra.mxu0 %v1543
      %v2267 = vpop.f32.mrf.mxu0
      %v2268 = vadd.f32 %v1987, %v2267
      %v2269 = vpop.f32.mrf.mxu0
      %v2270 = vadd.f32 %v1989, %v2269
      %2271 = vmatprep.mubr.f32.mxu0 %v1553
      %2272 = vmatmul.mubr.f32.gmra.mxu0 %v1551
      %v2273 = vpop.f32.mrf.mxu0
      %v2274 = vadd.f32 %v1993, %v2273
      %v2275 = vpop.f32.mrf.mxu0
      %v2276 = vadd.f32 %v1995, %v2275
      %2277 = vmatprep.mubr.f32.mxu0 %v1565
      %2278 = vmatmul.mubr.f32.gmra.mxu0 %v1563
      %v2279 = vpop.f32.mrf.mxu0
      %v2280 = vadd.f32 %v1999, %v2279
      %v2281 = vpop.f32.mrf.mxu0
      %v2282 = vadd.f32 %v2001, %v2281
      %2283 = vdwg.mxu0
      %2284 = vmatprep.subr.mxu0 %v1233
      %2285 = vmatpush1.msra.mxu0 %v1232
      %2286 = vmatprep.subr.mxu0 %v1231
      %2287 = vmatpush1.msra.mxu0 %v1230
      %2288 = vmatprep.subr.mxu0 %v1229
      %2289 = vmatpush1.msra.mxu0 %v1228
      %2290 = vmatprep.subr.mxu0 %v1227
      %2291 = vmatpush1.msra.mxu0 %v1226
      %2292 = vmatprep.subr.mxu0 %v1225
      %2293 = vmatpush1.msra.mxu0 %v1224
      %2294 = vmatprep.subr.mxu0 %v1223
      %2295 = vmatpush1.msra.mxu0 %v1222
      %2296 = vmatprep.subr.mxu0 %v1221
      %2297 = vmatpush1.msra.mxu0 %v1220
      %2298 = vmatprep.subr.mxu0 %v1219
      %2299 = vmatpush1.msra.mxu0 %v1218
      %2300 = vmatprep.subr.mxu0 %v1217
      %2301 = vmatpush1.msra.mxu0 %v1216
      %2302 = vmatprep.subr.mxu0 %v1215
      %2303 = vmatpush1.msra.mxu0 %v1214
      %2304 = vmatprep.subr.mxu0 %v1213
      %2305 = vmatpush1.msra.mxu0 %v1212
      %2306 = vmatprep.subr.mxu0 %v1211
      %2307 = vmatpush1.msra.mxu0 %v1210
      %2308 = vmatprep.subr.mxu0 %v1209
      %2309 = vmatpush1.msra.mxu0 %v1208
      %2310 = vmatprep.subr.mxu0 %v1207
      %2311 = vmatpush1.msra.mxu0 %v1206
      %2312 = vmatprep.subr.mxu0 %v1205
      %2313 = vmatpush1.msra.mxu0 %v1204
      %2314 = vmatprep.subr.mxu0 %v1203
      %2315 = vmatpush1.msra.mxu0 %v1202
      %2316 = vmatprep.subr.mxu0 %v1265
      %2317 = vmatpush2.msra.mxu0 %v1264
      %2318 = vmatprep.subr.mxu0 %v1263
      %2319 = vmatpush2.msra.mxu0 %v1262
      %2320 = vmatprep.subr.mxu0 %v1261
      %2321 = vmatpush2.msra.mxu0 %v1260
      %2322 = vmatprep.subr.mxu0 %v1259
      %2323 = vmatpush2.msra.mxu0 %v1258
      %2324 = vmatprep.subr.mxu0 %v1257
      %2325 = vmatpush2.msra.mxu0 %v1256
      %2326 = vmatprep.subr.mxu0 %v1255
      %2327 = vmatpush2.msra.mxu0 %v1254
      %2328 = vmatprep.subr.mxu0 %v1253
      %2329 = vmatpush2.msra.mxu0 %v1252
      %2330 = vmatprep.subr.mxu0 %v1251
      %2331 = vmatpush2.msra.mxu0 %v1250
      %2332 = vmatprep.subr.mxu0 %v1249
      %2333 = vmatpush2.msra.mxu0 %v1248
      %2334 = vmatprep.subr.mxu0 %v1247
      %2335 = vmatpush2.msra.mxu0 %v1246
      %2336 = vmatprep.subr.mxu0 %v1245
      %2337 = vmatpush2.msra.mxu0 %v1244
      %2338 = vmatprep.subr.mxu0 %v1243
      %2339 = vmatpush2.msra.mxu0 %v1242
      %2340 = vmatprep.subr.mxu0 %v1241
      %2341 = vmatpush2.msra.mxu0 %v1240
      %2342 = vmatprep.subr.mxu0 %v1239
      %2343 = vmatpush2.msra.mxu0 %v1238
      %2344 = vmatprep.subr.mxu0 %v1237
      %2345 = vmatpush2.msra.mxu0 %v1236
      %2346 = vmatprep.subr.mxu0 %v1235
      %2347 = vmatpush2.msra.mxu0 %v1234
      %2348 = vmatprep.mubr.f32.mxu0 %v1285
      %2349 = vmatmul.mubr.f32.gmra.mxu0 %v1282
      %v2350 = vpop.f32.mrf.mxu0
      %v2351 = vadd.f32 %v2070, %v2350
      %v2352 = vpop.f32.mrf.mxu0
      %v2353 = vadd.f32 %v2072, %v2352
      %2354 = vmatprep.mubr.f32.mxu0 %v1293
      %2355 = vmatmul.mubr.f32.gmra.mxu0 %v1291
      %v2356 = vpop.f32.mrf.mxu0
      %v2357 = vadd.f32 %v2076, %v2356
      %v2358 = vpop.f32.mrf.mxu0
      %v2359 = vadd.f32 %v2078, %v2358
      %2360 = vmatprep.mubr.f32.mxu0 %v1301
      %2361 = vmatmul.mubr.f32.gmra.mxu0 %v1299
      %v2362 = vpop.f32.mrf.mxu0
      %v2363 = vadd.f32 %v2082, %v2362
      %v2364 = vpop.f32.mrf.mxu0
      %v2365 = vadd.f32 %v2084, %v2364
      %2366 = vmatprep.mubr.f32.mxu0 %v1309
      %2367 = vmatmul.mubr.f32.gmra.mxu0 %v1307
      %v2368 = vpop.f32.mrf.mxu0
      %v2369 = vadd.f32 %v2088, %v2368
      %v2370 = vpop.f32.mrf.mxu0
      %v2371 = vadd.f32 %v2090, %v2370
      %2372 = vmatprep.mubr.f32.mxu0 %v1317
      %2373 = vmatmul.mubr.f32.gmra.mxu0 %v1315
      %v2374 = vpop.f32.mrf.mxu0
      %v2375 = vadd.f32 %v2094, %v2374
      %v2376 = vpop.f32.mrf.mxu0
      %v2377 = vadd.f32 %v2096, %v2376
      %2378 = vmatprep.mubr.f32.mxu0 %v1325
      %2379 = vmatmul.mubr.f32.gmra.mxu0 %v1323
      %v2380 = vpop.f32.mrf.mxu0
      %v2381 = vadd.f32 %v2100, %v2380
      %v2382 = vpop.f32.mrf.mxu0
      %v2383 = vadd.f32 %v2102, %v2382
      %2384 = vmatprep.mubr.f32.mxu0 %v1333
      %2385 = vmatmul.mubr.f32.gmra.mxu0 %v1331
      %v2386 = vpop.f32.mrf.mxu0
      %v2387 = vadd.f32 %v2106, %v2386
      %v2388 = vpop.f32.mrf.mxu0
      %v2389 = vadd.f32 %v2108, %v2388
      %2390 = vmatprep.mubr.f32.mxu0 %v1341
      %2391 = vmatmul.mubr.f32.gmra.mxu0 %v1339
      %v2392 = vpop.f32.mrf.mxu0
      %v2393 = vadd.f32 %v2112, %v2392
      %v2394 = vpop.f32.mrf.mxu0
      %v2395 = vadd.f32 %v2114, %v2394
      %2396 = vmatprep.mubr.f32.mxu0 %v1349
      %2397 = vmatmul.mubr.f32.gmra.mxu0 %v1347
      %v2398 = vpop.f32.mrf.mxu0
      %v2399 = vadd.f32 %v2118, %v2398
      %v2400 = vpop.f32.mrf.mxu0
      %v2401 = vadd.f32 %v2120, %v2400
      %2402 = vmatprep.mubr.f32.mxu0 %v1357
      %2403 = vmatmul.mubr.f32.gmra.mxu0 %v1355
      %v2404 = vpop.f32.mrf.mxu0
      %v2405 = vadd.f32 %v2124, %v2404
      %v2406 = vpop.f32.mrf.mxu0
      %v2407 = vadd.f32 %v2126, %v2406
      %2408 = vmatprep.mubr.f32.mxu0 %v1365
      %2409 = vmatmul.mubr.f32.gmra.mxu0 %v1363
      %v2410 = vpop.f32.mrf.mxu0
      %v2411 = vadd.f32 %v2130, %v2410
      %v2412 = vpop.f32.mrf.mxu0
      %v2413 = vadd.f32 %v2132, %v2412
      %2414 = vmatprep.mubr.f32.mxu0 %v1373
      %2415 = vmatmul.mubr.f32.gmra.mxu0 %v1371
      %v2416 = vpop.f32.mrf.mxu0
      %v2417 = vadd.f32 %v2136, %v2416
      %v2418 = vpop.f32.mrf.mxu0
      %v2419 = vadd.f32 %v2138, %v2418
      %2420 = vmatprep.mubr.f32.mxu0 %v1381
      %2421 = vmatmul.mubr.f32.gmra.mxu0 %v1379
      %v2422 = vpop.f32.mrf.mxu0
      %v2423 = vadd.f32 %v2142, %v2422
      %v2424 = vpop.f32.mrf.mxu0
      %v2425 = vadd.f32 %v2144, %v2424
      %2426 = vmatprep.mubr.f32.mxu0 %v1389
      %2427 = vmatmul.mubr.f32.gmra.mxu0 %v1387
      %v2428 = vpop.f32.mrf.mxu0
      %v2429 = vadd.f32 %v2148, %v2428
      %v2430 = vpop.f32.mrf.mxu0
      %v2431 = vadd.f32 %v2150, %v2430
      %2432 = vmatprep.mubr.f32.mxu0 %v1397
      %2433 = vmatmul.mubr.f32.gmra.mxu0 %v1395
      %v2434 = vpop.f32.mrf.mxu0
      %v2435 = vadd.f32 %v2154, %v2434
      %v2436 = vpop.f32.mrf.mxu0
      %v2437 = vadd.f32 %v2156, %v2436
      %2438 = vmatprep.mubr.f32.mxu0 %v1405
      %2439 = vmatmul.mubr.f32.gmra.mxu0 %v1403
      %v2440 = vpop.f32.mrf.mxu0
      %v2441 = vadd.f32 %v2160, %v2440
      %v2442 = vpop.f32.mrf.mxu0
      %v2443 = vadd.f32 %v2162, %v2442
      %2444 = vmatprep.mubr.f32.mxu0 %v1413
      %2445 = vmatmul.mubr.f32.gmra.mxu0 %v1411
      %v2446 = vpop.f32.mrf.mxu0
      %v2447 = vadd.f32 %v2166, %v2446
      %v2448 = vpop.f32.mrf.mxu0
      %v2449 = vadd.f32 %v2168, %v2448
      %2450 = vmatprep.mubr.f32.mxu0 %v1421
      %2451 = vmatmul.mubr.f32.gmra.mxu0 %v1419
      %v2452 = vpop.f32.mrf.mxu0
      %v2453 = vadd.f32 %v2172, %v2452
      %v2454 = vpop.f32.mrf.mxu0
      %v2455 = vadd.f32 %v2174, %v2454
      %2456 = vmatprep.mubr.f32.mxu0 %v1429
      %2457 = vmatmul.mubr.f32.gmra.mxu0 %v1427
      %v2458 = vpop.f32.mrf.mxu0
      %v2459 = vadd.f32 %v2178, %v2458
      %v2460 = vpop.f32.mrf.mxu0
      %v2461 = vadd.f32 %v2180, %v2460
      %2462 = vmatprep.mubr.f32.mxu0 %v1437
      %2463 = vmatmul.mubr.f32.gmra.mxu0 %v1435
      %v2464 = vpop.f32.mrf.mxu0
      %v2465 = vadd.f32 %v2184, %v2464
      %v2466 = vpop.f32.mrf.mxu0
      %v2467 = vadd.f32 %v2186, %v2466
      %2468 = vmatprep.mubr.f32.mxu0 %v1445
      %2469 = vmatmul.mubr.f32.gmra.mxu0 %v1443
      %v2470 = vpop.f32.mrf.mxu0
      %v2471 = vadd.f32 %v2190, %v2470
      %v2472 = vpop.f32.mrf.mxu0
      %v2473 = vadd.f32 %v2192, %v2472
      %2474 = vmatprep.mubr.f32.mxu0 %v1453
      %2475 = vmatmul.mubr.f32.gmra.mxu0 %v1451
      %v2476 = vpop.f32.mrf.mxu0
      %v2477 = vadd.f32 %v2196, %v2476
      %v2478 = vpop.f32.mrf.mxu0
      %v2479 = vadd.f32 %v2198, %v2478
      %2480 = vmatprep.mubr.f32.mxu0 %v1461
      %2481 = vmatmul.mubr.f32.gmra.mxu0 %v1459
      %v2482 = vpop.f32.mrf.mxu0
      %v2483 = vadd.f32 %v2202, %v2482
      %v2484 = vpop.f32.mrf.mxu0
      %v2485 = vadd.f32 %v2204, %v2484
      %2486 = vmatprep.mubr.f32.mxu0 %v1469
      %2487 = vmatmul.mubr.f32.gmra.mxu0 %v1467
      %v2488 = vpop.f32.mrf.mxu0
      %v2489 = vadd.f32 %v2208, %v2488
      %v2490 = vpop.f32.mrf.mxu0
      %v2491 = vadd.f32 %v2210, %v2490
      %2492 = vmatprep.mubr.f32.mxu0 %v1477
      %2493 = vmatmul.mubr.f32.gmra.mxu0 %v1475
      %v2494 = vpop.f32.mrf.mxu0
      %v2495 = vadd.f32 %v2214, %v2494
      %v2496 = vpop.f32.mrf.mxu0
      %v2497 = vadd.f32 %v2216, %v2496
      %2498 = vmatprep.mubr.f32.mxu0 %v1485
      %2499 = vmatmul.mubr.f32.gmra.mxu0 %v1483
      %v2500 = vpop.f32.mrf.mxu0
      %v2501 = vadd.f32 %v2220, %v2500
      %v2502 = vpop.f32.mrf.mxu0
      %v2503 = vadd.f32 %v2222, %v2502
      %2504 = vmatprep.mubr.f32.mxu0 %v1493
      %2505 = vmatmul.mubr.f32.gmra.mxu0 %v1491
      %v2506 = vpop.f32.mrf.mxu0
      %v2507 = vadd.f32 %v2226, %v2506
      %v2508 = vpop.f32.mrf.mxu0
      %v2509 = vadd.f32 %v2228, %v2508
      %2510 = vmatprep.mubr.f32.mxu0 %v1501
      %2511 = vmatmul.mubr.f32.gmra.mxu0 %v1499
      %v2512 = vpop.f32.mrf.mxu0
      %v2513 = vadd.f32 %v2232, %v2512
      %v2514 = vpop.f32.mrf.mxu0
      %v2515 = vadd.f32 %v2234, %v2514
      %2516 = vmatprep.mubr.f32.mxu0 %v1509
      %2517 = vmatmul.mubr.f32.gmra.mxu0 %v1507
      %v2518 = vpop.f32.mrf.mxu0
      %v2519 = vadd.f32 %v2238, %v2518
      %v2520 = vpop.f32.mrf.mxu0
      %v2521 = vadd.f32 %v2240, %v2520
      %2522 = vmatprep.mubr.f32.mxu0 %v1517
      %2523 = vmatmul.mubr.f32.gmra.mxu0 %v1515
      %v2524 = vpop.f32.mrf.mxu0
      %v2525 = vadd.f32 %v2244, %v2524
      %v2526 = vpop.f32.mrf.mxu0
      %v2527 = vadd.f32 %v2246, %v2526
      %2528 = vmatprep.mubr.f32.mxu0 %v1525
      %2529 = vmatmul.mubr.f32.gmra.mxu0 %v1523
      %v2530 = vpop.f32.mrf.mxu0
      %v2531 = vadd.f32 %v2250, %v2530
      %v2532 = vpop.f32.mrf.mxu0
      %v2533 = vadd.f32 %v2252, %v2532
      %2534 = vmatprep.mubr.f32.mxu0 %v1533
      %2535 = vmatmul.mubr.f32.gmra.mxu0 %v1531
      %v2536 = vpop.f32.mrf.mxu0
      %v2537 = vadd.f32 %v2256, %v2536
      %v2538 = vpop.f32.mrf.mxu0
      %v2539 = vadd.f32 %v2258, %v2538
      %2540 = vmatprep.mubr.f32.mxu0 %v1541
      %2541 = vmatmul.mubr.f32.gmra.mxu0 %v1539
      %v2542 = vpop.f32.mrf.mxu0
      %v2543 = vadd.f32 %v2262, %v2542
      %v2544 = vpop.f32.mrf.mxu0
      %v2545 = vadd.f32 %v2264, %v2544
      %2546 = vmatprep.mubr.f32.mxu0 %v1549
      %2547 = vmatmul.mubr.f32.gmra.mxu0 %v1547
      %v2548 = vpop.f32.mrf.mxu0
      %v2549 = vadd.f32 %v2268, %v2548
      %v2550 = vpop.f32.mrf.mxu0
      %v2551 = vadd.f32 %v2270, %v2550
      %2552 = vmatprep.mubr.f32.mxu0 %v1557
      %2553 = vmatmul.mubr.f32.gmra.mxu0 %v1555
      %v2554 = vpop.f32.mrf.mxu0
      %v2555 = vadd.f32 %v2274, %v2554
      %v2556 = vpop.f32.mrf.mxu0
      %v2557 = vadd.f32 %v2276, %v2556
      %2558 = vmatprep.mubr.f32.mxu0 %v1569
      %2559 = vmatmul.mubr.f32.gmra.mxu0 %v1567
      %v2560 = vpop.f32.mrf.mxu0
      %v2561 = vadd.f32 %v2280, %v2560
      %v2562 = vpop.f32.mrf.mxu0
      %v2563 = vadd.f32 %v2282, %v2562
      %2564 = vdwg.mxu0
      %2565 = vmatprep.subr.mxu0 %v852
      %2566 = vmatpush1.msra.mxu0 %v851
      %2567 = vmatprep.subr.mxu0 %v850
      %2568 = vmatpush1.msra.mxu0 %v849
      %2569 = vmatprep.subr.mxu0 %v848
      %2570 = vmatpush1.msra.mxu0 %v847
      %2571 = vmatprep.subr.mxu0 %v846
      %2572 = vmatpush1.msra.mxu0 %v845
      %2573 = vmatprep.subr.mxu0 %v844
      %2574 = vmatpush1.msra.mxu0 %v843
      %2575 = vmatprep.subr.mxu0 %v842
      %2576 = vmatpush1.msra.mxu0 %v841
      %2577 = vmatprep.subr.mxu0 %v840
      %2578 = vmatpush1.msra.mxu0 %v839
      %2579 = vmatprep.subr.mxu0 %v838
      %2580 = vmatpush1.msra.mxu0 %v837
      %2581 = vmatprep.subr.mxu0 %v836
      %2582 = vmatpush1.msra.mxu0 %v835
      %2583 = vmatprep.subr.mxu0 %v834
      %2584 = vmatpush1.msra.mxu0 %v833
      %2585 = vmatprep.subr.mxu0 %v832
      %2586 = vmatpush1.msra.mxu0 %v831
      %2587 = vmatprep.subr.mxu0 %v830
      %2588 = vmatpush1.msra.mxu0 %v829
      %2589 = vmatprep.subr.mxu0 %v828
      %2590 = vmatpush1.msra.mxu0 %v827
      %2591 = vmatprep.subr.mxu0 %v826
      %2592 = vmatpush1.msra.mxu0 %v825
      %2593 = vmatprep.subr.mxu0 %v824
      %2594 = vmatpush1.msra.mxu0 %v823
      %2595 = vmatprep.subr.mxu0 %v822
      %2596 = vmatpush1.msra.mxu0 %v821
      %2597 = vmatprep.subr.mxu0 %v884
      %2598 = vmatpush2.msra.mxu0 %v883
      %2599 = vmatprep.subr.mxu0 %v882
      %2600 = vmatpush2.msra.mxu0 %v881
      %2601 = vmatprep.subr.mxu0 %v880
      %2602 = vmatpush2.msra.mxu0 %v879
      %2603 = vmatprep.subr.mxu0 %v878
      %2604 = vmatpush2.msra.mxu0 %v877
      %2605 = vmatprep.subr.mxu0 %v876
      %2606 = vmatpush2.msra.mxu0 %v875
      %2607 = vmatprep.subr.mxu0 %v874
      %2608 = vmatpush2.msra.mxu0 %v873
      %2609 = vmatprep.subr.mxu0 %v872
      %2610 = vmatpush2.msra.mxu0 %v871
      %2611 = vmatprep.subr.mxu0 %v870
      %2612 = vmatpush2.msra.mxu0 %v869
      %2613 = vmatprep.subr.mxu0 %v868
      %2614 = vmatpush2.msra.mxu0 %v867
      %2615 = vmatprep.subr.mxu0 %v866
      %2616 = vmatpush2.msra.mxu0 %v865
      %2617 = vmatprep.subr.mxu0 %v864
      %2618 = vmatpush2.msra.mxu0 %v863
      %2619 = vmatprep.subr.mxu0 %v862
      %2620 = vmatpush2.msra.mxu0 %v861
      %2621 = vmatprep.subr.mxu0 %v860
      %2622 = vmatpush2.msra.mxu0 %v859
      %2623 = vmatprep.subr.mxu0 %v858
      %2624 = vmatpush2.msra.mxu0 %v857
      %2625 = vmatprep.subr.mxu0 %v856
      %2626 = vmatpush2.msra.mxu0 %v855
      %2627 = vmatprep.subr.mxu0 %v854
      %2628 = vmatpush2.msra.mxu0 %v853
      %2629 = vmatprep.mubr.f32.mxu0 %v226
      %2630 = vmatmul.mubr.f32.gmra.mxu0 %v225
      %v2631 = vpop.f32.mrf.mxu0
      %v2632 = vadd.f32 %v2351, %v2631
      %v2633 = vpop.f32.mrf.mxu0
      %v2634 = vadd.f32 %v2353, %v2633
      %2635 = vmatprep.mubr.f32.mxu0 %v228
      %2636 = vmatmul.mubr.f32.gmra.mxu0 %v227
      %v2637 = vpop.f32.mrf.mxu0
      %v2638 = vadd.f32 %v2357, %v2637
      %v2639 = vpop.f32.mrf.mxu0
      %v2640 = vadd.f32 %v2359, %v2639
      %2641 = vmatprep.mubr.f32.mxu0 %v230
      %2642 = vmatmul.mubr.f32.gmra.mxu0 %v229
      %v2643 = vpop.f32.mrf.mxu0
      %v2644 = vadd.f32 %v2363, %v2643
      %v2645 = vpop.f32.mrf.mxu0
      %v2646 = vadd.f32 %v2365, %v2645
      %2647 = vmatprep.mubr.f32.mxu0 %v232
      %2648 = vmatmul.mubr.f32.gmra.mxu0 %v231
      %v2649 = vpop.f32.mrf.mxu0
      %v2650 = vadd.f32 %v2369, %v2649
      %v2651 = vpop.f32.mrf.mxu0
      %v2652 = vadd.f32 %v2371, %v2651
      %2653 = vmatprep.mubr.f32.mxu0 %v234
      %2654 = vmatmul.mubr.f32.gmra.mxu0 %v233
      %v2655 = vpop.f32.mrf.mxu0
      %v2656 = vadd.f32 %v2375, %v2655
      %v2657 = vpop.f32.mrf.mxu0
      %v2658 = vadd.f32 %v2377, %v2657
      %2659 = vmatprep.mubr.f32.mxu0 %v236
      %2660 = vmatmul.mubr.f32.gmra.mxu0 %v235
      %v2661 = vpop.f32.mrf.mxu0
      %v2662 = vadd.f32 %v2381, %v2661
      %v2663 = vpop.f32.mrf.mxu0
      %v2664 = vadd.f32 %v2383, %v2663
      %2665 = vmatprep.mubr.f32.mxu0 %v238
      %2666 = vmatmul.mubr.f32.gmra.mxu0 %v237
      %v2667 = vpop.f32.mrf.mxu0
      %v2668 = vadd.f32 %v2387, %v2667
      %v2669 = vpop.f32.mrf.mxu0
      %v2670 = vadd.f32 %v2389, %v2669
      %2671 = vmatprep.mubr.f32.mxu0 %v240
      %2672 = vmatmul.mubr.f32.gmra.mxu0 %v239
      %v2673 = vpop.f32.mrf.mxu0
      %v2674 = vadd.f32 %v2393, %v2673
      %v2675 = vpop.f32.mrf.mxu0
      %v2676 = vadd.f32 %v2395, %v2675
      %2677 = vmatprep.mubr.f32.mxu0 %v242
      %2678 = vmatmul.mubr.f32.gmra.mxu0 %v241
      %v2679 = vpop.f32.mrf.mxu0
      %v2680 = vadd.f32 %v2399, %v2679
      %v2681 = vpop.f32.mrf.mxu0
      %v2682 = vadd.f32 %v2401, %v2681
      %2683 = vmatprep.mubr.f32.mxu0 %v244
      %2684 = vmatmul.mubr.f32.gmra.mxu0 %v243
      %v2685 = vpop.f32.mrf.mxu0
      %v2686 = vadd.f32 %v2405, %v2685
      %v2687 = vpop.f32.mrf.mxu0
      %v2688 = vadd.f32 %v2407, %v2687
      %2689 = vmatprep.mubr.f32.mxu0 %v246
      %2690 = vmatmul.mubr.f32.gmra.mxu0 %v245
      %v2691 = vpop.f32.mrf.mxu0
      %v2692 = vadd.f32 %v2411, %v2691
      %v2693 = vpop.f32.mrf.mxu0
      %v2694 = vadd.f32 %v2413, %v2693
      %2695 = vmatprep.mubr.f32.mxu0 %v248
      %2696 = vmatmul.mubr.f32.gmra.mxu0 %v247
      %v2697 = vpop.f32.mrf.mxu0
      %v2698 = vadd.f32 %v2417, %v2697
      %v2699 = vpop.f32.mrf.mxu0
      %v2700 = vadd.f32 %v2419, %v2699
      %2701 = vmatprep.mubr.f32.mxu0 %v250
      %2702 = vmatmul.mubr.f32.gmra.mxu0 %v249
      %v2703 = vpop.f32.mrf.mxu0
      %v2704 = vadd.f32 %v2423, %v2703
      %v2705 = vpop.f32.mrf.mxu0
      %v2706 = vadd.f32 %v2425, %v2705
      %2707 = vmatprep.mubr.f32.mxu0 %v252
      %2708 = vmatmul.mubr.f32.gmra.mxu0 %v251
      %v2709 = vpop.f32.mrf.mxu0
      %v2710 = vadd.f32 %v2429, %v2709
      %v2711 = vpop.f32.mrf.mxu0
      %v2712 = vadd.f32 %v2431, %v2711
      %2713 = vmatprep.mubr.f32.mxu0 %v254
      %2714 = vmatmul.mubr.f32.gmra.mxu0 %v253
      %v2715 = vpop.f32.mrf.mxu0
      %v2716 = vadd.f32 %v2435, %v2715
      %v2717 = vpop.f32.mrf.mxu0
      %v2718 = vadd.f32 %v2437, %v2717
      %2719 = vmatprep.mubr.f32.mxu0 %v256
      %2720 = vmatmul.mubr.f32.gmra.mxu0 %v255
      %v2721 = vpop.f32.mrf.mxu0
      %v2722 = vadd.f32 %v2441, %v2721
      %v2723 = vpop.f32.mrf.mxu0
      %v2724 = vadd.f32 %v2443, %v2723
      %2725 = vmatprep.mubr.f32.mxu0 %v258
      %2726 = vmatmul.mubr.f32.gmra.mxu0 %v257
      %v2727 = vpop.f32.mrf.mxu0
      %v2728 = vadd.f32 %v2447, %v2727
      %v2729 = vpop.f32.mrf.mxu0
      %v2730 = vadd.f32 %v2449, %v2729
      %2731 = vmatprep.mubr.f32.mxu0 %v260
      %2732 = vmatmul.mubr.f32.gmra.mxu0 %v259
      %v2733 = vpop.f32.mrf.mxu0
      %v2734 = vadd.f32 %v2453, %v2733
      %v2735 = vpop.f32.mrf.mxu0
      %v2736 = vadd.f32 %v2455, %v2735
      %2737 = vmatprep.mubr.f32.mxu0 %v262
      %2738 = vmatmul.mubr.f32.gmra.mxu0 %v261
      %v2739 = vpop.f32.mrf.mxu0
      %v2740 = vadd.f32 %v2459, %v2739
      %v2741 = vpop.f32.mrf.mxu0
      %v2742 = vadd.f32 %v2461, %v2741
      %2743 = vmatprep.mubr.f32.mxu0 %v264
      %2744 = vmatmul.mubr.f32.gmra.mxu0 %v263
      %v2745 = vpop.f32.mrf.mxu0
      %v2746 = vadd.f32 %v2465, %v2745
      %v2747 = vpop.f32.mrf.mxu0
      %v2748 = vadd.f32 %v2467, %v2747
      %2749 = vmatprep.mubr.f32.mxu0 %v266
      %2750 = vmatmul.mubr.f32.gmra.mxu0 %v265
      %v2751 = vpop.f32.mrf.mxu0
      %v2752 = vadd.f32 %v2471, %v2751
      %v2753 = vpop.f32.mrf.mxu0
      %v2754 = vadd.f32 %v2473, %v2753
      %2755 = vmatprep.mubr.f32.mxu0 %v268
      %2756 = vmatmul.mubr.f32.gmra.mxu0 %v267
      %v2757 = vpop.f32.mrf.mxu0
      %v2758 = vadd.f32 %v2477, %v2757
      %v2759 = vpop.f32.mrf.mxu0
      %v2760 = vadd.f32 %v2479, %v2759
      %2761 = vmatprep.mubr.f32.mxu0 %v270
      %2762 = vmatmul.mubr.f32.gmra.mxu0 %v269
      %v2763 = vpop.f32.mrf.mxu0
      %v2764 = vadd.f32 %v2483, %v2763
      %v2765 = vpop.f32.mrf.mxu0
      %v2766 = vadd.f32 %v2485, %v2765
      %2767 = vmatprep.mubr.f32.mxu0 %v272
      %2768 = vmatmul.mubr.f32.gmra.mxu0 %v271
      %v2769 = vpop.f32.mrf.mxu0
      %v2770 = vadd.f32 %v2489, %v2769
      %v2771 = vpop.f32.mrf.mxu0
      %v2772 = vadd.f32 %v2491, %v2771
      %2773 = vmatprep.mubr.f32.mxu0 %v274
      %2774 = vmatmul.mubr.f32.gmra.mxu0 %v273
      %v2775 = vpop.f32.mrf.mxu0
      %v2776 = vadd.f32 %v2495, %v2775
      %v2777 = vpop.f32.mrf.mxu0
      %v2778 = vadd.f32 %v2497, %v2777
      %2779 = vmatprep.mubr.f32.mxu0 %v276
      %2780 = vmatmul.mubr.f32.gmra.mxu0 %v275
      %v2781 = vpop.f32.mrf.mxu0
      %v2782 = vadd.f32 %v2501, %v2781
      %v2783 = vpop.f32.mrf.mxu0
      %v2784 = vadd.f32 %v2503, %v2783
      %2785 = vmatprep.mubr.f32.mxu0 %v278
      %2786 = vmatmul.mubr.f32.gmra.mxu0 %v277
      %v2787 = vpop.f32.mrf.mxu0
      %v2788 = vadd.f32 %v2507, %v2787
      %v2789 = vpop.f32.mrf.mxu0
      %v2790 = vadd.f32 %v2509, %v2789
      %2791 = vmatprep.mubr.f32.mxu0 %v280
      %2792 = vmatmul.mubr.f32.gmra.mxu0 %v279
      %v2793 = vpop.f32.mrf.mxu0
      %v2794 = vadd.f32 %v2513, %v2793
      %v2795 = vpop.f32.mrf.mxu0
      %v2796 = vadd.f32 %v2515, %v2795
      %2797 = vmatprep.mubr.f32.mxu0 %v282
      %2798 = vmatmul.mubr.f32.gmra.mxu0 %v281
      %v2799 = vpop.f32.mrf.mxu0
      %v2800 = vadd.f32 %v2519, %v2799
      %v2801 = vpop.f32.mrf.mxu0
      %v2802 = vadd.f32 %v2521, %v2801
      %2803 = vmatprep.mubr.f32.mxu0 %v284
      %2804 = vmatmul.mubr.f32.gmra.mxu0 %v283
      %v2805 = vpop.f32.mrf.mxu0
      %v2806 = vadd.f32 %v2525, %v2805
      %v2807 = vpop.f32.mrf.mxu0
      %v2808 = vadd.f32 %v2527, %v2807
      %2809 = vmatprep.mubr.f32.mxu0 %v286
      %2810 = vmatmul.mubr.f32.gmra.mxu0 %v285
      %v2811 = vpop.f32.mrf.mxu0
      %v2812 = vadd.f32 %v2531, %v2811
      %v2813 = vpop.f32.mrf.mxu0
      %v2814 = vadd.f32 %v2533, %v2813
      %2815 = vmatprep.mubr.f32.mxu0 %v288
      %2816 = vmatmul.mubr.f32.gmra.mxu0 %v287
      %v2817 = vpop.f32.mrf.mxu0
      %v2818 = vadd.f32 %v2537, %v2817
      %v2819 = vpop.f32.mrf.mxu0
      %v2820 = vadd.f32 %v2539, %v2819
      %2821 = vmatprep.mubr.f32.mxu0 %v290
      %2822 = vmatmul.mubr.f32.gmra.mxu0 %v289
      %v2823 = vpop.f32.mrf.mxu0
      %v2824 = vadd.f32 %v2543, %v2823
      %v2825 = vpop.f32.mrf.mxu0
      %v2826 = vadd.f32 %v2545, %v2825
      %2827 = vmatprep.mubr.f32.mxu0 %v292
      %2828 = vmatmul.mubr.f32.gmra.mxu0 %v291
      %v2829 = vpop.f32.mrf.mxu0
      %v2830 = vadd.f32 %v2549, %v2829
      %v2831 = vpop.f32.mrf.mxu0
      %v2832 = vadd.f32 %v2551, %v2831
      %2833 = vmatprep.mubr.f32.mxu0 %v294
      %2834 = vmatmul.mubr.f32.gmra.mxu0 %v293
      %v2835 = vpop.f32.mrf.mxu0
      %v2836 = vadd.f32 %v2555, %v2835
      %v2837 = vpop.f32.mrf.mxu0
      %v2838 = vadd.f32 %v2557, %v2837
      %2839 = vmatprep.mubr.f32.mxu0 %v296
      %2840 = vmatmul.mubr.f32.gmra.mxu0 %v295
      %v2841 = vpop.f32.mrf.mxu0
      %v2842 = vadd.f32 %v2561, %v2841
      %v2843 = vpop.f32.mrf.mxu0
      %v2844 = vadd.f32 %v2563, %v2843
      %2845 = vdwg.mxu0
      %2846 = vmatprep.subr.mxu0 %v916
      %2847 = vmatpush1.msra.mxu0 %v915
      %2848 = vmatprep.subr.mxu0 %v914
      %2849 = vmatpush1.msra.mxu0 %v913
      %2850 = vmatprep.subr.mxu0 %v912
      %2851 = vmatpush1.msra.mxu0 %v911
      %2852 = vmatprep.subr.mxu0 %v910
      %2853 = vmatpush1.msra.mxu0 %v909
      %2854 = vmatprep.subr.mxu0 %v908
      %2855 = vmatpush1.msra.mxu0 %v907
      %2856 = vmatprep.subr.mxu0 %v906
      %2857 = vmatpush1.msra.mxu0 %v905
      %2858 = vmatprep.subr.mxu0 %v904
      %2859 = vmatpush1.msra.mxu0 %v903
      %2860 = vmatprep.subr.mxu0 %v902
      %2861 = vmatpush1.msra.mxu0 %v901
      %2862 = vmatprep.subr.mxu0 %v900
      %2863 = vmatpush1.msra.mxu0 %v899
      %2864 = vmatprep.subr.mxu0 %v898
      %2865 = vmatpush1.msra.mxu0 %v897
      %2866 = vmatprep.subr.mxu0 %v896
      %2867 = vmatpush1.msra.mxu0 %v895
      %2868 = vmatprep.subr.mxu0 %v894
      %2869 = vmatpush1.msra.mxu0 %v893
      %2870 = vmatprep.subr.mxu0 %v892
      %2871 = vmatpush1.msra.mxu0 %v891
      %2872 = vmatprep.subr.mxu0 %v890
      %2873 = vmatpush1.msra.mxu0 %v889
      %2874 = vmatprep.subr.mxu0 %v888
      %2875 = vmatpush1.msra.mxu0 %v887
      %2876 = vmatprep.subr.mxu0 %v886
      %2877 = vmatpush1.msra.mxu0 %v885
      %2878 = vmatprep.subr.mxu0 %v948
      %2879 = vmatpush2.msra.mxu0 %v947
      %2880 = vmatprep.subr.mxu0 %v946
      %2881 = vmatpush2.msra.mxu0 %v945
      %2882 = vmatprep.subr.mxu0 %v944
      %2883 = vmatpush2.msra.mxu0 %v943
      %2884 = vmatprep.subr.mxu0 %v942
      %2885 = vmatpush2.msra.mxu0 %v941
      %2886 = vmatprep.subr.mxu0 %v940
      %2887 = vmatpush2.msra.mxu0 %v939
      %2888 = vmatprep.subr.mxu0 %v938
      %2889 = vmatpush2.msra.mxu0 %v937
      %2890 = vmatprep.subr.mxu0 %v936
      %2891 = vmatpush2.msra.mxu0 %v935
      %2892 = vmatprep.subr.mxu0 %v934
      %2893 = vmatpush2.msra.mxu0 %v933
      %2894 = vmatprep.subr.mxu0 %v932
      %2895 = vmatpush2.msra.mxu0 %v931
      %2896 = vmatprep.subr.mxu0 %v930
      %2897 = vmatpush2.msra.mxu0 %v929
      %2898 = vmatprep.subr.mxu0 %v928
      %2899 = vmatpush2.msra.mxu0 %v927
      %2900 = vmatprep.subr.mxu0 %v926
      %2901 = vmatpush2.msra.mxu0 %v925
      %2902 = vmatprep.subr.mxu0 %v924
      %2903 = vmatpush2.msra.mxu0 %v923
      %2904 = vmatprep.subr.mxu0 %v922
      %2905 = vmatpush2.msra.mxu0 %v921
      %2906 = vmatprep.subr.mxu0 %v920
      %2907 = vmatpush2.msra.mxu0 %v919
      %2908 = vmatprep.subr.mxu0 %v918
      %2909 = vmatpush2.msra.mxu0 %v917
      %2910 = vmatprep.mubr.f32.mxu0 %v385
      %2911 = vmatmul.mubr.f32.gmra.mxu0 %v382
      %v2912 = vpop.f32.mrf.mxu0
      %v2913 = vadd.f32 %v2632, %v2912
      %v2914 = vpop.f32.mrf.mxu0
      %v2915 = vadd.f32 %v2634, %v2914
      %2916 = vmatprep.mubr.f32.mxu0 %v389
      %2917 = vmatmul.mubr.f32.gmra.mxu0 %v387
      %v2918 = vpop.f32.mrf.mxu0
      %v2919 = vadd.f32 %v2638, %v2918
      %v2920 = vpop.f32.mrf.mxu0
      %v2921 = vadd.f32 %v2640, %v2920
      %2922 = vmatprep.mubr.f32.mxu0 %v393
      %2923 = vmatmul.mubr.f32.gmra.mxu0 %v391
      %v2924 = vpop.f32.mrf.mxu0
      %v2925 = vadd.f32 %v2644, %v2924
      %v2926 = vpop.f32.mrf.mxu0
      %v2927 = vadd.f32 %v2646, %v2926
      %2928 = vmatprep.mubr.f32.mxu0 %v397
      %2929 = vmatmul.mubr.f32.gmra.mxu0 %v395
      %v2930 = vpop.f32.mrf.mxu0
      %v2931 = vadd.f32 %v2650, %v2930
      %v2932 = vpop.f32.mrf.mxu0
      %v2933 = vadd.f32 %v2652, %v2932
      %2934 = vmatprep.mubr.f32.mxu0 %v401
      %2935 = vmatmul.mubr.f32.gmra.mxu0 %v399
      %v2936 = vpop.f32.mrf.mxu0
      %v2937 = vadd.f32 %v2656, %v2936
      %v2938 = vpop.f32.mrf.mxu0
      %v2939 = vadd.f32 %v2658, %v2938
      %2940 = vmatprep.mubr.f32.mxu0 %v405
      %2941 = vmatmul.mubr.f32.gmra.mxu0 %v403
      %v2942 = vpop.f32.mrf.mxu0
      %v2943 = vadd.f32 %v2662, %v2942
      %v2944 = vpop.f32.mrf.mxu0
      %v2945 = vadd.f32 %v2664, %v2944
      %2946 = vmatprep.mubr.f32.mxu0 %v409
      %2947 = vmatmul.mubr.f32.gmra.mxu0 %v407
      %v2948 = vpop.f32.mrf.mxu0
      %v2949 = vadd.f32 %v2668, %v2948
      %v2950 = vpop.f32.mrf.mxu0
      %v2951 = vadd.f32 %v2670, %v2950
      %2952 = vmatprep.mubr.f32.mxu0 %v413
      %2953 = vmatmul.mubr.f32.gmra.mxu0 %v411
      %v2954 = vpop.f32.mrf.mxu0
      %v2955 = vadd.f32 %v2674, %v2954
      %v2956 = vpop.f32.mrf.mxu0
      %v2957 = vadd.f32 %v2676, %v2956
      %2958 = vmatprep.mubr.f32.mxu0 %v417
      %2959 = vmatmul.mubr.f32.gmra.mxu0 %v415
      %v2960 = vpop.f32.mrf.mxu0
      %v2961 = vadd.f32 %v2680, %v2960
      %v2962 = vpop.f32.mrf.mxu0
      %v2963 = vadd.f32 %v2682, %v2962
      %2964 = vmatprep.mubr.f32.mxu0 %v421
      %2965 = vmatmul.mubr.f32.gmra.mxu0 %v419
      %v2966 = vpop.f32.mrf.mxu0
      %v2967 = vadd.f32 %v2686, %v2966
      %v2968 = vpop.f32.mrf.mxu0
      %v2969 = vadd.f32 %v2688, %v2968
      %2970 = vmatprep.mubr.f32.mxu0 %v425
      %2971 = vmatmul.mubr.f32.gmra.mxu0 %v423
      %v2972 = vpop.f32.mrf.mxu0
      %v2973 = vadd.f32 %v2692, %v2972
      %v2974 = vpop.f32.mrf.mxu0
      %v2975 = vadd.f32 %v2694, %v2974
      %2976 = vmatprep.mubr.f32.mxu0 %v429
      %2977 = vmatmul.mubr.f32.gmra.mxu0 %v427
      %v2978 = vpop.f32.mrf.mxu0
      %v2979 = vadd.f32 %v2698, %v2978
      %v2980 = vpop.f32.mrf.mxu0
      %v2981 = vadd.f32 %v2700, %v2980
      %2982 = vmatprep.mubr.f32.mxu0 %v433
      %2983 = vmatmul.mubr.f32.gmra.mxu0 %v431
      %v2984 = vpop.f32.mrf.mxu0
      %v2985 = vadd.f32 %v2704, %v2984
      %v2986 = vpop.f32.mrf.mxu0
      %v2987 = vadd.f32 %v2706, %v2986
      %2988 = vmatprep.mubr.f32.mxu0 %v437
      %2989 = vmatmul.mubr.f32.gmra.mxu0 %v435
      %v2990 = vpop.f32.mrf.mxu0
      %v2991 = vadd.f32 %v2710, %v2990
      %v2992 = vpop.f32.mrf.mxu0
      %v2993 = vadd.f32 %v2712, %v2992
      %2994 = vmatprep.mubr.f32.mxu0 %v441
      %2995 = vmatmul.mubr.f32.gmra.mxu0 %v439
      %v2996 = vpop.f32.mrf.mxu0
      %v2997 = vadd.f32 %v2716, %v2996
      %v2998 = vpop.f32.mrf.mxu0
      %v2999 = vadd.f32 %v2718, %v2998
      %3000 = vmatprep.mubr.f32.mxu0 %v445
      %3001 = vmatmul.mubr.f32.gmra.mxu0 %v443
      %v3002 = vpop.f32.mrf.mxu0
      %v3003 = vadd.f32 %v2722, %v3002
      %v3004 = vpop.f32.mrf.mxu0
      %v3005 = vadd.f32 %v2724, %v3004
      %3006 = vmatprep.mubr.f32.mxu0 %v449
      %3007 = vmatmul.mubr.f32.gmra.mxu0 %v447
      %v3008 = vpop.f32.mrf.mxu0
      %v3009 = vadd.f32 %v2728, %v3008
      %v3010 = vpop.f32.mrf.mxu0
      %v3011 = vadd.f32 %v2730, %v3010
      %3012 = vmatprep.mubr.f32.mxu0 %v453
      %3013 = vmatmul.mubr.f32.gmra.mxu0 %v451
      %v3014 = vpop.f32.mrf.mxu0
      %v3015 = vadd.f32 %v2734, %v3014
      %v3016 = vpop.f32.mrf.mxu0
      %v3017 = vadd.f32 %v2736, %v3016
      %3018 = vmatprep.mubr.f32.mxu0 %v457
      %3019 = vmatmul.mubr.f32.gmra.mxu0 %v455
      %v3020 = vpop.f32.mrf.mxu0
      %v3021 = vadd.f32 %v2740, %v3020
      %v3022 = vpop.f32.mrf.mxu0
      %v3023 = vadd.f32 %v2742, %v3022
      %3024 = vmatprep.mubr.f32.mxu0 %v461
      %3025 = vmatmul.mubr.f32.gmra.mxu0 %v459
      %v3026 = vpop.f32.mrf.mxu0
      %v3027 = vadd.f32 %v2746, %v3026
      %v3028 = vpop.f32.mrf.mxu0
      %v3029 = vadd.f32 %v2748, %v3028
      %3030 = vmatprep.mubr.f32.mxu0 %v465
      %3031 = vmatmul.mubr.f32.gmra.mxu0 %v463
      %v3032 = vpop.f32.mrf.mxu0
      %v3033 = vadd.f32 %v2752, %v3032
      %v3034 = vpop.f32.mrf.mxu0
      %v3035 = vadd.f32 %v2754, %v3034
      %3036 = vmatprep.mubr.f32.mxu0 %v469
      %3037 = vmatmul.mubr.f32.gmra.mxu0 %v467
      %v3038 = vpop.f32.mrf.mxu0
      %v3039 = vadd.f32 %v2758, %v3038
      %v3040 = vpop.f32.mrf.mxu0
      %v3041 = vadd.f32 %v2760, %v3040
      %3042 = vmatprep.mubr.f32.mxu0 %v473
      %3043 = vmatmul.mubr.f32.gmra.mxu0 %v471
      %v3044 = vpop.f32.mrf.mxu0
      %v3045 = vadd.f32 %v2764, %v3044
      %v3046 = vpop.f32.mrf.mxu0
      %v3047 = vadd.f32 %v2766, %v3046
      %3048 = vmatprep.mubr.f32.mxu0 %v477
      %3049 = vmatmul.mubr.f32.gmra.mxu0 %v475
      %v3050 = vpop.f32.mrf.mxu0
      %v3051 = vadd.f32 %v2770, %v3050
      %v3052 = vpop.f32.mrf.mxu0
      %v3053 = vadd.f32 %v2772, %v3052
      %3054 = vmatprep.mubr.f32.mxu0 %v481
      %3055 = vmatmul.mubr.f32.gmra.mxu0 %v479
      %v3056 = vpop.f32.mrf.mxu0
      %v3057 = vadd.f32 %v2776, %v3056
      %v3058 = vpop.f32.mrf.mxu0
      %v3059 = vadd.f32 %v2778, %v3058
      %3060 = vmatprep.mubr.f32.mxu0 %v485
      %3061 = vmatmul.mubr.f32.gmra.mxu0 %v483
      %v3062 = vpop.f32.mrf.mxu0
      %v3063 = vadd.f32 %v2782, %v3062
      %v3064 = vpop.f32.mrf.mxu0
      %v3065 = vadd.f32 %v2784, %v3064
      %3066 = vmatprep.mubr.f32.mxu0 %v489
      %3067 = vmatmul.mubr.f32.gmra.mxu0 %v487
      %v3068 = vpop.f32.mrf.mxu0
      %v3069 = vadd.f32 %v2788, %v3068
      %v3070 = vpop.f32.mrf.mxu0
      %v3071 = vadd.f32 %v2790, %v3070
      %3072 = vmatprep.mubr.f32.mxu0 %v493
      %3073 = vmatmul.mubr.f32.gmra.mxu0 %v491
      %v3074 = vpop.f32.mrf.mxu0
      %v3075 = vadd.f32 %v2794, %v3074
      %v3076 = vpop.f32.mrf.mxu0
      %v3077 = vadd.f32 %v2796, %v3076
      %3078 = vmatprep.mubr.f32.mxu0 %v497
      %3079 = vmatmul.mubr.f32.gmra.mxu0 %v495
      %v3080 = vpop.f32.mrf.mxu0
      %v3081 = vadd.f32 %v2800, %v3080
      %v3082 = vpop.f32.mrf.mxu0
      %v3083 = vadd.f32 %v2802, %v3082
      %3084 = vmatprep.mubr.f32.mxu0 %v501
      %3085 = vmatmul.mubr.f32.gmra.mxu0 %v499
      %v3086 = vpop.f32.mrf.mxu0
      %v3087 = vadd.f32 %v2806, %v3086
      %v3088 = vpop.f32.mrf.mxu0
      %v3089 = vadd.f32 %v2808, %v3088
      %3090 = vmatprep.mubr.f32.mxu0 %v505
      %3091 = vmatmul.mubr.f32.gmra.mxu0 %v503
      %v3092 = vpop.f32.mrf.mxu0
      %v3093 = vadd.f32 %v2812, %v3092
      %v3094 = vpop.f32.mrf.mxu0
      %v3095 = vadd.f32 %v2814, %v3094
      %3096 = vmatprep.mubr.f32.mxu0 %v509
      %3097 = vmatmul.mubr.f32.gmra.mxu0 %v507
      %v3098 = vpop.f32.mrf.mxu0
      %v3099 = vadd.f32 %v2818, %v3098
      %v3100 = vpop.f32.mrf.mxu0
      %v3101 = vadd.f32 %v2820, %v3100
      %3102 = vmatprep.mubr.f32.mxu0 %v513
      %3103 = vmatmul.mubr.f32.gmra.mxu0 %v511
      %v3104 = vpop.f32.mrf.mxu0
      %v3105 = vadd.f32 %v2824, %v3104
      %v3106 = vpop.f32.mrf.mxu0
      %v3107 = vadd.f32 %v2826, %v3106
      %3108 = vmatprep.mubr.f32.mxu0 %v517
      %3109 = vmatmul.mubr.f32.gmra.mxu0 %v515
      %v3110 = vpop.f32.mrf.mxu0
      %v3111 = vadd.f32 %v2830, %v3110
      %v3112 = vpop.f32.mrf.mxu0
      %v3113 = vadd.f32 %v2832, %v3112
      %3114 = vmatprep.mubr.f32.mxu0 %v521
      %3115 = vmatmul.mubr.f32.gmra.mxu0 %v519
      %v3116 = vpop.f32.mrf.mxu0
      %v3117 = vadd.f32 %v2836, %v3116
      %v3118 = vpop.f32.mrf.mxu0
      %v3119 = vadd.f32 %v2838, %v3118
      %3120 = vmatprep.mubr.f32.mxu0 %v525
      %3121 = vmatmul.mubr.f32.gmra.mxu0 %v523
      %v3122 = vpop.f32.mrf.mxu0
      %v3123 = vadd.f32 %v2842, %v3122
      %v3124 = vpop.f32.mrf.mxu0
      %v3125 = vadd.f32 %v2844, %v3124
      %3126 = vdwg.mxu0
      %3127 = vmatprep.subr.mxu0 %v980
      %3128 = vmatpush1.msra.mxu0 %v979
      %3129 = vmatprep.subr.mxu0 %v978
      %3130 = vmatpush1.msra.mxu0 %v977
      %3131 = vmatprep.subr.mxu0 %v976
      %3132 = vmatpush1.msra.mxu0 %v975
      %3133 = vmatprep.subr.mxu0 %v974
      %3134 = vmatpush1.msra.mxu0 %v973
      %3135 = vmatprep.subr.mxu0 %v972
      %3136 = vmatpush1.msra.mxu0 %v971
      %3137 = vmatprep.subr.mxu0 %v970
      %3138 = vmatpush1.msra.mxu0 %v969
      %3139 = vmatprep.subr.mxu0 %v968
      %3140 = vmatpush1.msra.mxu0 %v967
      %3141 = vmatprep.subr.mxu0 %v966
      %3142 = vmatpush1.msra.mxu0 %v965
      %3143 = vmatprep.subr.mxu0 %v964
      %3144 = vmatpush1.msra.mxu0 %v963
      %3145 = vmatprep.subr.mxu0 %v962
      %3146 = vmatpush1.msra.mxu0 %v961
      %3147 = vmatprep.subr.mxu0 %v960
      %3148 = vmatpush1.msra.mxu0 %v959
      %3149 = vmatprep.subr.mxu0 %v958
      %3150 = vmatpush1.msra.mxu0 %v957
      %3151 = vmatprep.subr.mxu0 %v956
      %3152 = vmatpush1.msra.mxu0 %v955
      %3153 = vmatprep.subr.mxu0 %v954
      %3154 = vmatpush1.msra.mxu0 %v953
      %3155 = vmatprep.subr.mxu0 %v952
      %3156 = vmatpush1.msra.mxu0 %v951
      %3157 = vmatprep.subr.mxu0 %v950
      %3158 = vmatpush1.msra.mxu0 %v949
      %3159 = vmatprep.subr.mxu0 %v1012
      %3160 = vmatpush2.msra.mxu0 %v1011
      %3161 = vmatprep.subr.mxu0 %v1010
      %3162 = vmatpush2.msra.mxu0 %v1009
      %3163 = vmatprep.subr.mxu0 %v1008
      %3164 = vmatpush2.msra.mxu0 %v1007
      %3165 = vmatprep.subr.mxu0 %v1006
      %3166 = vmatpush2.msra.mxu0 %v1005
      %3167 = vmatprep.subr.mxu0 %v1004
      %3168 = vmatpush2.msra.mxu0 %v1003
      %3169 = vmatprep.subr.mxu0 %v1002
      %3170 = vmatpush2.msra.mxu0 %v1001
      %3171 = vmatprep.subr.mxu0 %v1000
      %3172 = vmatpush2.msra.mxu0 %v999
      %3173 = vmatprep.subr.mxu0 %v998
      %3174 = vmatpush2.msra.mxu0 %v997
      %3175 = vmatprep.subr.mxu0 %v996
      %3176 = vmatpush2.msra.mxu0 %v995
      %3177 = vmatprep.subr.mxu0 %v994
      %3178 = vmatpush2.msra.mxu0 %v993
      %3179 = vmatprep.subr.mxu0 %v992
      %3180 = vmatpush2.msra.mxu0 %v991
      %3181 = vmatprep.subr.mxu0 %v990
      %3182 = vmatpush2.msra.mxu0 %v989
      %3183 = vmatprep.subr.mxu0 %v988
      %3184 = vmatpush2.msra.mxu0 %v987
      %3185 = vmatprep.subr.mxu0 %v986
      %3186 = vmatpush2.msra.mxu0 %v985
      %3187 = vmatprep.subr.mxu0 %v984
      %3188 = vmatpush2.msra.mxu0 %v983
      %3189 = vmatprep.subr.mxu0 %v982
      %3190 = vmatpush2.msra.mxu0 %v981
      %3191 = vmatprep.mubr.f32.mxu0 %v608
      %3192 = vmatmul.mubr.f32.gmra.mxu0 %v605
      %v3193 = vpop.f32.mrf.mxu0
      %v3194 = vadd.f32 %v2913, %v3193
      %v3195 = vpop.f32.mrf.mxu0
      %v3196 = vadd.f32 %v2915, %v3195
      %3197 = vmatprep.mubr.f32.mxu0 %v612
      %3198 = vmatmul.mubr.f32.gmra.mxu0 %v610
      %v3199 = vpop.f32.mrf.mxu0
      %v3200 = vadd.f32 %v2919, %v3199
      %v3201 = vpop.f32.mrf.mxu0
      %v3202 = vadd.f32 %v2921, %v3201
      %3203 = vmatprep.mubr.f32.mxu0 %v616
      %3204 = vmatmul.mubr.f32.gmra.mxu0 %v614
      %v3205 = vpop.f32.mrf.mxu0
      %v3206 = vadd.f32 %v2925, %v3205
      %v3207 = vpop.f32.mrf.mxu0
      %v3208 = vadd.f32 %v2927, %v3207
      %3209 = vmatprep.mubr.f32.mxu0 %v620
      %3210 = vmatmul.mubr.f32.gmra.mxu0 %v618
      %v3211 = vpop.f32.mrf.mxu0
      %v3212 = vadd.f32 %v2931, %v3211
      %v3213 = vpop.f32.mrf.mxu0
      %v3214 = vadd.f32 %v2933, %v3213
      %3215 = vmatprep.mubr.f32.mxu0 %v624
      %3216 = vmatmul.mubr.f32.gmra.mxu0 %v622
      %v3217 = vpop.f32.mrf.mxu0
      %v3218 = vadd.f32 %v2937, %v3217
      %v3219 = vpop.f32.mrf.mxu0
      %v3220 = vadd.f32 %v2939, %v3219
      %3221 = vmatprep.mubr.f32.mxu0 %v628
      %3222 = vmatmul.mubr.f32.gmra.mxu0 %v626
      %v3223 = vpop.f32.mrf.mxu0
      %v3224 = vadd.f32 %v2943, %v3223
      %v3225 = vpop.f32.mrf.mxu0
      %v3226 = vadd.f32 %v2945, %v3225
      %3227 = vmatprep.mubr.f32.mxu0 %v632
      %3228 = vmatmul.mubr.f32.gmra.mxu0 %v630
      %v3229 = vpop.f32.mrf.mxu0
      %v3230 = vadd.f32 %v2949, %v3229
      %v3231 = vpop.f32.mrf.mxu0
      %v3232 = vadd.f32 %v2951, %v3231
      %3233 = vmatprep.mubr.f32.mxu0 %v636
      %3234 = vmatmul.mubr.f32.gmra.mxu0 %v634
      %v3235 = vpop.f32.mrf.mxu0
      %v3236 = vadd.f32 %v2955, %v3235
      %v3237 = vpop.f32.mrf.mxu0
      %v3238 = vadd.f32 %v2957, %v3237
      %3239 = vmatprep.mubr.f32.mxu0 %v640
      %3240 = vmatmul.mubr.f32.gmra.mxu0 %v638
      %v3241 = vpop.f32.mrf.mxu0
      %v3242 = vadd.f32 %v2961, %v3241
      %v3243 = vpop.f32.mrf.mxu0
      %v3244 = vadd.f32 %v2963, %v3243
      %3245 = vmatprep.mubr.f32.mxu0 %v644
      %3246 = vmatmul.mubr.f32.gmra.mxu0 %v642
      %v3247 = vpop.f32.mrf.mxu0
      %v3248 = vadd.f32 %v2967, %v3247
      %v3249 = vpop.f32.mrf.mxu0
      %v3250 = vadd.f32 %v2969, %v3249
      %3251 = vmatprep.mubr.f32.mxu0 %v648
      %3252 = vmatmul.mubr.f32.gmra.mxu0 %v646
      %v3253 = vpop.f32.mrf.mxu0
      %v3254 = vadd.f32 %v2973, %v3253
      %v3255 = vpop.f32.mrf.mxu0
      %v3256 = vadd.f32 %v2975, %v3255
      %3257 = vmatprep.mubr.f32.mxu0 %v652
      %3258 = vmatmul.mubr.f32.gmra.mxu0 %v650
      %v3259 = vpop.f32.mrf.mxu0
      %v3260 = vadd.f32 %v2979, %v3259
      %v3261 = vpop.f32.mrf.mxu0
      %v3262 = vadd.f32 %v2981, %v3261
      %3263 = vmatprep.mubr.f32.mxu0 %v656
      %3264 = vmatmul.mubr.f32.gmra.mxu0 %v654
      %v3265 = vpop.f32.mrf.mxu0
      %v3266 = vadd.f32 %v2985, %v3265
      %v3267 = vpop.f32.mrf.mxu0
      %v3268 = vadd.f32 %v2987, %v3267
      %3269 = vmatprep.mubr.f32.mxu0 %v660
      %3270 = vmatmul.mubr.f32.gmra.mxu0 %v658
      %v3271 = vpop.f32.mrf.mxu0
      %v3272 = vadd.f32 %v2991, %v3271
      %v3273 = vpop.f32.mrf.mxu0
      %v3274 = vadd.f32 %v2993, %v3273
      %3275 = vmatprep.mubr.f32.mxu0 %v664
      %3276 = vmatmul.mubr.f32.gmra.mxu0 %v662
      %v3277 = vpop.f32.mrf.mxu0
      %v3278 = vadd.f32 %v2997, %v3277
      %v3279 = vpop.f32.mrf.mxu0
      %v3280 = vadd.f32 %v2999, %v3279
      %3281 = vmatprep.mubr.f32.mxu0 %v668
      %3282 = vmatmul.mubr.f32.gmra.mxu0 %v666
      %v3283 = vpop.f32.mrf.mxu0
      %v3284 = vadd.f32 %v3003, %v3283
      %v3285 = vpop.f32.mrf.mxu0
      %v3286 = vadd.f32 %v3005, %v3285
      %3287 = vmatprep.mubr.f32.mxu0 %v672
      %3288 = vmatmul.mubr.f32.gmra.mxu0 %v670
      %v3289 = vpop.f32.mrf.mxu0
      %v3290 = vadd.f32 %v3009, %v3289
      %v3291 = vpop.f32.mrf.mxu0
      %v3292 = vadd.f32 %v3011, %v3291
      %3293 = vmatprep.mubr.f32.mxu0 %v676
      %3294 = vmatmul.mubr.f32.gmra.mxu0 %v674
      %v3295 = vpop.f32.mrf.mxu0
      %v3296 = vadd.f32 %v3015, %v3295
      %v3297 = vpop.f32.mrf.mxu0
      %v3298 = vadd.f32 %v3017, %v3297
      %3299 = vmatprep.mubr.f32.mxu0 %v680
      %3300 = vmatmul.mubr.f32.gmra.mxu0 %v678
      %v3301 = vpop.f32.mrf.mxu0
      %v3302 = vadd.f32 %v3021, %v3301
      %v3303 = vpop.f32.mrf.mxu0
      %v3304 = vadd.f32 %v3023, %v3303
      %3305 = vmatprep.mubr.f32.mxu0 %v684
      %3306 = vmatmul.mubr.f32.gmra.mxu0 %v682
      %v3307 = vpop.f32.mrf.mxu0
      %v3308 = vadd.f32 %v3027, %v3307
      %v3309 = vpop.f32.mrf.mxu0
      %v3310 = vadd.f32 %v3029, %v3309
      %3311 = vmatprep.mubr.f32.mxu0 %v688
      %3312 = vmatmul.mubr.f32.gmra.mxu0 %v686
      %v3313 = vpop.f32.mrf.mxu0
      %v3314 = vadd.f32 %v3033, %v3313
      %v3315 = vpop.f32.mrf.mxu0
      %v3316 = vadd.f32 %v3035, %v3315
      %3317 = vmatprep.mubr.f32.mxu0 %v692
      %3318 = vmatmul.mubr.f32.gmra.mxu0 %v690
      %v3319 = vpop.f32.mrf.mxu0
      %v3320 = vadd.f32 %v3039, %v3319
      %v3321 = vpop.f32.mrf.mxu0
      %v3322 = vadd.f32 %v3041, %v3321
      %3323 = vmatprep.mubr.f32.mxu0 %v696
      %3324 = vmatmul.mubr.f32.gmra.mxu0 %v694
      %v3325 = vpop.f32.mrf.mxu0
      %v3326 = vadd.f32 %v3045, %v3325
      %v3327 = vpop.f32.mrf.mxu0
      %v3328 = vadd.f32 %v3047, %v3327
      %3329 = vmatprep.mubr.f32.mxu0 %v700
      %3330 = vmatmul.mubr.f32.gmra.mxu0 %v698
      %v3331 = vpop.f32.mrf.mxu0
      %v3332 = vadd.f32 %v3051, %v3331
      %v3333 = vpop.f32.mrf.mxu0
      %v3334 = vadd.f32 %v3053, %v3333
      %3335 = vmatprep.mubr.f32.mxu0 %v704
      %3336 = vmatmul.mubr.f32.gmra.mxu0 %v702
      %v3337 = vpop.f32.mrf.mxu0
      %v3338 = vadd.f32 %v3057, %v3337
      %v3339 = vpop.f32.mrf.mxu0
      %v3340 = vadd.f32 %v3059, %v3339
      %3341 = vmatprep.mubr.f32.mxu0 %v708
      %3342 = vmatmul.mubr.f32.gmra.mxu0 %v706
      %v3343 = vpop.f32.mrf.mxu0
      %v3344 = vadd.f32 %v3063, %v3343
      %v3345 = vpop.f32.mrf.mxu0
      %v3346 = vadd.f32 %v3065, %v3345
      %3347 = vmatprep.mubr.f32.mxu0 %v712
      %3348 = vmatmul.mubr.f32.gmra.mxu0 %v710
      %v3349 = vpop.f32.mrf.mxu0
      %v3350 = vadd.f32 %v3069, %v3349
      %v3351 = vpop.f32.mrf.mxu0
      %v3352 = vadd.f32 %v3071, %v3351
      %3353 = vmatprep.mubr.f32.mxu0 %v716
      %3354 = vmatmul.mubr.f32.gmra.mxu0 %v714
      %v3355 = vpop.f32.mrf.mxu0
      %v3356 = vadd.f32 %v3075, %v3355
      %v3357 = vpop.f32.mrf.mxu0
      %v3358 = vadd.f32 %v3077, %v3357
      %3359 = vmatprep.mubr.f32.mxu0 %v720
      %3360 = vmatmul.mubr.f32.gmra.mxu0 %v718
      %v3361 = vpop.f32.mrf.mxu0
      %v3362 = vadd.f32 %v3081, %v3361
      %v3363 = vpop.f32.mrf.mxu0
      %v3364 = vadd.f32 %v3083, %v3363
      %3365 = vmatprep.mubr.f32.mxu0 %v724
      %3366 = vmatmul.mubr.f32.gmra.mxu0 %v722
      %v3367 = vpop.f32.mrf.mxu0
      %v3368 = vadd.f32 %v3087, %v3367
      %v3369 = vpop.f32.mrf.mxu0
      %v3370 = vadd.f32 %v3089, %v3369
      %3371 = vmatprep.mubr.f32.mxu0 %v728
      %3372 = vmatmul.mubr.f32.gmra.mxu0 %v726
      %v3373 = vpop.f32.mrf.mxu0
      %v3374 = vadd.f32 %v3093, %v3373
      %v3375 = vpop.f32.mrf.mxu0
      %v3376 = vadd.f32 %v3095, %v3375
      %3377 = vmatprep.mubr.f32.mxu0 %v732
      %3378 = vmatmul.mubr.f32.gmra.mxu0 %v730
      %v3379 = vpop.f32.mrf.mxu0
      %v3380 = vadd.f32 %v3099, %v3379
      %v3381 = vpop.f32.mrf.mxu0
      %v3382 = vadd.f32 %v3101, %v3381
      %3383 = vmatprep.mubr.f32.mxu0 %v736
      %3384 = vmatmul.mubr.f32.gmra.mxu0 %v734
      %v3385 = vpop.f32.mrf.mxu0
      %v3386 = vadd.f32 %v3105, %v3385
      %v3387 = vpop.f32.mrf.mxu0
      %v3388 = vadd.f32 %v3107, %v3387
      %3389 = vmatprep.mubr.f32.mxu0 %v740
      %3390 = vmatmul.mubr.f32.gmra.mxu0 %v738
      %v3391 = vpop.f32.mrf.mxu0
      %v3392 = vadd.f32 %v3111, %v3391
      %v3393 = vpop.f32.mrf.mxu0
      %v3394 = vadd.f32 %v3113, %v3393
      %3395 = vmatprep.mubr.f32.mxu0 %v744
      %3396 = vmatmul.mubr.f32.gmra.mxu0 %v742
      %v3397 = vpop.f32.mrf.mxu0
      %v3398 = vadd.f32 %v3117, %v3397
      %v3399 = vpop.f32.mrf.mxu0
      %v3400 = vadd.f32 %v3119, %v3399
      %3401 = vmatprep.mubr.f32.mxu0 %v748
      %3402 = vmatmul.mubr.f32.gmra.mxu0 %v746
      %v3403 = vpop.f32.mrf.mxu0
      %v3404 = vadd.f32 %v3123, %v3403
      %v3405 = vpop.f32.mrf.mxu0
      %v3406 = vadd.f32 %v3125, %v3405
      %3407 = vdwg.mxu0
      %v3408 = vld [vmem:[%s219 + $0x40] sm:$0xf0]
      %v3409 = vld [vmem:[%s219 + $0x48] sm:$0xf0]
      %v3410 = vld [vmem:[%s219 + $0x50] sm:$0xff]
      %v3411 = vld [vmem:[%s219 + $0x58] sm:$0xff]
      %v3412 = vld [vmem:[%s219 + $0x60] sm:$0xff]
      %v3413 = vld [vmem:[%s219 + $0x68] sm:$0xff]
      %v3414 = vld [vmem:[%s219 + $0x70] sm:$0xff]
      %v3415 = vld [vmem:[%s219 + $0x78] sm:$0xff]
      %v3416 = vld [vmem:[%s219 + $0x80] sm:$0xff]
      %v3417 = vld [vmem:[%s219 + $0x88] sm:$0xff]
      %v3418 = vld [vmem:[%s219 + $0x90] sm:$0xff]
      %v3419 = vld [vmem:[%s219 + $0x98] sm:$0xff]
      %v3420 = vld [vmem:[%s219 + $0xa0] sm:$0xff]
      %v3421 = vld [vmem:[%s219 + $0xa8] sm:$0xff]
      %v3422 = vld [vmem:[%s219 + $0xb0] sm:$0xff]
      %v3423 = vld [vmem:[%s219 + $0xb8] sm:$0xff]
      %v3424 = vld [vmem:[%s219 + $0xc0] sm:$0xff]
      %v3425 = vld [vmem:[%s219 + $0xc8] sm:$0xff]
      %v3426 = vld [vmem:[%s219 + $0xd0] sm:$0xff]
      %v3427 = vld [vmem:[%s219 + $0xd8] sm:$0xff]
      %v3428 = vld [vmem:[%s219 + $0xe0] sm:$0xff]
      %v3429 = vld [vmem:[%s219 + $0xe8] sm:$0xff]
      %v3430 = vld [vmem:[%s219 + $0xf0] sm:$0xff]
      %v3431 = vld [vmem:[%s219 + $0xf8] sm:$0xff]
      %v3432 = vld [vmem:[%s219 + $0x100] sm:$0xff]
      %v3433 = vld [vmem:[%s219 + $0x108] sm:$0xff]
      %v3434 = vld [vmem:[%s219 + $0x110] sm:$0xff]
      %v3435 = vld [vmem:[%s219 + $0x118] sm:$0xff]
      %v3436 = vld [vmem:[%s219 + $0x120] sm:$0xff]
      %v3437 = vld [vmem:[%s219 + $0x128] sm:$0xff]
      %v3438 = vld [vmem:[%s219 + $0x130] sm:$0xff]
      %v3439 = vld [vmem:[%s219 + $0x138] sm:$0xff]
      %v3440 = vld [vmem:[%s219 + $0x140] sm:$0xff]
      %v3441 = vld [vmem:[%s219 + $0x148] sm:$0xff]
      %v3442 = vld [vmem:[%s219 + $0x150] sm:$0xff]
      %v3443 = vld [vmem:[%s219 + $0x158] sm:$0xff]
      %v3444 = vld [vmem:[%s219 + $0x160] sm:$0xff]
      %v3445 = vld [vmem:[%s219 + $0x168] sm:$0xff]
      %v3446 = vld [vmem:[%s219 + $0x170] sm:$0xff]
      %v3447 = vld [vmem:[%s219 + $0x178] sm:$0xff]
      %v3448 = vld [vmem:[%s219 + $0x180] sm:$0xff]
      %v3449 = vld [vmem:[%s219 + $0x188] sm:$0xff]
      %v3450 = vld [vmem:[%s219 + $0x190] sm:$0xff]
      %v3451 = vld [vmem:[%s219 + $0x198] sm:$0xff]
      %v3452 = vld [vmem:[%s219 + $0x1a0] sm:$0xff]
      %v3453 = vld [vmem:[%s219 + $0x1a8] sm:$0xff]
      %v3454 = vld [vmem:[%s219 + $0x1b0] sm:$0xff]
      %v3455 = vld [vmem:[%s219 + $0x1b8] sm:$0xff]
      %v3456 = vld [vmem:[%s219 + $0x1c0] sm:$0xff]
      %v3457 = vld [vmem:[%s219 + $0x1c8] sm:$0xff]
      %v3458 = vld [vmem:[%s219 + $0x1d0] sm:$0xff]
      %v3459 = vld [vmem:[%s219 + $0x1d8] sm:$0xff]
      %v3460 = vld [vmem:[%s219 + $0x1e0] sm:$0xff]
      %v3461 = vld [vmem:[%s219 + $0x1e8] sm:$0xff]
      %v3462 = vld [vmem:[%s219 + $0x1f0] sm:$0xff]
      %v3463 = vld [vmem:[%s219 + $0x1f8] sm:$0xff]
      %v3464 = vld [vmem:[%s219 + $0x200] sm:$0xff]
      %v3465 = vld [vmem:[%s219 + $0x208] sm:$0xff]
      %v3466 = vld [vmem:[%s219 + $0x210] sm:$0xff]
      %v3467 = vld [vmem:[%s219 + $0x218] sm:$0xff]
      %v3468 = vld [vmem:[%s219 + $0x220] sm:$0xff]
      %v3469 = vld [vmem:[%s219 + $0x228] sm:$0xff]
      %v3470 = vld [vmem:[%s219 + $0x230] sm:$0xff]
      %v3471 = vld [vmem:[%s219 + $0x238] sm:$0xff]
      %v3472 = vld [vmem:[%s219 + $0x240] sm:$0xff]
      %v3473 = vld [vmem:[%s219 + $0x248] sm:$0xff]
      %v3474 = vld [vmem:[%s219 + $0x250] sm:$0xff]
      %v3475 = vld [vmem:[%s219 + $0x258] sm:$0xff]
      %v3476 = vld [vmem:[%s219 + $0x260] sm:$0xff]
      %v3477 = vld [vmem:[%s219 + $0x268] sm:$0xff]
      %v3478 = vld [vmem:[%s219 + $0x270] sm:$0xff]
      %v3479 = vld [vmem:[%s219 + $0x278] sm:$0xff]
      %v3480 = vld [vmem:[%s219 + $0x280] sm:$0xf]
      %v3481 = vld [vmem:[%s219 + $0x288] sm:$0xf]
      %v3482 = vld [vmem:[%s219 + $0x40] sm:$0xe0]
      %v3483 = vld [vmem:[%s219 + $0x48] sm:$0xe0]
      %v3484 = vld [vmem:[%s219 + $0x280] sm:$0x1f]
      %v3485 = vld [vmem:[%s219 + $0x288] sm:$0x1f]
      %v3486 = vld [vmem:[%s219 + $0x40] sm:$0xc0]
      %v3487 = vld [vmem:[%s219 + $0x48] sm:$0xc0]
      %v3488 = vld [vmem:[%s219 + $0x280] sm:$0x3f]
      %v3489 = vld [vmem:[%s219 + $0x288] sm:$0x3f]
      %v3564 = vrot.slane %v3482, 1
      %v3565 = vrot.slane %v3410, 1
      %v3566 = vsel %vm379, %v3564, %v3565
      %v3567 = vrot.slane %v3483, 1
      %v3568 = vrot.slane %v3411, 1
      %v3569 = vsel %vm379, %v3567, %v3568
      %v3570 = vrot.slane %v3412, 1
      %v3571 = vsel %vm379, %v3565, %v3570
      %v3572 = vrot.slane %v3413, 1
      %v3573 = vsel %vm379, %v3568, %v3572
      %v3574 = vrot.slane %v3414, 1
      %v3575 = vsel %vm379, %v3570, %v3574
      %v3576 = vrot.slane %v3415, 1
      %v3577 = vsel %vm379, %v3572, %v3576
      %v3578 = vrot.slane %v3416, 1
      %v3579 = vsel %vm379, %v3574, %v3578
      %v3580 = vrot.slane %v3417, 1
      %v3581 = vsel %vm379, %v3576, %v3580
      %v3582 = vrot.slane %v3418, 1
      %v3583 = vsel %vm379, %v3578, %v3582
      %v3584 = vrot.slane %v3419, 1
      %v3585 = vsel %vm379, %v3580, %v3584
      %v3586 = vrot.slane %v3420, 1
      %v3587 = vsel %vm379, %v3582, %v3586
      %v3588 = vrot.slane %v3421, 1
      %v3589 = vsel %vm379, %v3584, %v3588
      %v3590 = vrot.slane %v3422, 1
      %v3591 = vsel %vm379, %v3586, %v3590
      %v3592 = vrot.slane %v3423, 1
      %v3593 = vsel %vm379, %v3588, %v3592
      %v3594 = vrot.slane %v3424, 1
      %v3595 = vsel %vm379, %v3590, %v3594
      %v3596 = vrot.slane %v3425, 1
      %v3597 = vsel %vm379, %v3592, %v3596
      %v3598 = vrot.slane %v3426, 1
      %v3599 = vsel %vm379, %v3594, %v3598
      %v3600 = vrot.slane %v3427, 1
      %v3601 = vsel %vm379, %v3596, %v3600
      %v3602 = vrot.slane %v3428, 1
      %v3603 = vsel %vm379, %v3598, %v3602
      %v3604 = vrot.slane %v3429, 1
      %v3605 = vsel %vm379, %v3600, %v3604
      %v3606 = vrot.slane %v3430, 1
      %v3607 = vsel %vm379, %v3602, %v3606
      %v3608 = vrot.slane %v3431, 1
      %v3609 = vsel %vm379, %v3604, %v3608
      %v3610 = vrot.slane %v3432, 1
      %v3611 = vsel %vm379, %v3606, %v3610
      %v3612 = vrot.slane %v3433, 1
      %v3613 = vsel %vm379, %v3608, %v3612
      %v3614 = vrot.slane %v3434, 1
      %v3615 = vsel %vm379, %v3610, %v3614
      %v3616 = vrot.slane %v3435, 1
      %v3617 = vsel %vm379, %v3612, %v3616
      %v3618 = vrot.slane %v3436, 1
      %v3619 = vsel %vm379, %v3614, %v3618
      %v3620 = vrot.slane %v3437, 1
      %v3621 = vsel %vm379, %v3616, %v3620
      %v3622 = vrot.slane %v3438, 1
      %v3623 = vsel %vm379, %v3618, %v3622
      %v3624 = vrot.slane %v3439, 1
      %v3625 = vsel %vm379, %v3620, %v3624
      %v3626 = vrot.slane %v3440, 1
      %v3627 = vsel %vm379, %v3622, %v3626
      %v3628 = vrot.slane %v3441, 1
      %v3629 = vsel %vm379, %v3624, %v3628
      %v3630 = vrot.slane %v3442, 1
      %v3631 = vsel %vm379, %v3626, %v3630
      %v3632 = vrot.slane %v3443, 1
      %v3633 = vsel %vm379, %v3628, %v3632
      %v3634 = vrot.slane %v3444, 1
      %v3635 = vsel %vm379, %v3630, %v3634
      %v3636 = vrot.slane %v3445, 1
      %v3637 = vsel %vm379, %v3632, %v3636
      %v3638 = vrot.slane %v3446, 1
      %v3639 = vsel %vm379, %v3634, %v3638
      %v3640 = vrot.slane %v3447, 1
      %v3641 = vsel %vm379, %v3636, %v3640
      %v3642 = vrot.slane %v3448, 1
      %v3643 = vsel %vm379, %v3638, %v3642
      %v3644 = vrot.slane %v3449, 1
      %v3645 = vsel %vm379, %v3640, %v3644
      %v3646 = vrot.slane %v3450, 1
      %v3647 = vsel %vm379, %v3642, %v3646
      %v3648 = vrot.slane %v3451, 1
      %v3649 = vsel %vm379, %v3644, %v3648
      %v3650 = vrot.slane %v3452, 1
      %v3651 = vsel %vm379, %v3646, %v3650
      %v3652 = vrot.slane %v3453, 1
      %v3653 = vsel %vm379, %v3648, %v3652
      %v3654 = vrot.slane %v3454, 1
      %v3655 = vsel %vm379, %v3650, %v3654
      %v3656 = vrot.slane %v3455, 1
      %v3657 = vsel %vm379, %v3652, %v3656
      %v3658 = vrot.slane %v3456, 1
      %v3659 = vsel %vm379, %v3654, %v3658
      %v3660 = vrot.slane %v3457, 1
      %v3661 = vsel %vm379, %v3656, %v3660
      %v3662 = vrot.slane %v3458, 1
      %v3663 = vsel %vm379, %v3658, %v3662
      %v3664 = vrot.slane %v3459, 1
      %v3665 = vsel %vm379, %v3660, %v3664
      %v3666 = vrot.slane %v3460, 1
      %v3667 = vsel %vm379, %v3662, %v3666
      %v3668 = vrot.slane %v3461, 1
      %v3669 = vsel %vm379, %v3664, %v3668
      %v3670 = vrot.slane %v3462, 1
      %v3671 = vsel %vm379, %v3666, %v3670
      %v3672 = vrot.slane %v3463, 1
      %v3673 = vsel %vm379, %v3668, %v3672
      %v3674 = vrot.slane %v3464, 1
      %v3675 = vsel %vm379, %v3670, %v3674
      %v3676 = vrot.slane %v3465, 1
      %v3677 = vsel %vm379, %v3672, %v3676
      %v3678 = vrot.slane %v3466, 1
      %v3679 = vsel %vm379, %v3674, %v3678
      %v3680 = vrot.slane %v3467, 1
      %v3681 = vsel %vm379, %v3676, %v3680
      %v3682 = vrot.slane %v3468, 1
      %v3683 = vsel %vm379, %v3678, %v3682
      %v3684 = vrot.slane %v3469, 1
      %v3685 = vsel %vm379, %v3680, %v3684
      %v3686 = vrot.slane %v3470, 1
      %v3687 = vsel %vm379, %v3682, %v3686
      %v3688 = vrot.slane %v3471, 1
      %v3689 = vsel %vm379, %v3684, %v3688
      %v3690 = vrot.slane %v3472, 1
      %v3691 = vsel %vm379, %v3686, %v3690
      %v3692 = vrot.slane %v3473, 1
      %v3693 = vsel %vm379, %v3688, %v3692
      %v3694 = vrot.slane %v3474, 1
      %v3695 = vsel %vm379, %v3690, %v3694
      %v3696 = vrot.slane %v3475, 1
      %v3697 = vsel %vm379, %v3692, %v3696
      %v3698 = vrot.slane %v3476, 1
      %v3699 = vsel %vm379, %v3694, %v3698
      %v3700 = vrot.slane %v3477, 1
      %v3701 = vsel %vm379, %v3696, %v3700
      %v3702 = vrot.slane %v3478, 1
      %v3703 = vsel %vm379, %v3698, %v3702
      %v3704 = vrot.slane %v3479, 1
      %v3705 = vsel %vm379, %v3700, %v3704
      %v3706 = vrot.slane %v3484, 1
      %v3707 = vsel %vm379, %v3702, %v3706
      %v3708 = vrot.slane %v3485, 1
      %v3709 = vsel %vm379, %v3704, %v3708
      %v3714 = vrot.slane %v3486, 2
      %v3715 = vrot.slane %v3410, 2
      %v3716 = vsel %vm602, %v3714, %v3715
      %v3717 = vrot.slane %v3487, 2
      %v3718 = vrot.slane %v3411, 2
      %v3719 = vsel %vm602, %v3717, %v3718
      %v3720 = vrot.slane %v3412, 2
      %v3721 = vsel %vm602, %v3715, %v3720
      %v3722 = vrot.slane %v3413, 2
      %v3723 = vsel %vm602, %v3718, %v3722
      %v3724 = vrot.slane %v3414, 2
      %v3725 = vsel %vm602, %v3720, %v3724
      %v3726 = vrot.slane %v3415, 2
      %v3727 = vsel %vm602, %v3722, %v3726
      %v3728 = vrot.slane %v3416, 2
      %v3729 = vsel %vm602, %v3724, %v3728
      %v3730 = vrot.slane %v3417, 2
      %v3731 = vsel %vm602, %v3726, %v3730
      %v3732 = vrot.slane %v3418, 2
      %v3733 = vsel %vm602, %v3728, %v3732
      %v3734 = vrot.slane %v3419, 2
      %v3735 = vsel %vm602, %v3730, %v3734
      %v3736 = vrot.slane %v3420, 2
      %v3737 = vsel %vm602, %v3732, %v3736
      %v3738 = vrot.slane %v3421, 2
      %v3739 = vsel %vm602, %v3734, %v3738
      %v3740 = vrot.slane %v3422, 2
      %v3741 = vsel %vm602, %v3736, %v3740
      %v3742 = vrot.slane %v3423, 2
      %v3743 = vsel %vm602, %v3738, %v3742
      %v3744 = vrot.slane %v3424, 2
      %v3745 = vsel %vm602, %v3740, %v3744
      %v3746 = vrot.slane %v3425, 2
      %v3747 = vsel %vm602, %v3742, %v3746
      %v3748 = vrot.slane %v3426, 2
      %v3749 = vsel %vm602, %v3744, %v3748
      %v3750 = vrot.slane %v3427, 2
      %v3751 = vsel %vm602, %v3746, %v3750
      %v3752 = vrot.slane %v3428, 2
      %v3753 = vsel %vm602, %v3748, %v3752
      %v3754 = vrot.slane %v3429, 2
      %v3755 = vsel %vm602, %v3750, %v3754
      %v3756 = vrot.slane %v3430, 2
      %v3757 = vsel %vm602, %v3752, %v3756
      %v3758 = vrot.slane %v3431, 2
      %v3759 = vsel %vm602, %v3754, %v3758
      %v3760 = vrot.slane %v3432, 2
      %v3761 = vsel %vm602, %v3756, %v3760
      %v3762 = vrot.slane %v3433, 2
      %v3763 = vsel %vm602, %v3758, %v3762
      %v3764 = vrot.slane %v3434, 2
      %v3765 = vsel %vm602, %v3760, %v3764
      %v3766 = vrot.slane %v3435, 2
      %v3767 = vsel %vm602, %v3762, %v3766
      %v3768 = vrot.slane %v3436, 2
      %v3769 = vsel %vm602, %v3764, %v3768
      %v3770 = vrot.slane %v3437, 2
      %v3771 = vsel %vm602, %v3766, %v3770
      %v3772 = vrot.slane %v3438, 2
      %v3773 = vsel %vm602, %v3768, %v3772
      %v3774 = vrot.slane %v3439, 2
      %v3775 = vsel %vm602, %v3770, %v3774
      %v3776 = vrot.slane %v3440, 2
      %v3777 = vsel %vm602, %v3772, %v3776
      %v3778 = vrot.slane %v3441, 2
      %v3779 = vsel %vm602, %v3774, %v3778
      %v3780 = vrot.slane %v3442, 2
      %v3781 = vsel %vm602, %v3776, %v3780
      %v3782 = vrot.slane %v3443, 2
      %v3783 = vsel %vm602, %v3778, %v3782
      %v3784 = vrot.slane %v3444, 2
      %v3785 = vsel %vm602, %v3780, %v3784
      %v3786 = vrot.slane %v3445, 2
      %v3787 = vsel %vm602, %v3782, %v3786
      %v3788 = vrot.slane %v3446, 2
      %v3789 = vsel %vm602, %v3784, %v3788
      %v3790 = vrot.slane %v3447, 2
      %v3791 = vsel %vm602, %v3786, %v3790
      %v3792 = vrot.slane %v3448, 2
      %v3793 = vsel %vm602, %v3788, %v3792
      %v3794 = vrot.slane %v3449, 2
      %v3795 = vsel %vm602, %v3790, %v3794
      %v3796 = vrot.slane %v3450, 2
      %v3797 = vsel %vm602, %v3792, %v3796
      %v3798 = vrot.slane %v3451, 2
      %v3799 = vsel %vm602, %v3794, %v3798
      %v3800 = vrot.slane %v3452, 2
      %v3801 = vsel %vm602, %v3796, %v3800
      %v3802 = vrot.slane %v3453, 2
      %v3803 = vsel %vm602, %v3798, %v3802
      %v3804 = vrot.slane %v3454, 2
      %v3805 = vsel %vm602, %v3800, %v3804
      %v3806 = vrot.slane %v3455, 2
      %v3807 = vsel %vm602, %v3802, %v3806
      %v3808 = vrot.slane %v3456, 2
      %v3809 = vsel %vm602, %v3804, %v3808
      %v3810 = vrot.slane %v3457, 2
      %v3811 = vsel %vm602, %v3806, %v3810
      %v3812 = vrot.slane %v3458, 2
      %v3813 = vsel %vm602, %v3808, %v3812
      %v3814 = vrot.slane %v3459, 2
      %v3815 = vsel %vm602, %v3810, %v3814
      %v3816 = vrot.slane %v3460, 2
      %v3817 = vsel %vm602, %v3812, %v3816
      %v3818 = vrot.slane %v3461, 2
      %v3819 = vsel %vm602, %v3814, %v3818
      %v3820 = vrot.slane %v3462, 2
      %v3821 = vsel %vm602, %v3816, %v3820
      %v3822 = vrot.slane %v3463, 2
      %v3823 = vsel %vm602, %v3818, %v3822
      %v3824 = vrot.slane %v3464, 2
      %v3825 = vsel %vm602, %v3820, %v3824
      %v3826 = vrot.slane %v3465, 2
      %v3827 = vsel %vm602, %v3822, %v3826
      %v3828 = vrot.slane %v3466, 2
      %v3829 = vsel %vm602, %v3824, %v3828
      %v3830 = vrot.slane %v3467, 2
      %v3831 = vsel %vm602, %v3826, %v3830
      %v3832 = vrot.slane %v3468, 2
      %v3833 = vsel %vm602, %v3828, %v3832
      %v3834 = vrot.slane %v3469, 2
      %v3835 = vsel %vm602, %v3830, %v3834
      %v3836 = vrot.slane %v3470, 2
      %v3837 = vsel %vm602, %v3832, %v3836
      %v3838 = vrot.slane %v3471, 2
      %v3839 = vsel %vm602, %v3834, %v3838
      %v3840 = vrot.slane %v3472, 2
      %v3841 = vsel %vm602, %v3836, %v3840
      %v3842 = vrot.slane %v3473, 2
      %v3843 = vsel %vm602, %v3838, %v3842
      %v3844 = vrot.slane %v3474, 2
      %v3845 = vsel %vm602, %v3840, %v3844
      %v3846 = vrot.slane %v3475, 2
      %v3847 = vsel %vm602, %v3842, %v3846
      %v3848 = vrot.slane %v3476, 2
      %v3849 = vsel %vm602, %v3844, %v3848
      %v3850 = vrot.slane %v3477, 2
      %v3851 = vsel %vm602, %v3846, %v3850
      %v3852 = vrot.slane %v3478, 2
      %v3853 = vsel %vm602, %v3848, %v3852
      %v3854 = vrot.slane %v3479, 2
      %v3855 = vsel %vm602, %v3850, %v3854
      %v3856 = vrot.slane %v3488, 2
      %v3857 = vsel %vm602, %v3852, %v3856
      %v3858 = vrot.slane %v3489, 2
      %v3859 = vsel %vm602, %v3854, %v3858
      %s3860 = scalar_lea.vmem %s1, 3072
      %v3861 = vld [vmem:[%s3860] sm:$0xff]
      %v3862 = vld [vmem:[%s3860 + $0x8] sm:$0xff]
      %v3863 = vld [vmem:[%s3860 + $0x10] sm:$0xff]
      %v3864 = vld [vmem:[%s3860 + $0x18] sm:$0xff]
      %v3865 = vld [vmem:[%s3860 + $0x20] sm:$0xff]
      %v3866 = vld [vmem:[%s3860 + $0x28] sm:$0xff]
      %v3867 = vld [vmem:[%s3860 + $0x30] sm:$0xff]
      %v3868 = vld [vmem:[%s3860 + $0x38] sm:$0xff]
      %v3869 = vld [vmem:[%s3860 + $0x40] sm:$0xff]
      %v3870 = vld [vmem:[%s3860 + $0x48] sm:$0xff]
      %v3871 = vld [vmem:[%s3860 + $0x50] sm:$0xff]
      %v3872 = vld [vmem:[%s3860 + $0x58] sm:$0xff]
      %v3873 = vld [vmem:[%s3860 + $0x60] sm:$0xff]
      %v3874 = vld [vmem:[%s3860 + $0x68] sm:$0xff]
      %v3875 = vld [vmem:[%s3860 + $0x70] sm:$0xff]
      %v3876 = vld [vmem:[%s3860 + $0x78] sm:$0xff]
      %v3877 = vld [vmem:[%s3860 + $0x80] sm:$0xff]
      %v3878 = vld [vmem:[%s3860 + $0x88] sm:$0xff]
      %v3879 = vld [vmem:[%s3860 + $0x90] sm:$0xff]
      %v3880 = vld [vmem:[%s3860 + $0x98] sm:$0xff]
      %v3881 = vld [vmem:[%s3860 + $0xa0] sm:$0xff]
      %v3882 = vld [vmem:[%s3860 + $0xa8] sm:$0xff]
      %v3883 = vld [vmem:[%s3860 + $0xb0] sm:$0xff]
      %v3884 = vld [vmem:[%s3860 + $0xb8] sm:$0xff]
      %v3885 = vld [vmem:[%s3860 + $0xc0] sm:$0xff]
      %v3886 = vld [vmem:[%s3860 + $0xc8] sm:$0xff]
      %v3887 = vld [vmem:[%s3860 + $0xd0] sm:$0xff]
      %v3888 = vld [vmem:[%s3860 + $0xd8] sm:$0xff]
      %v3889 = vld [vmem:[%s3860 + $0xe0] sm:$0xff]
      %v3890 = vld [vmem:[%s3860 + $0xe8] sm:$0xff]
      %v3891 = vld [vmem:[%s3860 + $0xf0] sm:$0xff]
      %v3892 = vld [vmem:[%s3860 + $0xf8] sm:$0xff]
      %v3893 = vld [vmem:[%s3860 + $0x100] sm:$0xff]
      %v3894 = vld [vmem:[%s3860 + $0x108] sm:$0xff]
      %v3895 = vld [vmem:[%s3860 + $0x110] sm:$0xff]
      %v3896 = vld [vmem:[%s3860 + $0x118] sm:$0xff]
      %v3897 = vld [vmem:[%s3860 + $0x120] sm:$0xff]
      %v3898 = vld [vmem:[%s3860 + $0x128] sm:$0xff]
      %v3899 = vld [vmem:[%s3860 + $0x130] sm:$0xff]
      %v3900 = vld [vmem:[%s3860 + $0x138] sm:$0xff]
      %v3901 = vld [vmem:[%s3860 + $0x140] sm:$0xff]
      %v3902 = vld [vmem:[%s3860 + $0x148] sm:$0xff]
      %v3903 = vld [vmem:[%s3860 + $0x150] sm:$0xff]
      %v3904 = vld [vmem:[%s3860 + $0x158] sm:$0xff]
      %v3905 = vld [vmem:[%s3860 + $0x160] sm:$0xff]
      %v3906 = vld [vmem:[%s3860 + $0x168] sm:$0xff]
      %v3907 = vld [vmem:[%s3860 + $0x170] sm:$0xff]
      %v3908 = vld [vmem:[%s3860 + $0x178] sm:$0xff]
      %v3909 = vld [vmem:[%s3860 + $0x180] sm:$0xff]
      %v3910 = vld [vmem:[%s3860 + $0x188] sm:$0xff]
      %v3911 = vld [vmem:[%s3860 + $0x190] sm:$0xff]
      %v3912 = vld [vmem:[%s3860 + $0x198] sm:$0xff]
      %v3913 = vld [vmem:[%s3860 + $0x1a0] sm:$0xff]
      %v3914 = vld [vmem:[%s3860 + $0x1a8] sm:$0xff]
      %v3915 = vld [vmem:[%s3860 + $0x1b0] sm:$0xff]
      %v3916 = vld [vmem:[%s3860 + $0x1b8] sm:$0xff]
      %v3917 = vld [vmem:[%s3860 + $0x1c0] sm:$0xff]
      %v3918 = vld [vmem:[%s3860 + $0x1c8] sm:$0xff]
      %v3919 = vld [vmem:[%s3860 + $0x1d0] sm:$0xff]
      %v3920 = vld [vmem:[%s3860 + $0x1d8] sm:$0xff]
      %v3921 = vld [vmem:[%s3860 + $0x1e0] sm:$0xff]
      %v3922 = vld [vmem:[%s3860 + $0x1e8] sm:$0xff]
      %v3923 = vld [vmem:[%s3860 + $0x1f0] sm:$0xff]
      %v3924 = vld [vmem:[%s3860 + $0x1f8] sm:$0xff]
      %v3925 = vld [vmem:[%s3860 + $0x200] sm:$0xff]
      %v3926 = vld [vmem:[%s3860 + $0x208] sm:$0xff]
      %v3927 = vld [vmem:[%s3860 + $0x210] sm:$0xff]
      %v3928 = vld [vmem:[%s3860 + $0x218] sm:$0xff]
      %v3929 = vld [vmem:[%s3860 + $0x220] sm:$0xff]
      %v3930 = vld [vmem:[%s3860 + $0x228] sm:$0xff]
      %v3931 = vld [vmem:[%s3860 + $0x230] sm:$0xff]
      %v3932 = vld [vmem:[%s3860 + $0x238] sm:$0xff]
      %v3933 = vld [vmem:[%s3860 + $0x240] sm:$0xff]
      %v3934 = vld [vmem:[%s3860 + $0x248] sm:$0xff]
      %v3935 = vld [vmem:[%s3860 + $0x250] sm:$0xff]
      %v3936 = vld [vmem:[%s3860 + $0x258] sm:$0xff]
      %v3937 = vld [vmem:[%s3860 + $0x260] sm:$0xff]
      %v3938 = vld [vmem:[%s3860 + $0x268] sm:$0xff]
      %v3939 = vld [vmem:[%s3860 + $0x270] sm:$0xff]
      %v3940 = vld [vmem:[%s3860 + $0x278] sm:$0xff]
      %v3941 = vld [vmem:[%s3860 + $0x280] sm:$0xff]
      %v3942 = vld [vmem:[%s3860 + $0x288] sm:$0xff]
      %v3943 = vld [vmem:[%s3860 + $0x290] sm:$0xff]
      %v3944 = vld [vmem:[%s3860 + $0x298] sm:$0xff]
      %v3945 = vld [vmem:[%s3860 + $0x2a0] sm:$0xff]
      %v3946 = vld [vmem:[%s3860 + $0x2a8] sm:$0xff]
      %v3947 = vld [vmem:[%s3860 + $0x2b0] sm:$0xff]
      %v3948 = vld [vmem:[%s3860 + $0x2b8] sm:$0xff]
      %v3949 = vld [vmem:[%s3860 + $0x2c0] sm:$0xff]
      %v3950 = vld [vmem:[%s3860 + $0x2c8] sm:$0xff]
      %v3951 = vld [vmem:[%s3860 + $0x2d0] sm:$0xff]
      %v3952 = vld [vmem:[%s3860 + $0x2d8] sm:$0xff]
      %v3953 = vld [vmem:[%s3860 + $0x2e0] sm:$0xff]
      %v3954 = vld [vmem:[%s3860 + $0x2e8] sm:$0xff]
      %v3955 = vld [vmem:[%s3860 + $0x2f0] sm:$0xff]
      %v3956 = vld [vmem:[%s3860 + $0x2f8] sm:$0xff]
      %v3957 = vld [vmem:[%s3860 + $0x300] sm:$0xff]
      %v3958 = vld [vmem:[%s3860 + $0x308] sm:$0xff]
      %v3959 = vld [vmem:[%s3860 + $0x310] sm:$0xff]
      %v3960 = vld [vmem:[%s3860 + $0x318] sm:$0xff]
      %v3961 = vld [vmem:[%s3860 + $0x320] sm:$0xff]
      %v3962 = vld [vmem:[%s3860 + $0x328] sm:$0xff]
      %v3963 = vld [vmem:[%s3860 + $0x330] sm:$0xff]
      %v3964 = vld [vmem:[%s3860 + $0x338] sm:$0xff]
      %v3965 = vld [vmem:[%s3860 + $0x340] sm:$0xff]
      %v3966 = vld [vmem:[%s3860 + $0x348] sm:$0xff]
      %v3967 = vld [vmem:[%s3860 + $0x350] sm:$0xff]
      %v3968 = vld [vmem:[%s3860 + $0x358] sm:$0xff]
      %v3969 = vld [vmem:[%s3860 + $0x360] sm:$0xff]
      %v3970 = vld [vmem:[%s3860 + $0x368] sm:$0xff]
      %v3971 = vld [vmem:[%s3860 + $0x370] sm:$0xff]
      %v3972 = vld [vmem:[%s3860 + $0x378] sm:$0xff]
      %v3973 = vld [vmem:[%s3860 + $0x380] sm:$0xff]
      %v3974 = vld [vmem:[%s3860 + $0x388] sm:$0xff]
      %v3975 = vld [vmem:[%s3860 + $0x390] sm:$0xff]
      %v3976 = vld [vmem:[%s3860 + $0x398] sm:$0xff]
      %v3977 = vld [vmem:[%s3860 + $0x3a0] sm:$0xff]
      %v3978 = vld [vmem:[%s3860 + $0x3a8] sm:$0xff]
      %v3979 = vld [vmem:[%s3860 + $0x3b0] sm:$0xff]
      %v3980 = vld [vmem:[%s3860 + $0x3b8] sm:$0xff]
      %v3981 = vld [vmem:[%s3860 + $0x3c0] sm:$0xff]
      %v3982 = vld [vmem:[%s3860 + $0x3c8] sm:$0xff]
      %v3983 = vld [vmem:[%s3860 + $0x3d0] sm:$0xff]
      %v3984 = vld [vmem:[%s3860 + $0x3d8] sm:$0xff]
      %v3985 = vld [vmem:[%s3860 + $0x3e0] sm:$0xff]
      %v3986 = vld [vmem:[%s3860 + $0x3e8] sm:$0xff]
      %v3987 = vld [vmem:[%s3860 + $0x3f0] sm:$0xff]
      %v3988 = vld [vmem:[%s3860 + $0x3f8] sm:$0xff]
      %v3989 = vld [vmem:[%s3860 + $0x400] sm:$0xff]
      %v3990 = vld [vmem:[%s3860 + $0x408] sm:$0xff]
      %v3991 = vld [vmem:[%s3860 + $0x410] sm:$0xff]
      %v3992 = vld [vmem:[%s3860 + $0x418] sm:$0xff]
      %v3993 = vld [vmem:[%s3860 + $0x420] sm:$0xff]
      %v3994 = vld [vmem:[%s3860 + $0x428] sm:$0xff]
      %v3995 = vld [vmem:[%s3860 + $0x430] sm:$0xff]
      %v3996 = vld [vmem:[%s3860 + $0x438] sm:$0xff]
      %v3997 = vld [vmem:[%s3860 + $0x440] sm:$0xff]
      %v3998 = vld [vmem:[%s3860 + $0x448] sm:$0xff]
      %v3999 = vld [vmem:[%s3860 + $0x450] sm:$0xff]
      %v4000 = vld [vmem:[%s3860 + $0x458] sm:$0xff]
      %v4001 = vld [vmem:[%s3860 + $0x460] sm:$0xff]
      %v4002 = vld [vmem:[%s3860 + $0x468] sm:$0xff]
      %v4003 = vld [vmem:[%s3860 + $0x470] sm:$0xff]
      %v4004 = vld [vmem:[%s3860 + $0x478] sm:$0xff]
      %v4005 = vld [vmem:[%s3860 + $0x480] sm:$0xff]
      %v4006 = vld [vmem:[%s3860 + $0x488] sm:$0xff]
      %v4007 = vld [vmem:[%s3860 + $0x490] sm:$0xff]
      %v4008 = vld [vmem:[%s3860 + $0x498] sm:$0xff]
      %v4009 = vld [vmem:[%s3860 + $0x4a0] sm:$0xff]
      %v4010 = vld [vmem:[%s3860 + $0x4a8] sm:$0xff]
      %v4011 = vld [vmem:[%s3860 + $0x4b0] sm:$0xff]
      %v4012 = vld [vmem:[%s3860 + $0x4b8] sm:$0xff]
      %v4013 = vld [vmem:[%s3860 + $0x4c0] sm:$0xff]
      %v4014 = vld [vmem:[%s3860 + $0x4c8] sm:$0xff]
      %v4015 = vld [vmem:[%s3860 + $0x4d0] sm:$0xff]
      %v4016 = vld [vmem:[%s3860 + $0x4d8] sm:$0xff]
      %v4017 = vld [vmem:[%s3860 + $0x4e0] sm:$0xff]
      %v4018 = vld [vmem:[%s3860 + $0x4e8] sm:$0xff]
      %v4019 = vld [vmem:[%s3860 + $0x4f0] sm:$0xff]
      %v4020 = vld [vmem:[%s3860 + $0x4f8] sm:$0xff]
      %v4021 = vld [vmem:[%s3860 + $0x500] sm:$0xff]
      %v4022 = vld [vmem:[%s3860 + $0x508] sm:$0xff]
      %v4023 = vld [vmem:[%s3860 + $0x510] sm:$0xff]
      %v4024 = vld [vmem:[%s3860 + $0x518] sm:$0xff]
      %v4025 = vld [vmem:[%s3860 + $0x520] sm:$0xff]
      %v4026 = vld [vmem:[%s3860 + $0x528] sm:$0xff]
      %v4027 = vld [vmem:[%s3860 + $0x530] sm:$0xff]
      %v4028 = vld [vmem:[%s3860 + $0x538] sm:$0xff]
      %v4029 = vld [vmem:[%s3860 + $0x540] sm:$0xff]
      %v4030 = vld [vmem:[%s3860 + $0x548] sm:$0xff]
      %v4031 = vld [vmem:[%s3860 + $0x550] sm:$0xff]
      %v4032 = vld [vmem:[%s3860 + $0x558] sm:$0xff]
      %v4033 = vld [vmem:[%s3860 + $0x560] sm:$0xff]
      %v4034 = vld [vmem:[%s3860 + $0x568] sm:$0xff]
      %v4035 = vld [vmem:[%s3860 + $0x570] sm:$0xff]
      %v4036 = vld [vmem:[%s3860 + $0x578] sm:$0xff]
      %v4037 = vld [vmem:[%s3860 + $0x580] sm:$0xff]
      %v4038 = vld [vmem:[%s3860 + $0x588] sm:$0xff]
      %v4039 = vld [vmem:[%s3860 + $0x590] sm:$0xff]
      %v4040 = vld [vmem:[%s3860 + $0x598] sm:$0xff]
      %v4041 = vld [vmem:[%s3860 + $0x5a0] sm:$0xff]
      %v4042 = vld [vmem:[%s3860 + $0x5a8] sm:$0xff]
      %v4043 = vld [vmem:[%s3860 + $0x5b0] sm:$0xff]
      %v4044 = vld [vmem:[%s3860 + $0x5b8] sm:$0xff]
      %v4045 = vld [vmem:[%s3860 + $0x5c0] sm:$0xff]
      %v4046 = vld [vmem:[%s3860 + $0x5c8] sm:$0xff]
      %v4047 = vld [vmem:[%s3860 + $0x5d0] sm:$0xff]
      %v4048 = vld [vmem:[%s3860 + $0x5d8] sm:$0xff]
      %v4049 = vld [vmem:[%s3860 + $0x5e0] sm:$0xff]
      %v4050 = vld [vmem:[%s3860 + $0x5e8] sm:$0xff]
      %v4051 = vld [vmem:[%s3860 + $0x5f0] sm:$0xff]
      %v4052 = vld [vmem:[%s3860 + $0x5f8] sm:$0xff]
      %vm4057 = vcmask 1043456
      %v4058 = vrot.slane %v3408, 4
      %v4059 = vrot.slane %v3410, 4
      %v4060 = vsel %vm4057, %v4058, %v4059
      %v4061 = vrot.slane %v3409, 4
      %v4062 = vrot.slane %v3411, 4
      %v4063 = vsel %vm4057, %v4061, %v4062
      %v4064 = vrot.slane %v3566, 4
      %v4065 = vrot.slane %v3571, 4
      %v4066 = vsel %vm4057, %v4064, %v4065
      %v4067 = vrot.slane %v3569, 4
      %v4068 = vrot.slane %v3573, 4
      %v4069 = vsel %vm4057, %v4067, %v4068
      %v4070 = vrot.slane %v3716, 4
      %v4071 = vrot.slane %v3721, 4
      %v4072 = vsel %vm4057, %v4070, %v4071
      %v4073 = vrot.slane %v3719, 4
      %v4074 = vrot.slane %v3723, 4
      %v4075 = vsel %vm4057, %v4073, %v4074
      %v4076 = vrot.slane %v3412, 4
      %v4077 = vsel %vm4057, %v4059, %v4076
      %v4078 = vrot.slane %v3413, 4
      %v4079 = vsel %vm4057, %v4062, %v4078
      %v4080 = vrot.slane %v3575, 4
      %v4081 = vsel %vm4057, %v4065, %v4080
      %v4082 = vrot.slane %v3577, 4
      %v4083 = vsel %vm4057, %v4068, %v4082
      %v4084 = vrot.slane %v3725, 4
      %v4085 = vsel %vm4057, %v4071, %v4084
      %v4086 = vrot.slane %v3727, 4
      %v4087 = vsel %vm4057, %v4074, %v4086
      %v4088 = vrot.slane %v3414, 4
      %v4089 = vsel %vm4057, %v4076, %v4088
      %v4090 = vrot.slane %v3415, 4
      %v4091 = vsel %vm4057, %v4078, %v4090
      %v4092 = vrot.slane %v3579, 4
      %v4093 = vsel %vm4057, %v4080, %v4092
      %v4094 = vrot.slane %v3581, 4
      %v4095 = vsel %vm4057, %v4082, %v4094
      %v4096 = vrot.slane %v3729, 4
      %v4097 = vsel %vm4057, %v4084, %v4096
      %v4098 = vrot.slane %v3731, 4
      %v4099 = vsel %vm4057, %v4086, %v4098
      %v4100 = vrot.slane %v3416, 4
      %v4101 = vsel %vm4057, %v4088, %v4100
      %v4102 = vrot.slane %v3417, 4
      %v4103 = vsel %vm4057, %v4090, %v4102
      %v4104 = vrot.slane %v3583, 4
      %v4105 = vsel %vm4057, %v4092, %v4104
      %v4106 = vrot.slane %v3585, 4
      %v4107 = vsel %vm4057, %v4094, %v4106
      %v4108 = vrot.slane %v3733, 4
      %v4109 = vsel %vm4057, %v4096, %v4108
      %v4110 = vrot.slane %v3735, 4
      %v4111 = vsel %vm4057, %v4098, %v4110
      %v4112 = vrot.slane %v3418, 4
      %v4113 = vsel %vm4057, %v4100, %v4112
      %v4114 = vrot.slane %v3419, 4
      %v4115 = vsel %vm4057, %v4102, %v4114
      %v4116 = vrot.slane %v3587, 4
      %v4117 = vsel %vm4057, %v4104, %v4116
      %v4118 = vrot.slane %v3589, 4
      %v4119 = vsel %vm4057, %v4106, %v4118
      %v4120 = vrot.slane %v3737, 4
      %v4121 = vsel %vm4057, %v4108, %v4120
      %v4122 = vrot.slane %v3739, 4
      %v4123 = vsel %vm4057, %v4110, %v4122
      %v4124 = vrot.slane %v3420, 4
      %v4125 = vsel %vm4057, %v4112, %v4124
      %v4126 = vrot.slane %v3421, 4
      %v4127 = vsel %vm4057, %v4114, %v4126
      %v4128 = vrot.slane %v3591, 4
      %v4129 = vsel %vm4057, %v4116, %v4128
      %v4130 = vrot.slane %v3593, 4
      %v4131 = vsel %vm4057, %v4118, %v4130
      %v4132 = vrot.slane %v3741, 4
      %v4133 = vsel %vm4057, %v4120, %v4132
      %v4134 = vrot.slane %v3743, 4
      %v4135 = vsel %vm4057, %v4122, %v4134
      %v4136 = vrot.slane %v3422, 4
      %v4137 = vsel %vm4057, %v4124, %v4136
      %v4138 = vrot.slane %v3423, 4
      %v4139 = vsel %vm4057, %v4126, %v4138
      %v4140 = vrot.slane %v3595, 4
      %v4141 = vsel %vm4057, %v4128, %v4140
      %v4142 = vrot.slane %v3597, 4
      %v4143 = vsel %vm4057, %v4130, %v4142
      %v4144 = vrot.slane %v3745, 4
      %v4145 = vsel %vm4057, %v4132, %v4144
      %v4146 = vrot.slane %v3747, 4
      %v4147 = vsel %vm4057, %v4134, %v4146
      %v4148 = vrot.slane %v3424, 4
      %v4149 = vsel %vm4057, %v4136, %v4148
      %v4150 = vrot.slane %v3425, 4
      %v4151 = vsel %vm4057, %v4138, %v4150
      %v4152 = vrot.slane %v3599, 4
      %v4153 = vsel %vm4057, %v4140, %v4152
      %v4154 = vrot.slane %v3601, 4
      %v4155 = vsel %vm4057, %v4142, %v4154
      %v4156 = vrot.slane %v3749, 4
      %v4157 = vsel %vm4057, %v4144, %v4156
      %v4158 = vrot.slane %v3751, 4
      %v4159 = vsel %vm4057, %v4146, %v4158
      %v4160 = vrot.slane %v3426, 4
      %v4161 = vsel %vm4057, %v4148, %v4160
      %v4162 = vrot.slane %v3427, 4
      %v4163 = vsel %vm4057, %v4150, %v4162
      %v4164 = vrot.slane %v3603, 4
      %v4165 = vsel %vm4057, %v4152, %v4164
      %v4166 = vrot.slane %v3605, 4
      %v4167 = vsel %vm4057, %v4154, %v4166
      %v4168 = vrot.slane %v3753, 4
      %v4169 = vsel %vm4057, %v4156, %v4168
      %v4170 = vrot.slane %v3755, 4
      %v4171 = vsel %vm4057, %v4158, %v4170
      %v4172 = vrot.slane %v3428, 4
      %v4173 = vsel %vm4057, %v4160, %v4172
      %v4174 = vrot.slane %v3429, 4
      %v4175 = vsel %vm4057, %v4162, %v4174
      %v4176 = vrot.slane %v3607, 4
      %v4177 = vsel %vm4057, %v4164, %v4176
      %v4178 = vrot.slane %v3609, 4
      %v4179 = vsel %vm4057, %v4166, %v4178
      %v4180 = vrot.slane %v3757, 4
      %v4181 = vsel %vm4057, %v4168, %v4180
      %v4182 = vrot.slane %v3759, 4
      %v4183 = vsel %vm4057, %v4170, %v4182
      %v4184 = vrot.slane %v3430, 4
      %v4185 = vsel %vm4057, %v4172, %v4184
      %v4186 = vrot.slane %v3431, 4
      %v4187 = vsel %vm4057, %v4174, %v4186
      %v4188 = vrot.slane %v3611, 4
      %v4189 = vsel %vm4057, %v4176, %v4188
      %v4190 = vrot.slane %v3613, 4
      %v4191 = vsel %vm4057, %v4178, %v4190
      %v4192 = vrot.slane %v3761, 4
      %v4193 = vsel %vm4057, %v4180, %v4192
      %v4194 = vrot.slane %v3763, 4
      %v4195 = vsel %vm4057, %v4182, %v4194
      %v4196 = vrot.slane %v3432, 4
      %v4197 = vsel %vm4057, %v4184, %v4196
      %v4198 = vrot.slane %v3433, 4
      %v4199 = vsel %vm4057, %v4186, %v4198
      %v4200 = vrot.slane %v3615, 4
      %v4201 = vsel %vm4057, %v4188, %v4200
      %v4202 = vrot.slane %v3617, 4
      %v4203 = vsel %vm4057, %v4190, %v4202
      %v4204 = vrot.slane %v3765, 4
      %v4205 = vsel %vm4057, %v4192, %v4204
      %v4206 = vrot.slane %v3767, 4
      %v4207 = vsel %vm4057, %v4194, %v4206
      %v4208 = vrot.slane %v3434, 4
      %v4209 = vsel %vm4057, %v4196, %v4208
      %v4210 = vrot.slane %v3435, 4
      %v4211 = vsel %vm4057, %v4198, %v4210
      %v4212 = vrot.slane %v3619, 4
      %v4213 = vsel %vm4057, %v4200, %v4212
      %v4214 = vrot.slane %v3621, 4
      %v4215 = vsel %vm4057, %v4202, %v4214
      %v4216 = vrot.slane %v3769, 4
      %v4217 = vsel %vm4057, %v4204, %v4216
      %v4218 = vrot.slane %v3771, 4
      %v4219 = vsel %vm4057, %v4206, %v4218
      %v4220 = vrot.slane %v3436, 4
      %v4221 = vsel %vm4057, %v4208, %v4220
      %v4222 = vrot.slane %v3437, 4
      %v4223 = vsel %vm4057, %v4210, %v4222
      %v4224 = vrot.slane %v3623, 4
      %v4225 = vsel %vm4057, %v4212, %v4224
      %v4226 = vrot.slane %v3625, 4
      %v4227 = vsel %vm4057, %v4214, %v4226
      %v4228 = vrot.slane %v3773, 4
      %v4229 = vsel %vm4057, %v4216, %v4228
      %v4230 = vrot.slane %v3775, 4
      %v4231 = vsel %vm4057, %v4218, %v4230
      %v4232 = vrot.slane %v3438, 4
      %v4233 = vsel %vm4057, %v4220, %v4232
      %v4234 = vrot.slane %v3439, 4
      %v4235 = vsel %vm4057, %v4222, %v4234
      %v4236 = vrot.slane %v3627, 4
      %v4237 = vsel %vm4057, %v4224, %v4236
      %v4238 = vrot.slane %v3629, 4
      %v4239 = vsel %vm4057, %v4226, %v4238
      %v4240 = vrot.slane %v3777, 4
      %v4241 = vsel %vm4057, %v4228, %v4240
      %v4242 = vrot.slane %v3779, 4
      %v4243 = vsel %vm4057, %v4230, %v4242
      %v4244 = vrot.slane %v3440, 4
      %v4245 = vsel %vm4057, %v4232, %v4244
      %v4246 = vrot.slane %v3441, 4
      %v4247 = vsel %vm4057, %v4234, %v4246
      %v4248 = vrot.slane %v3631, 4
      %v4249 = vsel %vm4057, %v4236, %v4248
      %v4250 = vrot.slane %v3633, 4
      %v4251 = vsel %vm4057, %v4238, %v4250
      %v4252 = vrot.slane %v3781, 4
      %v4253 = vsel %vm4057, %v4240, %v4252
      %v4254 = vrot.slane %v3783, 4
      %v4255 = vsel %vm4057, %v4242, %v4254
      %v4256 = vrot.slane %v3442, 4
      %v4257 = vsel %vm4057, %v4244, %v4256
      %v4258 = vrot.slane %v3443, 4
      %v4259 = vsel %vm4057, %v4246, %v4258
      %v4260 = vrot.slane %v3635, 4
      %v4261 = vsel %vm4057, %v4248, %v4260
      %v4262 = vrot.slane %v3637, 4
      %v4263 = vsel %vm4057, %v4250, %v4262
      %v4264 = vrot.slane %v3785, 4
      %v4265 = vsel %vm4057, %v4252, %v4264
      %v4266 = vrot.slane %v3787, 4
      %v4267 = vsel %vm4057, %v4254, %v4266
      %v4268 = vrot.slane %v3444, 4
      %v4269 = vsel %vm4057, %v4256, %v4268
      %v4270 = vrot.slane %v3445, 4
      %v4271 = vsel %vm4057, %v4258, %v4270
      %v4272 = vrot.slane %v3639, 4
      %v4273 = vsel %vm4057, %v4260, %v4272
      %v4274 = vrot.slane %v3641, 4
      %v4275 = vsel %vm4057, %v4262, %v4274
      %v4276 = vrot.slane %v3789, 4
      %v4277 = vsel %vm4057, %v4264, %v4276
      %v4278 = vrot.slane %v3791, 4
      %v4279 = vsel %vm4057, %v4266, %v4278
      %v4280 = vrot.slane %v3446, 4
      %v4281 = vsel %vm4057, %v4268, %v4280
      %v4282 = vrot.slane %v3447, 4
      %v4283 = vsel %vm4057, %v4270, %v4282
      %v4284 = vrot.slane %v3643, 4
      %v4285 = vsel %vm4057, %v4272, %v4284
      %v4286 = vrot.slane %v3645, 4
      %v4287 = vsel %vm4057, %v4274, %v4286
      %v4288 = vrot.slane %v3793, 4
      %v4289 = vsel %vm4057, %v4276, %v4288
      %v4290 = vrot.slane %v3795, 4
      %v4291 = vsel %vm4057, %v4278, %v4290
      %v4292 = vrot.slane %v3448, 4
      %v4293 = vsel %vm4057, %v4280, %v4292
      %v4294 = vrot.slane %v3449, 4
      %v4295 = vsel %vm4057, %v4282, %v4294
      %v4296 = vrot.slane %v3647, 4
      %v4297 = vsel %vm4057, %v4284, %v4296
      %v4298 = vrot.slane %v3649, 4
      %v4299 = vsel %vm4057, %v4286, %v4298
      %v4300 = vrot.slane %v3797, 4
      %v4301 = vsel %vm4057, %v4288, %v4300
      %v4302 = vrot.slane %v3799, 4
      %v4303 = vsel %vm4057, %v4290, %v4302
      %v4304 = vrot.slane %v3450, 4
      %v4305 = vsel %vm4057, %v4292, %v4304
      %v4306 = vrot.slane %v3451, 4
      %v4307 = vsel %vm4057, %v4294, %v4306
      %v4308 = vrot.slane %v3651, 4
      %v4309 = vsel %vm4057, %v4296, %v4308
      %v4310 = vrot.slane %v3653, 4
      %v4311 = vsel %vm4057, %v4298, %v4310
      %v4312 = vrot.slane %v3801, 4
      %v4313 = vsel %vm4057, %v4300, %v4312
      %v4314 = vrot.slane %v3803, 4
      %v4315 = vsel %vm4057, %v4302, %v4314
      %v4316 = vrot.slane %v3452, 4
      %v4317 = vsel %vm4057, %v4304, %v4316
      %v4318 = vrot.slane %v3453, 4
      %v4319 = vsel %vm4057, %v4306, %v4318
      %v4320 = vrot.slane %v3655, 4
      %v4321 = vsel %vm4057, %v4308, %v4320
      %v4322 = vrot.slane %v3657, 4
      %v4323 = vsel %vm4057, %v4310, %v4322
      %v4324 = vrot.slane %v3805, 4
      %v4325 = vsel %vm4057, %v4312, %v4324
      %v4326 = vrot.slane %v3807, 4
      %v4327 = vsel %vm4057, %v4314, %v4326
      %v4328 = vrot.slane %v3454, 4
      %v4329 = vsel %vm4057, %v4316, %v4328
      %v4330 = vrot.slane %v3455, 4
      %v4331 = vsel %vm4057, %v4318, %v4330
      %v4332 = vrot.slane %v3659, 4
      %v4333 = vsel %vm4057, %v4320, %v4332
      %v4334 = vrot.slane %v3661, 4
      %v4335 = vsel %vm4057, %v4322, %v4334
      %v4336 = vrot.slane %v3809, 4
      %v4337 = vsel %vm4057, %v4324, %v4336
      %v4338 = vrot.slane %v3811, 4
      %v4339 = vsel %vm4057, %v4326, %v4338
      %v4340 = vrot.slane %v3456, 4
      %v4341 = vsel %vm4057, %v4328, %v4340
      %v4342 = vrot.slane %v3457, 4
      %v4343 = vsel %vm4057, %v4330, %v4342
      %v4344 = vrot.slane %v3663, 4
      %v4345 = vsel %vm4057, %v4332, %v4344
      %v4346 = vrot.slane %v3665, 4
      %v4347 = vsel %vm4057, %v4334, %v4346
      %v4348 = vrot.slane %v3813, 4
      %v4349 = vsel %vm4057, %v4336, %v4348
      %v4350 = vrot.slane %v3815, 4
      %v4351 = vsel %vm4057, %v4338, %v4350
      %v4352 = vrot.slane %v3458, 4
      %v4353 = vsel %vm4057, %v4340, %v4352
      %v4354 = vrot.slane %v3459, 4
      %v4355 = vsel %vm4057, %v4342, %v4354
      %v4356 = vrot.slane %v3667, 4
      %v4357 = vsel %vm4057, %v4344, %v4356
      %v4358 = vrot.slane %v3669, 4
      %v4359 = vsel %vm4057, %v4346, %v4358
      %v4360 = vrot.slane %v3817, 4
      %v4361 = vsel %vm4057, %v4348, %v4360
      %v4362 = vrot.slane %v3819, 4
      %v4363 = vsel %vm4057, %v4350, %v4362
      %v4364 = vrot.slane %v3460, 4
      %v4365 = vsel %vm4057, %v4352, %v4364
      %v4366 = vrot.slane %v3461, 4
      %v4367 = vsel %vm4057, %v4354, %v4366
      %v4368 = vrot.slane %v3671, 4
      %v4369 = vsel %vm4057, %v4356, %v4368
      %v4370 = vrot.slane %v3673, 4
      %v4371 = vsel %vm4057, %v4358, %v4370
      %v4372 = vrot.slane %v3821, 4
      %v4373 = vsel %vm4057, %v4360, %v4372
      %v4374 = vrot.slane %v3823, 4
      %v4375 = vsel %vm4057, %v4362, %v4374
      %v4376 = vrot.slane %v3462, 4
      %v4377 = vsel %vm4057, %v4364, %v4376
      %v4378 = vrot.slane %v3463, 4
      %v4379 = vsel %vm4057, %v4366, %v4378
      %v4380 = vrot.slane %v3675, 4
      %v4381 = vsel %vm4057, %v4368, %v4380
      %v4382 = vrot.slane %v3677, 4
      %v4383 = vsel %vm4057, %v4370, %v4382
      %v4384 = vrot.slane %v3825, 4
      %v4385 = vsel %vm4057, %v4372, %v4384
      %v4386 = vrot.slane %v3827, 4
      %v4387 = vsel %vm4057, %v4374, %v4386
      %v4388 = vrot.slane %v3464, 4
      %v4389 = vsel %vm4057, %v4376, %v4388
      %v4390 = vrot.slane %v3465, 4
      %v4391 = vsel %vm4057, %v4378, %v4390
      %v4392 = vrot.slane %v3679, 4
      %v4393 = vsel %vm4057, %v4380, %v4392
      %v4394 = vrot.slane %v3681, 4
      %v4395 = vsel %vm4057, %v4382, %v4394
      %v4396 = vrot.slane %v3829, 4
      %v4397 = vsel %vm4057, %v4384, %v4396
      %v4398 = vrot.slane %v3831, 4
      %v4399 = vsel %vm4057, %v4386, %v4398
      %v4400 = vrot.slane %v3466, 4
      %v4401 = vsel %vm4057, %v4388, %v4400
      %v4402 = vrot.slane %v3467, 4
      %v4403 = vsel %vm4057, %v4390, %v4402
      %v4404 = vrot.slane %v3683, 4
      %v4405 = vsel %vm4057, %v4392, %v4404
      %v4406 = vrot.slane %v3685, 4
      %v4407 = vsel %vm4057, %v4394, %v4406
      %v4408 = vrot.slane %v3833, 4
      %v4409 = vsel %vm4057, %v4396, %v4408
      %v4410 = vrot.slane %v3835, 4
      %v4411 = vsel %vm4057, %v4398, %v4410
      %v4412 = vrot.slane %v3468, 4
      %v4413 = vsel %vm4057, %v4400, %v4412
      %v4414 = vrot.slane %v3469, 4
      %v4415 = vsel %vm4057, %v4402, %v4414
      %v4416 = vrot.slane %v3687, 4
      %v4417 = vsel %vm4057, %v4404, %v4416
      %v4418 = vrot.slane %v3689, 4
      %v4419 = vsel %vm4057, %v4406, %v4418
      %v4420 = vrot.slane %v3837, 4
      %v4421 = vsel %vm4057, %v4408, %v4420
      %v4422 = vrot.slane %v3839, 4
      %v4423 = vsel %vm4057, %v4410, %v4422
      %v4424 = vrot.slane %v3470, 4
      %v4425 = vsel %vm4057, %v4412, %v4424
      %v4426 = vrot.slane %v3471, 4
      %v4427 = vsel %vm4057, %v4414, %v4426
      %v4428 = vrot.slane %v3691, 4
      %v4429 = vsel %vm4057, %v4416, %v4428
      %v4430 = vrot.slane %v3693, 4
      %v4431 = vsel %vm4057, %v4418, %v4430
      %v4432 = vrot.slane %v3841, 4
      %v4433 = vsel %vm4057, %v4420, %v4432
      %v4434 = vrot.slane %v3843, 4
      %v4435 = vsel %vm4057, %v4422, %v4434
      %v4436 = vrot.slane %v3472, 4
      %v4437 = vsel %vm4057, %v4424, %v4436
      %v4438 = vrot.slane %v3473, 4
      %v4439 = vsel %vm4057, %v4426, %v4438
      %v4440 = vrot.slane %v3695, 4
      %v4441 = vsel %vm4057, %v4428, %v4440
      %v4442 = vrot.slane %v3697, 4
      %v4443 = vsel %vm4057, %v4430, %v4442
      %v4444 = vrot.slane %v3845, 4
      %v4445 = vsel %vm4057, %v4432, %v4444
      %v4446 = vrot.slane %v3847, 4
      %v4447 = vsel %vm4057, %v4434, %v4446
      %v4448 = vrot.slane %v3474, 4
      %v4449 = vsel %vm4057, %v4436, %v4448
      %v4450 = vrot.slane %v3475, 4
      %v4451 = vsel %vm4057, %v4438, %v4450
      %v4452 = vrot.slane %v3699, 4
      %v4453 = vsel %vm4057, %v4440, %v4452
      %v4454 = vrot.slane %v3701, 4
      %v4455 = vsel %vm4057, %v4442, %v4454
      %v4456 = vrot.slane %v3849, 4
      %v4457 = vsel %vm4057, %v4444, %v4456
      %v4458 = vrot.slane %v3851, 4
      %v4459 = vsel %vm4057, %v4446, %v4458
      %v4460 = vrot.slane %v3476, 4
      %v4461 = vsel %vm4057, %v4448, %v4460
      %v4462 = vrot.slane %v3477, 4
      %v4463 = vsel %vm4057, %v4450, %v4462
      %v4464 = vrot.slane %v3703, 4
      %v4465 = vsel %vm4057, %v4452, %v4464
      %v4466 = vrot.slane %v3705, 4
      %v4467 = vsel %vm4057, %v4454, %v4466
      %v4468 = vrot.slane %v3853, 4
      %v4469 = vsel %vm4057, %v4456, %v4468
      %v4470 = vrot.slane %v3855, 4
      %v4471 = vsel %vm4057, %v4458, %v4470
      %v4472 = vrot.slane %v3478, 4
      %v4473 = vsel %vm4057, %v4460, %v4472
      %v4474 = vrot.slane %v3479, 4
      %v4475 = vsel %vm4057, %v4462, %v4474
      %v4476 = vrot.slane %v3707, 4
      %v4477 = vsel %vm4057, %v4464, %v4476
      %v4478 = vrot.slane %v3709, 4
      %v4479 = vsel %vm4057, %v4466, %v4478
      %v4480 = vrot.slane %v3857, 4
      %v4481 = vsel %vm4057, %v4468, %v4480
      %v4482 = vrot.slane %v3859, 4
      %v4483 = vsel %vm4057, %v4470, %v4482
      %v4484 = vrot.slane %v3480, 4
      %v4485 = vsel %vm4057, %v4472, %v4484
      %v4486 = vrot.slane %v3481, 4
      %v4487 = vsel %vm4057, %v4474, %v4486
      %v4488 = vrot.slane %v3706, 4
      %v4489 = vsel %vm4057, %v4476, %v4488
      %v4490 = vrot.slane %v3708, 4
      %v4491 = vsel %vm4057, %v4478, %v4490
      %v4492 = vrot.slane %v3856, 4
      %v4493 = vsel %vm4057, %v4480, %v4492
      %v4494 = vrot.slane %v3858, 4
      %v4495 = vsel %vm4057, %v4482, %v4494
      %4712 = vmatprep.subr.mxu0 %v3892
      %4713 = vmatpush1.msra.mxu0 %v3891
      %4714 = vmatprep.subr.mxu0 %v3890
      %4715 = vmatpush1.msra.mxu0 %v3889
      %4716 = vmatprep.subr.mxu0 %v3888
      %4717 = vmatpush1.msra.mxu0 %v3887
      %4718 = vmatprep.subr.mxu0 %v3886
      %4719 = vmatpush1.msra.mxu0 %v3885
      %4720 = vmatprep.subr.mxu0 %v3884
      %4721 = vmatpush1.msra.mxu0 %v3883
      %4722 = vmatprep.subr.mxu0 %v3882
      %4723 = vmatpush1.msra.mxu0 %v3881
      %4724 = vmatprep.subr.mxu0 %v3880
      %4725 = vmatpush1.msra.mxu0 %v3879
      %4726 = vmatprep.subr.mxu0 %v3878
      %4727 = vmatpush1.msra.mxu0 %v3877
      %4728 = vmatprep.subr.mxu0 %v3876
      %4729 = vmatpush1.msra.mxu0 %v3875
      %4730 = vmatprep.subr.mxu0 %v3874
      %4731 = vmatpush1.msra.mxu0 %v3873
      %4732 = vmatprep.subr.mxu0 %v3872
      %4733 = vmatpush1.msra.mxu0 %v3871
      %4734 = vmatprep.subr.mxu0 %v3870
      %4735 = vmatpush1.msra.mxu0 %v3869
      %4736 = vmatprep.subr.mxu0 %v3868
      %4737 = vmatpush1.msra.mxu0 %v3867
      %4738 = vmatprep.subr.mxu0 %v3866
      %4739 = vmatpush1.msra.mxu0 %v3865
      %4740 = vmatprep.subr.mxu0 %v3864
      %4741 = vmatpush1.msra.mxu0 %v3863
      %4742 = vmatprep.subr.mxu0 %v3862
      %4743 = vmatpush1.msra.mxu0 %v3861
      %4744 = vmatprep.subr.mxu0 %v3924
      %4745 = vmatpush2.msra.mxu0 %v3923
      %4746 = vmatprep.subr.mxu0 %v3922
      %4747 = vmatpush2.msra.mxu0 %v3921
      %4748 = vmatprep.subr.mxu0 %v3920
      %4749 = vmatpush2.msra.mxu0 %v3919
      %4750 = vmatprep.subr.mxu0 %v3918
      %4751 = vmatpush2.msra.mxu0 %v3917
      %4752 = vmatprep.subr.mxu0 %v3916
      %4753 = vmatpush2.msra.mxu0 %v3915
      %4754 = vmatprep.subr.mxu0 %v3914
      %4755 = vmatpush2.msra.mxu0 %v3913
      %4756 = vmatprep.subr.mxu0 %v3912
      %4757 = vmatpush2.msra.mxu0 %v3911
      %4758 = vmatprep.subr.mxu0 %v3910
      %4759 = vmatpush2.msra.mxu0 %v3909
      %4760 = vmatprep.subr.mxu0 %v3908
      %4761 = vmatpush2.msra.mxu0 %v3907
      %4762 = vmatprep.subr.mxu0 %v3906
      %4763 = vmatpush2.msra.mxu0 %v3905
      %4764 = vmatprep.subr.mxu0 %v3904
      %4765 = vmatpush2.msra.mxu0 %v3903
      %4766 = vmatprep.subr.mxu0 %v3902
      %4767 = vmatpush2.msra.mxu0 %v3901
      %4768 = vmatprep.subr.mxu0 %v3900
      %4769 = vmatpush2.msra.mxu0 %v3899
      %4770 = vmatprep.subr.mxu0 %v3898
      %4771 = vmatpush2.msra.mxu0 %v3897
      %4772 = vmatprep.subr.mxu0 %v3896
      %4773 = vmatpush2.msra.mxu0 %v3895
      %4774 = vmatprep.subr.mxu0 %v3894
      %4775 = vmatpush2.msra.mxu0 %v3893
      %4776 = vmatprep.mubr.f32.mxu0 %v4063
      %4777 = vmatmul.mubr.f32.gmra.mxu0 %v4060
      %v4778 = vpop.f32.mrf.mxu0
      %v4779 = vadd.f32 0.0, %v4778
      %v4780 = vpop.f32.mrf.mxu0
      %v4781 = vadd.f32 0.0, %v4780
      %4782 = vmatprep.mubr.f32.mxu0 %v4079
      %4783 = vmatmul.mubr.f32.gmra.mxu0 %v4077
      %v4784 = vpop.f32.mrf.mxu0
      %v4785 = vadd.f32 0.0, %v4784
      %v4786 = vpop.f32.mrf.mxu0
      %v4787 = vadd.f32 0.0, %v4786
      %4788 = vmatprep.mubr.f32.mxu0 %v4091
      %4789 = vmatmul.mubr.f32.gmra.mxu0 %v4089
      %v4790 = vpop.f32.mrf.mxu0
      %v4791 = vadd.f32 0.0, %v4790
      %v4792 = vpop.f32.mrf.mxu0
      %v4793 = vadd.f32 0.0, %v4792
      %4794 = vmatprep.mubr.f32.mxu0 %v4103
      %4795 = vmatmul.mubr.f32.gmra.mxu0 %v4101
      %v4796 = vpop.f32.mrf.mxu0
      %v4797 = vadd.f32 0.0, %v4796
      %v4798 = vpop.f32.mrf.mxu0
      %v4799 = vadd.f32 0.0, %v4798
      %4800 = vmatprep.mubr.f32.mxu0 %v4115
      %4801 = vmatmul.mubr.f32.gmra.mxu0 %v4113
      %v4802 = vpop.f32.mrf.mxu0
      %v4803 = vadd.f32 0.0, %v4802
      %v4804 = vpop.f32.mrf.mxu0
      %v4805 = vadd.f32 0.0, %v4804
      %4806 = vmatprep.mubr.f32.mxu0 %v4127
      %4807 = vmatmul.mubr.f32.gmra.mxu0 %v4125
      %v4808 = vpop.f32.mrf.mxu0
      %v4809 = vadd.f32 0.0, %v4808
      %v4810 = vpop.f32.mrf.mxu0
      %v4811 = vadd.f32 0.0, %v4810
      %4812 = vmatprep.mubr.f32.mxu0 %v4139
      %4813 = vmatmul.mubr.f32.gmra.mxu0 %v4137
      %v4814 = vpop.f32.mrf.mxu0
      %v4815 = vadd.f32 0.0, %v4814
      %v4816 = vpop.f32.mrf.mxu0
      %v4817 = vadd.f32 0.0, %v4816
      %4818 = vmatprep.mubr.f32.mxu0 %v4151
      %4819 = vmatmul.mubr.f32.gmra.mxu0 %v4149
      %v4820 = vpop.f32.mrf.mxu0
      %v4821 = vadd.f32 0.0, %v4820
      %v4822 = vpop.f32.mrf.mxu0
      %v4823 = vadd.f32 0.0, %v4822
      %4824 = vmatprep.mubr.f32.mxu0 %v4163
      %4825 = vmatmul.mubr.f32.gmra.mxu0 %v4161
      %v4826 = vpop.f32.mrf.mxu0
      %v4827 = vadd.f32 0.0, %v4826
      %v4828 = vpop.f32.mrf.mxu0
      %v4829 = vadd.f32 0.0, %v4828
      %4830 = vmatprep.mubr.f32.mxu0 %v4175
      %4831 = vmatmul.mubr.f32.gmra.mxu0 %v4173
      %v4832 = vpop.f32.mrf.mxu0
      %v4833 = vadd.f32 0.0, %v4832
      %v4834 = vpop.f32.mrf.mxu0
      %v4835 = vadd.f32 0.0, %v4834
      %4836 = vmatprep.mubr.f32.mxu0 %v4187
      %4837 = vmatmul.mubr.f32.gmra.mxu0 %v4185
      %v4838 = vpop.f32.mrf.mxu0
      %v4839 = vadd.f32 0.0, %v4838
      %v4840 = vpop.f32.mrf.mxu0
      %v4841 = vadd.f32 0.0, %v4840
      %4842 = vmatprep.mubr.f32.mxu0 %v4199
      %4843 = vmatmul.mubr.f32.gmra.mxu0 %v4197
      %v4844 = vpop.f32.mrf.mxu0
      %v4845 = vadd.f32 0.0, %v4844
      %v4846 = vpop.f32.mrf.mxu0
      %v4847 = vadd.f32 0.0, %v4846
      %4848 = vmatprep.mubr.f32.mxu0 %v4211
      %4849 = vmatmul.mubr.f32.gmra.mxu0 %v4209
      %v4850 = vpop.f32.mrf.mxu0
      %v4851 = vadd.f32 0.0, %v4850
      %v4852 = vpop.f32.mrf.mxu0
      %v4853 = vadd.f32 0.0, %v4852
      %4854 = vmatprep.mubr.f32.mxu0 %v4223
      %4855 = vmatmul.mubr.f32.gmra.mxu0 %v4221
      %v4856 = vpop.f32.mrf.mxu0
      %v4857 = vadd.f32 0.0, %v4856
      %v4858 = vpop.f32.mrf.mxu0
      %v4859 = vadd.f32 0.0, %v4858
      %4860 = vmatprep.mubr.f32.mxu0 %v4235
      %4861 = vmatmul.mubr.f32.gmra.mxu0 %v4233
      %v4862 = vpop.f32.mrf.mxu0
      %v4863 = vadd.f32 0.0, %v4862
      %v4864 = vpop.f32.mrf.mxu0
      %v4865 = vadd.f32 0.0, %v4864
      %4866 = vmatprep.mubr.f32.mxu0 %v4247
      %4867 = vmatmul.mubr.f32.gmra.mxu0 %v4245
      %v4868 = vpop.f32.mrf.mxu0
      %v4869 = vadd.f32 0.0, %v4868
      %v4870 = vpop.f32.mrf.mxu0
      %v4871 = vadd.f32 0.0, %v4870
      %4872 = vmatprep.mubr.f32.mxu0 %v4259
      %4873 = vmatmul.mubr.f32.gmra.mxu0 %v4257
      %v4874 = vpop.f32.mrf.mxu0
      %v4875 = vadd.f32 0.0, %v4874
      %v4876 = vpop.f32.mrf.mxu0
      %v4877 = vadd.f32 0.0, %v4876
      %4878 = vmatprep.mubr.f32.mxu0 %v4271
      %4879 = vmatmul.mubr.f32.gmra.mxu0 %v4269
      %v4880 = vpop.f32.mrf.mxu0
      %v4881 = vadd.f32 0.0, %v4880
      %v4882 = vpop.f32.mrf.mxu0
      %v4883 = vadd.f32 0.0, %v4882
      %4884 = vmatprep.mubr.f32.mxu0 %v4283
      %4885 = vmatmul.mubr.f32.gmra.mxu0 %v4281
      %v4886 = vpop.f32.mrf.mxu0
      %v4887 = vadd.f32 0.0, %v4886
      %v4888 = vpop.f32.mrf.mxu0
      %v4889 = vadd.f32 0.0, %v4888
      %4890 = vmatprep.mubr.f32.mxu0 %v4295
      %4891 = vmatmul.mubr.f32.gmra.mxu0 %v4293
      %v4892 = vpop.f32.mrf.mxu0
      %v4893 = vadd.f32 0.0, %v4892
      %v4894 = vpop.f32.mrf.mxu0
      %v4895 = vadd.f32 0.0, %v4894
      %4896 = vmatprep.mubr.f32.mxu0 %v4307
      %4897 = vmatmul.mubr.f32.gmra.mxu0 %v4305
      %v4898 = vpop.f32.mrf.mxu0
      %v4899 = vadd.f32 0.0, %v4898
      %v4900 = vpop.f32.mrf.mxu0
      %v4901 = vadd.f32 0.0, %v4900
      %4902 = vmatprep.mubr.f32.mxu0 %v4319
      %4903 = vmatmul.mubr.f32.gmra.mxu0 %v4317
      %v4904 = vpop.f32.mrf.mxu0
      %v4905 = vadd.f32 0.0, %v4904
      %v4906 = vpop.f32.mrf.mxu0
      %v4907 = vadd.f32 0.0, %v4906
      %4908 = vmatprep.mubr.f32.mxu0 %v4331
      %4909 = vmatmul.mubr.f32.gmra.mxu0 %v4329
      %v4910 = vpop.f32.mrf.mxu0
      %v4911 = vadd.f32 0.0, %v4910
      %v4912 = vpop.f32.mrf.mxu0
      %v4913 = vadd.f32 0.0, %v4912
      %4914 = vmatprep.mubr.f32.mxu0 %v4343
      %4915 = vmatmul.mubr.f32.gmra.mxu0 %v4341
      %v4916 = vpop.f32.mrf.mxu0
      %v4917 = vadd.f32 0.0, %v4916
      %v4918 = vpop.f32.mrf.mxu0
      %v4919 = vadd.f32 0.0, %v4918
      %4920 = vmatprep.mubr.f32.mxu0 %v4355
      %4921 = vmatmul.mubr.f32.gmra.mxu0 %v4353
      %v4922 = vpop.f32.mrf.mxu0
      %v4923 = vadd.f32 0.0, %v4922
      %v4924 = vpop.f32.mrf.mxu0
      %v4925 = vadd.f32 0.0, %v4924
      %4926 = vmatprep.mubr.f32.mxu0 %v4367
      %4927 = vmatmul.mubr.f32.gmra.mxu0 %v4365
      %v4928 = vpop.f32.mrf.mxu0
      %v4929 = vadd.f32 0.0, %v4928
      %v4930 = vpop.f32.mrf.mxu0
      %v4931 = vadd.f32 0.0, %v4930
      %4932 = vmatprep.mubr.f32.mxu0 %v4379
      %4933 = vmatmul.mubr.f32.gmra.mxu0 %v4377
      %v4934 = vpop.f32.mrf.mxu0
      %v4935 = vadd.f32 0.0, %v4934
      %v4936 = vpop.f32.mrf.mxu0
      %v4937 = vadd.f32 0.0, %v4936
      %4938 = vmatprep.mubr.f32.mxu0 %v4391
      %4939 = vmatmul.mubr.f32.gmra.mxu0 %v4389
      %v4940 = vpop.f32.mrf.mxu0
      %v4941 = vadd.f32 0.0, %v4940
      %v4942 = vpop.f32.mrf.mxu0
      %v4943 = vadd.f32 0.0, %v4942
      %4944 = vmatprep.mubr.f32.mxu0 %v4403
      %4945 = vmatmul.mubr.f32.gmra.mxu0 %v4401
      %v4946 = vpop.f32.mrf.mxu0
      %v4947 = vadd.f32 0.0, %v4946
      %v4948 = vpop.f32.mrf.mxu0
      %v4949 = vadd.f32 0.0, %v4948
      %4950 = vmatprep.mubr.f32.mxu0 %v4415
      %4951 = vmatmul.mubr.f32.gmra.mxu0 %v4413
      %v4952 = vpop.f32.mrf.mxu0
      %v4953 = vadd.f32 0.0, %v4952
      %v4954 = vpop.f32.mrf.mxu0
      %v4955 = vadd.f32 0.0, %v4954
      %4956 = vmatprep.mubr.f32.mxu0 %v4427
      %4957 = vmatmul.mubr.f32.gmra.mxu0 %v4425
      %v4958 = vpop.f32.mrf.mxu0
      %v4959 = vadd.f32 0.0, %v4958
      %v4960 = vpop.f32.mrf.mxu0
      %v4961 = vadd.f32 0.0, %v4960
      %4962 = vmatprep.mubr.f32.mxu0 %v4439
      %4963 = vmatmul.mubr.f32.gmra.mxu0 %v4437
      %v4964 = vpop.f32.mrf.mxu0
      %v4965 = vadd.f32 0.0, %v4964
      %v4966 = vpop.f32.mrf.mxu0
      %v4967 = vadd.f32 0.0, %v4966
      %4968 = vmatprep.mubr.f32.mxu0 %v4451
      %4969 = vmatmul.mubr.f32.gmra.mxu0 %v4449
      %v4970 = vpop.f32.mrf.mxu0
      %v4971 = vadd.f32 0.0, %v4970
      %v4972 = vpop.f32.mrf.mxu0
      %v4973 = vadd.f32 0.0, %v4972
      %4974 = vmatprep.mubr.f32.mxu0 %v4463
      %4975 = vmatmul.mubr.f32.gmra.mxu0 %v4461
      %v4976 = vpop.f32.mrf.mxu0
      %v4977 = vadd.f32 0.0, %v4976
      %v4978 = vpop.f32.mrf.mxu0
      %v4979 = vadd.f32 0.0, %v4978
      %4980 = vmatprep.mubr.f32.mxu0 %v4475
      %4981 = vmatmul.mubr.f32.gmra.mxu0 %v4473
      %v4982 = vpop.f32.mrf.mxu0
      %v4983 = vadd.f32 0.0, %v4982
      %v4984 = vpop.f32.mrf.mxu0
      %v4985 = vadd.f32 0.0, %v4984
      %4986 = vmatprep.mubr.f32.mxu0 %v4487
      %4987 = vmatmul.mubr.f32.gmra.mxu0 %v4485
      %v4988 = vpop.f32.mrf.mxu0
      %v4989 = vadd.f32 0.0, %v4988
      %v4990 = vpop.f32.mrf.mxu0
      %v4991 = vadd.f32 0.0, %v4990
      %4992 = vdwg.mxu0
      %4993 = vmatprep.subr.mxu0 %v3956
      %4994 = vmatpush1.msra.mxu0 %v3955
      %4995 = vmatprep.subr.mxu0 %v3954
      %4996 = vmatpush1.msra.mxu0 %v3953
      %4997 = vmatprep.subr.mxu0 %v3952
      %4998 = vmatpush1.msra.mxu0 %v3951
      %4999 = vmatprep.subr.mxu0 %v3950
      %5000 = vmatpush1.msra.mxu0 %v3949
      %5001 = vmatprep.subr.mxu0 %v3948
      %5002 = vmatpush1.msra.mxu0 %v3947
      %5003 = vmatprep.subr.mxu0 %v3946
      %5004 = vmatpush1.msra.mxu0 %v3945
      %5005 = vmatprep.subr.mxu0 %v3944
      %5006 = vmatpush1.msra.mxu0 %v3943
      %5007 = vmatprep.subr.mxu0 %v3942
      %5008 = vmatpush1.msra.mxu0 %v3941
      %5009 = vmatprep.subr.mxu0 %v3940
      %5010 = vmatpush1.msra.mxu0 %v3939
      %5011 = vmatprep.subr.mxu0 %v3938
      %5012 = vmatpush1.msra.mxu0 %v3937
      %5013 = vmatprep.subr.mxu0 %v3936
      %5014 = vmatpush1.msra.mxu0 %v3935
      %5015 = vmatprep.subr.mxu0 %v3934
      %5016 = vmatpush1.msra.mxu0 %v3933
      %5017 = vmatprep.subr.mxu0 %v3932
      %5018 = vmatpush1.msra.mxu0 %v3931
      %5019 = vmatprep.subr.mxu0 %v3930
      %5020 = vmatpush1.msra.mxu0 %v3929
      %5021 = vmatprep.subr.mxu0 %v3928
      %5022 = vmatpush1.msra.mxu0 %v3927
      %5023 = vmatprep.subr.mxu0 %v3926
      %5024 = vmatpush1.msra.mxu0 %v3925
      %5025 = vmatprep.subr.mxu0 %v3988
      %5026 = vmatpush2.msra.mxu0 %v3987
      %5027 = vmatprep.subr.mxu0 %v3986
      %5028 = vmatpush2.msra.mxu0 %v3985
      %5029 = vmatprep.subr.mxu0 %v3984
      %5030 = vmatpush2.msra.mxu0 %v3983
      %5031 = vmatprep.subr.mxu0 %v3982
      %5032 = vmatpush2.msra.mxu0 %v3981
      %5033 = vmatprep.subr.mxu0 %v3980
      %5034 = vmatpush2.msra.mxu0 %v3979
      %5035 = vmatprep.subr.mxu0 %v3978
      %5036 = vmatpush2.msra.mxu0 %v3977
      %5037 = vmatprep.subr.mxu0 %v3976
      %5038 = vmatpush2.msra.mxu0 %v3975
      %5039 = vmatprep.subr.mxu0 %v3974
      %5040 = vmatpush2.msra.mxu0 %v3973
      %5041 = vmatprep.subr.mxu0 %v3972
      %5042 = vmatpush2.msra.mxu0 %v3971
      %5043 = vmatprep.subr.mxu0 %v3970
      %5044 = vmatpush2.msra.mxu0 %v3969
      %5045 = vmatprep.subr.mxu0 %v3968
      %5046 = vmatpush2.msra.mxu0 %v3967
      %5047 = vmatprep.subr.mxu0 %v3966
      %5048 = vmatpush2.msra.mxu0 %v3965
      %5049 = vmatprep.subr.mxu0 %v3964
      %5050 = vmatpush2.msra.mxu0 %v3963
      %5051 = vmatprep.subr.mxu0 %v3962
      %5052 = vmatpush2.msra.mxu0 %v3961
      %5053 = vmatprep.subr.mxu0 %v3960
      %5054 = vmatpush2.msra.mxu0 %v3959
      %5055 = vmatprep.subr.mxu0 %v3958
      %5056 = vmatpush2.msra.mxu0 %v3957
      %5057 = vmatprep.mubr.f32.mxu0 %v4069
      %5058 = vmatmul.mubr.f32.gmra.mxu0 %v4066
      %v5059 = vpop.f32.mrf.mxu0
      %v5060 = vadd.f32 %v4779, %v5059
      %v5061 = vpop.f32.mrf.mxu0
      %v5062 = vadd.f32 %v4781, %v5061
      %5063 = vmatprep.mubr.f32.mxu0 %v4083
      %5064 = vmatmul.mubr.f32.gmra.mxu0 %v4081
      %v5065 = vpop.f32.mrf.mxu0
      %v5066 = vadd.f32 %v4785, %v5065
      %v5067 = vpop.f32.mrf.mxu0
      %v5068 = vadd.f32 %v4787, %v5067
      %5069 = vmatprep.mubr.f32.mxu0 %v4095
      %5070 = vmatmul.mubr.f32.gmra.mxu0 %v4093
      %v5071 = vpop.f32.mrf.mxu0
      %v5072 = vadd.f32 %v4791, %v5071
      %v5073 = vpop.f32.mrf.mxu0
      %v5074 = vadd.f32 %v4793, %v5073
      %5075 = vmatprep.mubr.f32.mxu0 %v4107
      %5076 = vmatmul.mubr.f32.gmra.mxu0 %v4105
      %v5077 = vpop.f32.mrf.mxu0
      %v5078 = vadd.f32 %v4797, %v5077
      %v5079 = vpop.f32.mrf.mxu0
      %v5080 = vadd.f32 %v4799, %v5079
      %5081 = vmatprep.mubr.f32.mxu0 %v4119
      %5082 = vmatmul.mubr.f32.gmra.mxu0 %v4117
      %v5083 = vpop.f32.mrf.mxu0
      %v5084 = vadd.f32 %v4803, %v5083
      %v5085 = vpop.f32.mrf.mxu0
      %v5086 = vadd.f32 %v4805, %v5085
      %5087 = vmatprep.mubr.f32.mxu0 %v4131
      %5088 = vmatmul.mubr.f32.gmra.mxu0 %v4129
      %v5089 = vpop.f32.mrf.mxu0
      %v5090 = vadd.f32 %v4809, %v5089
      %v5091 = vpop.f32.mrf.mxu0
      %v5092 = vadd.f32 %v4811, %v5091
      %5093 = vmatprep.mubr.f32.mxu0 %v4143
      %5094 = vmatmul.mubr.f32.gmra.mxu0 %v4141
      %v5095 = vpop.f32.mrf.mxu0
      %v5096 = vadd.f32 %v4815, %v5095
      %v5097 = vpop.f32.mrf.mxu0
      %v5098 = vadd.f32 %v4817, %v5097
      %5099 = vmatprep.mubr.f32.mxu0 %v4155
      %5100 = vmatmul.mubr.f32.gmra.mxu0 %v4153
      %v5101 = vpop.f32.mrf.mxu0
      %v5102 = vadd.f32 %v4821, %v5101
      %v5103 = vpop.f32.mrf.mxu0
      %v5104 = vadd.f32 %v4823, %v5103
      %5105 = vmatprep.mubr.f32.mxu0 %v4167
      %5106 = vmatmul.mubr.f32.gmra.mxu0 %v4165
      %v5107 = vpop.f32.mrf.mxu0
      %v5108 = vadd.f32 %v4827, %v5107
      %v5109 = vpop.f32.mrf.mxu0
      %v5110 = vadd.f32 %v4829, %v5109
      %5111 = vmatprep.mubr.f32.mxu0 %v4179
      %5112 = vmatmul.mubr.f32.gmra.mxu0 %v4177
      %v5113 = vpop.f32.mrf.mxu0
      %v5114 = vadd.f32 %v4833, %v5113
      %v5115 = vpop.f32.mrf.mxu0
      %v5116 = vadd.f32 %v4835, %v5115
      %5117 = vmatprep.mubr.f32.mxu0 %v4191
      %5118 = vmatmul.mubr.f32.gmra.mxu0 %v4189
      %v5119 = vpop.f32.mrf.mxu0
      %v5120 = vadd.f32 %v4839, %v5119
      %v5121 = vpop.f32.mrf.mxu0
      %v5122 = vadd.f32 %v4841, %v5121
      %5123 = vmatprep.mubr.f32.mxu0 %v4203
      %5124 = vmatmul.mubr.f32.gmra.mxu0 %v4201
      %v5125 = vpop.f32.mrf.mxu0
      %v5126 = vadd.f32 %v4845, %v5125
      %v5127 = vpop.f32.mrf.mxu0
      %v5128 = vadd.f32 %v4847, %v5127
      %5129 = vmatprep.mubr.f32.mxu0 %v4215
      %5130 = vmatmul.mubr.f32.gmra.mxu0 %v4213
      %v5131 = vpop.f32.mrf.mxu0
      %v5132 = vadd.f32 %v4851, %v5131
      %v5133 = vpop.f32.mrf.mxu0
      %v5134 = vadd.f32 %v4853, %v5133
      %5135 = vmatprep.mubr.f32.mxu0 %v4227
      %5136 = vmatmul.mubr.f32.gmra.mxu0 %v4225
      %v5137 = vpop.f32.mrf.mxu0
      %v5138 = vadd.f32 %v4857, %v5137
      %v5139 = vpop.f32.mrf.mxu0
      %v5140 = vadd.f32 %v4859, %v5139
      %5141 = vmatprep.mubr.f32.mxu0 %v4239
      %5142 = vmatmul.mubr.f32.gmra.mxu0 %v4237
      %v5143 = vpop.f32.mrf.mxu0
      %v5144 = vadd.f32 %v4863, %v5143
      %v5145 = vpop.f32.mrf.mxu0
      %v5146 = vadd.f32 %v4865, %v5145
      %5147 = vmatprep.mubr.f32.mxu0 %v4251
      %5148 = vmatmul.mubr.f32.gmra.mxu0 %v4249
      %v5149 = vpop.f32.mrf.mxu0
      %v5150 = vadd.f32 %v4869, %v5149
      %v5151 = vpop.f32.mrf.mxu0
      %v5152 = vadd.f32 %v4871, %v5151
      %5153 = vmatprep.mubr.f32.mxu0 %v4263
      %5154 = vmatmul.mubr.f32.gmra.mxu0 %v4261
      %v5155 = vpop.f32.mrf.mxu0
      %v5156 = vadd.f32 %v4875, %v5155
      %v5157 = vpop.f32.mrf.mxu0
      %v5158 = vadd.f32 %v4877, %v5157
      %5159 = vmatprep.mubr.f32.mxu0 %v4275
      %5160 = vmatmul.mubr.f32.gmra.mxu0 %v4273
      %v5161 = vpop.f32.mrf.mxu0
      %v5162 = vadd.f32 %v4881, %v5161
      %v5163 = vpop.f32.mrf.mxu0
      %v5164 = vadd.f32 %v4883, %v5163
      %5165 = vmatprep.mubr.f32.mxu0 %v4287
      %5166 = vmatmul.mubr.f32.gmra.mxu0 %v4285
      %v5167 = vpop.f32.mrf.mxu0
      %v5168 = vadd.f32 %v4887, %v5167
      %v5169 = vpop.f32.mrf.mxu0
      %v5170 = vadd.f32 %v4889, %v5169
      %5171 = vmatprep.mubr.f32.mxu0 %v4299
      %5172 = vmatmul.mubr.f32.gmra.mxu0 %v4297
      %v5173 = vpop.f32.mrf.mxu0
      %v5174 = vadd.f32 %v4893, %v5173
      %v5175 = vpop.f32.mrf.mxu0
      %v5176 = vadd.f32 %v4895, %v5175
      %5177 = vmatprep.mubr.f32.mxu0 %v4311
      %5178 = vmatmul.mubr.f32.gmra.mxu0 %v4309
      %v5179 = vpop.f32.mrf.mxu0
      %v5180 = vadd.f32 %v4899, %v5179
      %v5181 = vpop.f32.mrf.mxu0
      %v5182 = vadd.f32 %v4901, %v5181
      %5183 = vmatprep.mubr.f32.mxu0 %v4323
      %5184 = vmatmul.mubr.f32.gmra.mxu0 %v4321
      %v5185 = vpop.f32.mrf.mxu0
      %v5186 = vadd.f32 %v4905, %v5185
      %v5187 = vpop.f32.mrf.mxu0
      %v5188 = vadd.f32 %v4907, %v5187
      %5189 = vmatprep.mubr.f32.mxu0 %v4335
      %5190 = vmatmul.mubr.f32.gmra.mxu0 %v4333
      %v5191 = vpop.f32.mrf.mxu0
      %v5192 = vadd.f32 %v4911, %v5191
      %v5193 = vpop.f32.mrf.mxu0
      %v5194 = vadd.f32 %v4913, %v5193
      %5195 = vmatprep.mubr.f32.mxu0 %v4347
      %5196 = vmatmul.mubr.f32.gmra.mxu0 %v4345
      %v5197 = vpop.f32.mrf.mxu0
      %v5198 = vadd.f32 %v4917, %v5197
      %v5199 = vpop.f32.mrf.mxu0
      %v5200 = vadd.f32 %v4919, %v5199
      %5201 = vmatprep.mubr.f32.mxu0 %v4359
      %5202 = vmatmul.mubr.f32.gmra.mxu0 %v4357
      %v5203 = vpop.f32.mrf.mxu0
      %v5204 = vadd.f32 %v4923, %v5203
      %v5205 = vpop.f32.mrf.mxu0
      %v5206 = vadd.f32 %v4925, %v5205
      %5207 = vmatprep.mubr.f32.mxu0 %v4371
      %5208 = vmatmul.mubr.f32.gmra.mxu0 %v4369
      %v5209 = vpop.f32.mrf.mxu0
      %v5210 = vadd.f32 %v4929, %v5209
      %v5211 = vpop.f32.mrf.mxu0
      %v5212 = vadd.f32 %v4931, %v5211
      %5213 = vmatprep.mubr.f32.mxu0 %v4383
      %5214 = vmatmul.mubr.f32.gmra.mxu0 %v4381
      %v5215 = vpop.f32.mrf.mxu0
      %v5216 = vadd.f32 %v4935, %v5215
      %v5217 = vpop.f32.mrf.mxu0
      %v5218 = vadd.f32 %v4937, %v5217
      %5219 = vmatprep.mubr.f32.mxu0 %v4395
      %5220 = vmatmul.mubr.f32.gmra.mxu0 %v4393
      %v5221 = vpop.f32.mrf.mxu0
      %v5222 = vadd.f32 %v4941, %v5221
      %v5223 = vpop.f32.mrf.mxu0
      %v5224 = vadd.f32 %v4943, %v5223
      %5225 = vmatprep.mubr.f32.mxu0 %v4407
      %5226 = vmatmul.mubr.f32.gmra.mxu0 %v4405
      %v5227 = vpop.f32.mrf.mxu0
      %v5228 = vadd.f32 %v4947, %v5227
      %v5229 = vpop.f32.mrf.mxu0
      %v5230 = vadd.f32 %v4949, %v5229
      %5231 = vmatprep.mubr.f32.mxu0 %v4419
      %5232 = vmatmul.mubr.f32.gmra.mxu0 %v4417
      %v5233 = vpop.f32.mrf.mxu0
      %v5234 = vadd.f32 %v4953, %v5233
      %v5235 = vpop.f32.mrf.mxu0
      %v5236 = vadd.f32 %v4955, %v5235
      %5237 = vmatprep.mubr.f32.mxu0 %v4431
      %5238 = vmatmul.mubr.f32.gmra.mxu0 %v4429
      %v5239 = vpop.f32.mrf.mxu0
      %v5240 = vadd.f32 %v4959, %v5239
      %v5241 = vpop.f32.mrf.mxu0
      %v5242 = vadd.f32 %v4961, %v5241
      %5243 = vmatprep.mubr.f32.mxu0 %v4443
      %5244 = vmatmul.mubr.f32.gmra.mxu0 %v4441
      %v5245 = vpop.f32.mrf.mxu0
      %v5246 = vadd.f32 %v4965, %v5245
      %v5247 = vpop.f32.mrf.mxu0
      %v5248 = vadd.f32 %v4967, %v5247
      %5249 = vmatprep.mubr.f32.mxu0 %v4455
      %5250 = vmatmul.mubr.f32.gmra.mxu0 %v4453
      %v5251 = vpop.f32.mrf.mxu0
      %v5252 = vadd.f32 %v4971, %v5251
      %v5253 = vpop.f32.mrf.mxu0
      %v5254 = vadd.f32 %v4973, %v5253
      %5255 = vmatprep.mubr.f32.mxu0 %v4467
      %5256 = vmatmul.mubr.f32.gmra.mxu0 %v4465
      %v5257 = vpop.f32.mrf.mxu0
      %v5258 = vadd.f32 %v4977, %v5257
      %v5259 = vpop.f32.mrf.mxu0
      %v5260 = vadd.f32 %v4979, %v5259
      %5261 = vmatprep.mubr.f32.mxu0 %v4479
      %5262 = vmatmul.mubr.f32.gmra.mxu0 %v4477
      %v5263 = vpop.f32.mrf.mxu0
      %v5264 = vadd.f32 %v4983, %v5263
      %v5265 = vpop.f32.mrf.mxu0
      %v5266 = vadd.f32 %v4985, %v5265
      %5267 = vmatprep.mubr.f32.mxu0 %v4491
      %5268 = vmatmul.mubr.f32.gmra.mxu0 %v4489
      %v5269 = vpop.f32.mrf.mxu0
      %v5270 = vadd.f32 %v4989, %v5269
      %v5271 = vpop.f32.mrf.mxu0
      %v5272 = vadd.f32 %v4991, %v5271
      %5273 = vdwg.mxu0
      %5274 = vmatprep.subr.mxu0 %v4020
      %5275 = vmatpush1.msra.mxu0 %v4019
      %5276 = vmatprep.subr.mxu0 %v4018
      %5277 = vmatpush1.msra.mxu0 %v4017
      %5278 = vmatprep.subr.mxu0 %v4016
      %5279 = vmatpush1.msra.mxu0 %v4015
      %5280 = vmatprep.subr.mxu0 %v4014
      %5281 = vmatpush1.msra.mxu0 %v4013
      %5282 = vmatprep.subr.mxu0 %v4012
      %5283 = vmatpush1.msra.mxu0 %v4011
      %5284 = vmatprep.subr.mxu0 %v4010
      %5285 = vmatpush1.msra.mxu0 %v4009
      %5286 = vmatprep.subr.mxu0 %v4008
      %5287 = vmatpush1.msra.mxu0 %v4007
      %5288 = vmatprep.subr.mxu0 %v4006
      %5289 = vmatpush1.msra.mxu0 %v4005
      %5290 = vmatprep.subr.mxu0 %v4004
      %5291 = vmatpush1.msra.mxu0 %v4003
      %5292 = vmatprep.subr.mxu0 %v4002
      %5293 = vmatpush1.msra.mxu0 %v4001
      %5294 = vmatprep.subr.mxu0 %v4000
      %5295 = vmatpush1.msra.mxu0 %v3999
      %5296 = vmatprep.subr.mxu0 %v3998
      %5297 = vmatpush1.msra.mxu0 %v3997
      %5298 = vmatprep.subr.mxu0 %v3996
      %5299 = vmatpush1.msra.mxu0 %v3995
      %5300 = vmatprep.subr.mxu0 %v3994
      %5301 = vmatpush1.msra.mxu0 %v3993
      %5302 = vmatprep.subr.mxu0 %v3992
      %5303 = vmatpush1.msra.mxu0 %v3991
      %5304 = vmatprep.subr.mxu0 %v3990
      %5305 = vmatpush1.msra.mxu0 %v3989
      %5306 = vmatprep.subr.mxu0 %v4052
      %5307 = vmatpush2.msra.mxu0 %v4051
      %5308 = vmatprep.subr.mxu0 %v4050
      %5309 = vmatpush2.msra.mxu0 %v4049
      %5310 = vmatprep.subr.mxu0 %v4048
      %5311 = vmatpush2.msra.mxu0 %v4047
      %5312 = vmatprep.subr.mxu0 %v4046
      %5313 = vmatpush2.msra.mxu0 %v4045
      %5314 = vmatprep.subr.mxu0 %v4044
      %5315 = vmatpush2.msra.mxu0 %v4043
      %5316 = vmatprep.subr.mxu0 %v4042
      %5317 = vmatpush2.msra.mxu0 %v4041
      %5318 = vmatprep.subr.mxu0 %v4040
      %5319 = vmatpush2.msra.mxu0 %v4039
      %5320 = vmatprep.subr.mxu0 %v4038
      %5321 = vmatpush2.msra.mxu0 %v4037
      %5322 = vmatprep.subr.mxu0 %v4036
      %5323 = vmatpush2.msra.mxu0 %v4035
      %5324 = vmatprep.subr.mxu0 %v4034
      %5325 = vmatpush2.msra.mxu0 %v4033
      %5326 = vmatprep.subr.mxu0 %v4032
      %5327 = vmatpush2.msra.mxu0 %v4031
      %5328 = vmatprep.subr.mxu0 %v4030
      %5329 = vmatpush2.msra.mxu0 %v4029
      %5330 = vmatprep.subr.mxu0 %v4028
      %5331 = vmatpush2.msra.mxu0 %v4027
      %5332 = vmatprep.subr.mxu0 %v4026
      %5333 = vmatpush2.msra.mxu0 %v4025
      %5334 = vmatprep.subr.mxu0 %v4024
      %5335 = vmatpush2.msra.mxu0 %v4023
      %5336 = vmatprep.subr.mxu0 %v4022
      %5337 = vmatpush2.msra.mxu0 %v4021
      %5338 = vmatprep.mubr.f32.mxu0 %v4075
      %5339 = vmatmul.mubr.f32.gmra.mxu0 %v4072
      %v5340 = vpop.f32.mrf.mxu0
      %v5341 = vadd.f32 %v5060, %v5340
      %v5342 = vpop.f32.mrf.mxu0
      %v5343 = vadd.f32 %v5062, %v5342
      %5344 = vmatprep.mubr.f32.mxu0 %v4087
      %5345 = vmatmul.mubr.f32.gmra.mxu0 %v4085
      %v5346 = vpop.f32.mrf.mxu0
      %v5347 = vadd.f32 %v5066, %v5346
      %v5348 = vpop.f32.mrf.mxu0
      %v5349 = vadd.f32 %v5068, %v5348
      %5350 = vmatprep.mubr.f32.mxu0 %v4099
      %5351 = vmatmul.mubr.f32.gmra.mxu0 %v4097
      %v5352 = vpop.f32.mrf.mxu0
      %v5353 = vadd.f32 %v5072, %v5352
      %v5354 = vpop.f32.mrf.mxu0
      %v5355 = vadd.f32 %v5074, %v5354
      %5356 = vmatprep.mubr.f32.mxu0 %v4111
      %5357 = vmatmul.mubr.f32.gmra.mxu0 %v4109
      %v5358 = vpop.f32.mrf.mxu0
      %v5359 = vadd.f32 %v5078, %v5358
      %v5360 = vpop.f32.mrf.mxu0
      %v5361 = vadd.f32 %v5080, %v5360
      %5362 = vmatprep.mubr.f32.mxu0 %v4123
      %5363 = vmatmul.mubr.f32.gmra.mxu0 %v4121
      %v5364 = vpop.f32.mrf.mxu0
      %v5365 = vadd.f32 %v5084, %v5364
      %v5366 = vpop.f32.mrf.mxu0
      %v5367 = vadd.f32 %v5086, %v5366
      %5368 = vmatprep.mubr.f32.mxu0 %v4135
      %5369 = vmatmul.mubr.f32.gmra.mxu0 %v4133
      %v5370 = vpop.f32.mrf.mxu0
      %v5371 = vadd.f32 %v5090, %v5370
      %v5372 = vpop.f32.mrf.mxu0
      %v5373 = vadd.f32 %v5092, %v5372
      %5374 = vmatprep.mubr.f32.mxu0 %v4147
      %5375 = vmatmul.mubr.f32.gmra.mxu0 %v4145
      %v5376 = vpop.f32.mrf.mxu0
      %v5377 = vadd.f32 %v5096, %v5376
      %v5378 = vpop.f32.mrf.mxu0
      %v5379 = vadd.f32 %v5098, %v5378
      %5380 = vmatprep.mubr.f32.mxu0 %v4159
      %5381 = vmatmul.mubr.f32.gmra.mxu0 %v4157
      %v5382 = vpop.f32.mrf.mxu0
      %v5383 = vadd.f32 %v5102, %v5382
      %v5384 = vpop.f32.mrf.mxu0
      %v5385 = vadd.f32 %v5104, %v5384
      %5386 = vmatprep.mubr.f32.mxu0 %v4171
      %5387 = vmatmul.mubr.f32.gmra.mxu0 %v4169
      %v5388 = vpop.f32.mrf.mxu0
      %v5389 = vadd.f32 %v5108, %v5388
      %v5390 = vpop.f32.mrf.mxu0
      %v5391 = vadd.f32 %v5110, %v5390
      %5392 = vmatprep.mubr.f32.mxu0 %v4183
      %5393 = vmatmul.mubr.f32.gmra.mxu0 %v4181
      %v5394 = vpop.f32.mrf.mxu0
      %v5395 = vadd.f32 %v5114, %v5394
      %v5396 = vpop.f32.mrf.mxu0
      %v5397 = vadd.f32 %v5116, %v5396
      %5398 = vmatprep.mubr.f32.mxu0 %v4195
      %5399 = vmatmul.mubr.f32.gmra.mxu0 %v4193
      %v5400 = vpop.f32.mrf.mxu0
      %v5401 = vadd.f32 %v5120, %v5400
      %v5402 = vpop.f32.mrf.mxu0
      %v5403 = vadd.f32 %v5122, %v5402
      %5404 = vmatprep.mubr.f32.mxu0 %v4207
      %5405 = vmatmul.mubr.f32.gmra.mxu0 %v4205
      %v5406 = vpop.f32.mrf.mxu0
      %v5407 = vadd.f32 %v5126, %v5406
      %v5408 = vpop.f32.mrf.mxu0
      %v5409 = vadd.f32 %v5128, %v5408
      %5410 = vmatprep.mubr.f32.mxu0 %v4219
      %5411 = vmatmul.mubr.f32.gmra.mxu0 %v4217
      %v5412 = vpop.f32.mrf.mxu0
      %v5413 = vadd.f32 %v5132, %v5412
      %v5414 = vpop.f32.mrf.mxu0
      %v5415 = vadd.f32 %v5134, %v5414
      %5416 = vmatprep.mubr.f32.mxu0 %v4231
      %5417 = vmatmul.mubr.f32.gmra.mxu0 %v4229
      %v5418 = vpop.f32.mrf.mxu0
      %v5419 = vadd.f32 %v5138, %v5418
      %v5420 = vpop.f32.mrf.mxu0
      %v5421 = vadd.f32 %v5140, %v5420
      %5422 = vmatprep.mubr.f32.mxu0 %v4243
      %5423 = vmatmul.mubr.f32.gmra.mxu0 %v4241
      %v5424 = vpop.f32.mrf.mxu0
      %v5425 = vadd.f32 %v5144, %v5424
      %v5426 = vpop.f32.mrf.mxu0
      %v5427 = vadd.f32 %v5146, %v5426
      %5428 = vmatprep.mubr.f32.mxu0 %v4255
      %5429 = vmatmul.mubr.f32.gmra.mxu0 %v4253
      %v5430 = vpop.f32.mrf.mxu0
      %v5431 = vadd.f32 %v5150, %v5430
      %v5432 = vpop.f32.mrf.mxu0
      %v5433 = vadd.f32 %v5152, %v5432
      %5434 = vmatprep.mubr.f32.mxu0 %v4267
      %5435 = vmatmul.mubr.f32.gmra.mxu0 %v4265
      %v5436 = vpop.f32.mrf.mxu0
      %v5437 = vadd.f32 %v5156, %v5436
      %v5438 = vpop.f32.mrf.mxu0
      %v5439 = vadd.f32 %v5158, %v5438
      %5440 = vmatprep.mubr.f32.mxu0 %v4279
      %5441 = vmatmul.mubr.f32.gmra.mxu0 %v4277
      %v5442 = vpop.f32.mrf.mxu0
      %v5443 = vadd.f32 %v5162, %v5442
      %v5444 = vpop.f32.mrf.mxu0
      %v5445 = vadd.f32 %v5164, %v5444
      %5446 = vmatprep.mubr.f32.mxu0 %v4291
      %5447 = vmatmul.mubr.f32.gmra.mxu0 %v4289
      %v5448 = vpop.f32.mrf.mxu0
      %v5449 = vadd.f32 %v5168, %v5448
      %v5450 = vpop.f32.mrf.mxu0
      %v5451 = vadd.f32 %v5170, %v5450
      %5452 = vmatprep.mubr.f32.mxu0 %v4303
      %5453 = vmatmul.mubr.f32.gmra.mxu0 %v4301
      %v5454 = vpop.f32.mrf.mxu0
      %v5455 = vadd.f32 %v5174, %v5454
      %v5456 = vpop.f32.mrf.mxu0
      %v5457 = vadd.f32 %v5176, %v5456
      %5458 = vmatprep.mubr.f32.mxu0 %v4315
      %5459 = vmatmul.mubr.f32.gmra.mxu0 %v4313
      %v5460 = vpop.f32.mrf.mxu0
      %v5461 = vadd.f32 %v5180, %v5460
      %v5462 = vpop.f32.mrf.mxu0
      %v5463 = vadd.f32 %v5182, %v5462
      %5464 = vmatprep.mubr.f32.mxu0 %v4327
      %5465 = vmatmul.mubr.f32.gmra.mxu0 %v4325
      %v5466 = vpop.f32.mrf.mxu0
      %v5467 = vadd.f32 %v5186, %v5466
      %v5468 = vpop.f32.mrf.mxu0
      %v5469 = vadd.f32 %v5188, %v5468
      %5470 = vmatprep.mubr.f32.mxu0 %v4339
      %5471 = vmatmul.mubr.f32.gmra.mxu0 %v4337
      %v5472 = vpop.f32.mrf.mxu0
      %v5473 = vadd.f32 %v5192, %v5472
      %v5474 = vpop.f32.mrf.mxu0
      %v5475 = vadd.f32 %v5194, %v5474
      %5476 = vmatprep.mubr.f32.mxu0 %v4351
      %5477 = vmatmul.mubr.f32.gmra.mxu0 %v4349
      %v5478 = vpop.f32.mrf.mxu0
      %v5479 = vadd.f32 %v5198, %v5478
      %v5480 = vpop.f32.mrf.mxu0
      %v5481 = vadd.f32 %v5200, %v5480
      %5482 = vmatprep.mubr.f32.mxu0 %v4363
      %5483 = vmatmul.mubr.f32.gmra.mxu0 %v4361
      %v5484 = vpop.f32.mrf.mxu0
      %v5485 = vadd.f32 %v5204, %v5484
      %v5486 = vpop.f32.mrf.mxu0
      %v5487 = vadd.f32 %v5206, %v5486
      %5488 = vmatprep.mubr.f32.mxu0 %v4375
      %5489 = vmatmul.mubr.f32.gmra.mxu0 %v4373
      %v5490 = vpop.f32.mrf.mxu0
      %v5491 = vadd.f32 %v5210, %v5490
      %v5492 = vpop.f32.mrf.mxu0
      %v5493 = vadd.f32 %v5212, %v5492
      %5494 = vmatprep.mubr.f32.mxu0 %v4387
      %5495 = vmatmul.mubr.f32.gmra.mxu0 %v4385
      %v5496 = vpop.f32.mrf.mxu0
      %v5497 = vadd.f32 %v5216, %v5496
      %v5498 = vpop.f32.mrf.mxu0
      %v5499 = vadd.f32 %v5218, %v5498
      %5500 = vmatprep.mubr.f32.mxu0 %v4399
      %5501 = vmatmul.mubr.f32.gmra.mxu0 %v4397
      %v5502 = vpop.f32.mrf.mxu0
      %v5503 = vadd.f32 %v5222, %v5502
      %v5504 = vpop.f32.mrf.mxu0
      %v5505 = vadd.f32 %v5224, %v5504
      %5506 = vmatprep.mubr.f32.mxu0 %v4411
      %5507 = vmatmul.mubr.f32.gmra.mxu0 %v4409
      %v5508 = vpop.f32.mrf.mxu0
      %v5509 = vadd.f32 %v5228, %v5508
      %v5510 = vpop.f32.mrf.mxu0
      %v5511 = vadd.f32 %v5230, %v5510
      %5512 = vmatprep.mubr.f32.mxu0 %v4423
      %5513 = vmatmul.mubr.f32.gmra.mxu0 %v4421
      %v5514 = vpop.f32.mrf.mxu0
      %v5515 = vadd.f32 %v5234, %v5514
      %v5516 = vpop.f32.mrf.mxu0
      %v5517 = vadd.f32 %v5236, %v5516
      %5518 = vmatprep.mubr.f32.mxu0 %v4435
      %5519 = vmatmul.mubr.f32.gmra.mxu0 %v4433
      %v5520 = vpop.f32.mrf.mxu0
      %v5521 = vadd.f32 %v5240, %v5520
      %v5522 = vpop.f32.mrf.mxu0
      %v5523 = vadd.f32 %v5242, %v5522
      %5524 = vmatprep.mubr.f32.mxu0 %v4447
      %5525 = vmatmul.mubr.f32.gmra.mxu0 %v4445
      %v5526 = vpop.f32.mrf.mxu0
      %v5527 = vadd.f32 %v5246, %v5526
      %v5528 = vpop.f32.mrf.mxu0
      %v5529 = vadd.f32 %v5248, %v5528
      %5530 = vmatprep.mubr.f32.mxu0 %v4459
      %5531 = vmatmul.mubr.f32.gmra.mxu0 %v4457
      %v5532 = vpop.f32.mrf.mxu0
      %v5533 = vadd.f32 %v5252, %v5532
      %v5534 = vpop.f32.mrf.mxu0
      %v5535 = vadd.f32 %v5254, %v5534
      %5536 = vmatprep.mubr.f32.mxu0 %v4471
      %5537 = vmatmul.mubr.f32.gmra.mxu0 %v4469
      %v5538 = vpop.f32.mrf.mxu0
      %v5539 = vadd.f32 %v5258, %v5538
      %v5540 = vpop.f32.mrf.mxu0
      %v5541 = vadd.f32 %v5260, %v5540
      %5542 = vmatprep.mubr.f32.mxu0 %v4483
      %5543 = vmatmul.mubr.f32.gmra.mxu0 %v4481
      %v5544 = vpop.f32.mrf.mxu0
      %v5545 = vadd.f32 %v5264, %v5544
      %v5546 = vpop.f32.mrf.mxu0
      %v5547 = vadd.f32 %v5266, %v5546
      %5548 = vmatprep.mubr.f32.mxu0 %v4495
      %5549 = vmatmul.mubr.f32.gmra.mxu0 %v4493
      %v5550 = vpop.f32.mrf.mxu0
      %v5551 = vadd.f32 %v5270, %v5550
      %v5552 = vpop.f32.mrf.mxu0
      %v5553 = vadd.f32 %v5272, %v5552
      %5554 = vdwg.mxu0
      %v5555 = vadd.f32 %v3194, %v5341
      %v5556 = vadd.f32 %v3196, %v5343
      %v5557 = vadd.f32 %v3200, %v5347
      %v5558 = vadd.f32 %v3202, %v5349
      %v5559 = vadd.f32 %v3206, %v5353
      %v5560 = vadd.f32 %v3208, %v5355
      %v5561 = vadd.f32 %v3212, %v5359
      %v5562 = vadd.f32 %v3214, %v5361
      %v5563 = vadd.f32 %v3218, %v5365
      %v5564 = vadd.f32 %v3220, %v5367
      %v5565 = vadd.f32 %v3224, %v5371
      %v5566 = vadd.f32 %v3226, %v5373
      %v5567 = vadd.f32 %v3230, %v5377
      %v5568 = vadd.f32 %v3232, %v5379
      %v5569 = vadd.f32 %v3236, %v5383
      %v5570 = vadd.f32 %v3238, %v5385
      %v5571 = vadd.f32 %v3242, %v5389
      %v5572 = vadd.f32 %v3244, %v5391
      %v5573 = vadd.f32 %v3248, %v5395
      %v5574 = vadd.f32 %v3250, %v5397
      %v5575 = vadd.f32 %v3254, %v5401
      %v5576 = vadd.f32 %v3256, %v5403
      %v5577 = vadd.f32 %v3260, %v5407
      %v5578 = vadd.f32 %v3262, %v5409
      %v5579 = vadd.f32 %v3266, %v5413
      %v5580 = vadd.f32 %v3268, %v5415
      %v5581 = vadd.f32 %v3272, %v5419
      %v5582 = vadd.f32 %v3274, %v5421
      %v5583 = vadd.f32 %v3278, %v5425
      %v5584 = vadd.f32 %v3280, %v5427
      %v5585 = vadd.f32 %v3284, %v5431
      %v5586 = vadd.f32 %v3286, %v5433
      %v5587 = vadd.f32 %v3290, %v5437
      %v5588 = vadd.f32 %v3292, %v5439
      %v5589 = vadd.f32 %v3296, %v5443
      %v5590 = vadd.f32 %v3298, %v5445
      %v5591 = vadd.f32 %v3302, %v5449
      %v5592 = vadd.f32 %v3304, %v5451
      %v5593 = vadd.f32 %v3308, %v5455
      %v5594 = vadd.f32 %v3310, %v5457
      %v5595 = vadd.f32 %v3314, %v5461
      %v5596 = vadd.f32 %v3316, %v5463
      %v5597 = vadd.f32 %v3320, %v5467
      %v5598 = vadd.f32 %v3322, %v5469
      %v5599 = vadd.f32 %v3326, %v5473
      %v5600 = vadd.f32 %v3328, %v5475
      %v5601 = vadd.f32 %v3332, %v5479
      %v5602 = vadd.f32 %v3334, %v5481
      %v5603 = vadd.f32 %v3338, %v5485
      %v5604 = vadd.f32 %v3340, %v5487
      %v5605 = vadd.f32 %v3344, %v5491
      %v5606 = vadd.f32 %v3346, %v5493
      %v5607 = vadd.f32 %v3350, %v5497
      %v5608 = vadd.f32 %v3352, %v5499
      %v5609 = vadd.f32 %v3356, %v5503
      %v5610 = vadd.f32 %v3358, %v5505
      %v5611 = vadd.f32 %v3362, %v5509
      %v5612 = vadd.f32 %v3364, %v5511
      %v5613 = vadd.f32 %v3368, %v5515
      %v5614 = vadd.f32 %v3370, %v5517
      %v5615 = vadd.f32 %v3374, %v5521
      %v5616 = vadd.f32 %v3376, %v5523
      %v5617 = vadd.f32 %v3380, %v5527
      %v5618 = vadd.f32 %v3382, %v5529
      %v5619 = vadd.f32 %v3386, %v5533
      %v5620 = vadd.f32 %v3388, %v5535
      %v5621 = vadd.f32 %v3392, %v5539
      %v5622 = vadd.f32 %v3394, %v5541
      %v5623 = vadd.f32 %v3398, %v5545
      %v5624 = vadd.f32 %v3400, %v5547
      %v5625 = vadd.f32 %v3404, %v5551
      %v5626 = vadd.f32 %v3406, %v5553
      %v5627 = vld [vmem:[%s2] sm:$0x3]
      %v5629 = vlaneseq
      %v5630 = vshrl.u32 %v5629, 7
      %v5631 = vsub.s32 0, %v5630
      %v5632 = vrot.slane %v5627, %v5631
      %v5633 = vlaneseq
      %v5634 = vshrl.u32 %v5633, 7
      %v5635 = vsub.s32 1, %v5634
      %v5636 = vrot.slane %v5627, %v5635
      %v5639 = vadd.f32 %v5555, %v5632
      %v5640 = vadd.f32 %v5556, %v5636
      %v5641 = vadd.f32 %v5557, %v5632
      %v5642 = vadd.f32 %v5558, %v5636
      %v5643 = vadd.f32 %v5559, %v5632
      %v5644 = vadd.f32 %v5560, %v5636
      %v5645 = vadd.f32 %v5561, %v5632
      %v5646 = vadd.f32 %v5562, %v5636
      %v5647 = vadd.f32 %v5563, %v5632
      %v5648 = vadd.f32 %v5564, %v5636
      %v5649 = vadd.f32 %v5565, %v5632
      %v5650 = vadd.f32 %v5566, %v5636
      %v5651 = vadd.f32 %v5567, %v5632
      %v5652 = vadd.f32 %v5568, %v5636
      %v5653 = vadd.f32 %v5569, %v5632
      %v5654 = vadd.f32 %v5570, %v5636
      %v5655 = vadd.f32 %v5571, %v5632
      %v5656 = vadd.f32 %v5572, %v5636
      %v5657 = vadd.f32 %v5573, %v5632
      %v5658 = vadd.f32 %v5574, %v5636
      %v5659 = vadd.f32 %v5575, %v5632
      %v5660 = vadd.f32 %v5576, %v5636
      %v5661 = vadd.f32 %v5577, %v5632
      %v5662 = vadd.f32 %v5578, %v5636
      %v5663 = vadd.f32 %v5579, %v5632
      %v5664 = vadd.f32 %v5580, %v5636
      %v5665 = vadd.f32 %v5581, %v5632
      %v5666 = vadd.f32 %v5582, %v5636
      %v5667 = vadd.f32 %v5583, %v5632
      %v5668 = vadd.f32 %v5584, %v5636
      %v5669 = vadd.f32 %v5585, %v5632
      %v5670 = vadd.f32 %v5586, %v5636
      %v5671 = vadd.f32 %v5587, %v5632
      %v5672 = vadd.f32 %v5588, %v5636
      %v5673 = vadd.f32 %v5589, %v5632
      %v5674 = vadd.f32 %v5590, %v5636
      %v5675 = vadd.f32 %v5591, %v5632
      %v5676 = vadd.f32 %v5592, %v5636
      %v5677 = vadd.f32 %v5593, %v5632
      %v5678 = vadd.f32 %v5594, %v5636
      %v5679 = vadd.f32 %v5595, %v5632
      %v5680 = vadd.f32 %v5596, %v5636
      %v5681 = vadd.f32 %v5597, %v5632
      %v5682 = vadd.f32 %v5598, %v5636
      %v5683 = vadd.f32 %v5599, %v5632
      %v5684 = vadd.f32 %v5600, %v5636
      %v5685 = vadd.f32 %v5601, %v5632
      %v5686 = vadd.f32 %v5602, %v5636
      %v5687 = vadd.f32 %v5603, %v5632
      %v5688 = vadd.f32 %v5604, %v5636
      %v5689 = vadd.f32 %v5605, %v5632
      %v5690 = vadd.f32 %v5606, %v5636
      %v5691 = vadd.f32 %v5607, %v5632
      %v5692 = vadd.f32 %v5608, %v5636
      %v5693 = vadd.f32 %v5609, %v5632
      %v5694 = vadd.f32 %v5610, %v5636
      %v5695 = vadd.f32 %v5611, %v5632
      %v5696 = vadd.f32 %v5612, %v5636
      %v5697 = vadd.f32 %v5613, %v5632
      %v5698 = vadd.f32 %v5614, %v5636
      %v5699 = vadd.f32 %v5615, %v5632
      %v5700 = vadd.f32 %v5616, %v5636
      %v5701 = vadd.f32 %v5617, %v5632
      %v5702 = vadd.f32 %v5618, %v5636
      %v5703 = vadd.f32 %v5619, %v5632
      %v5704 = vadd.f32 %v5620, %v5636
      %v5705 = vadd.f32 %v5621, %v5632
      %v5706 = vadd.f32 %v5622, %v5636
      %v5707 = vadd.f32 %v5623, %v5632
      %v5708 = vadd.f32 %v5624, %v5636
      %v5709 = vadd.f32 %v5625, %v5632
      %v5710 = vadd.f32 %v5626, %v5636
      %v5711 = vmax.f32 %v5639, 0.0
      %v5712 = vmax.f32 %v5640, 0.0
      %v5713 = vmax.f32 %v5641, 0.0
      %v5714 = vmax.f32 %v5642, 0.0
      %v5715 = vmax.f32 %v5643, 0.0
      %v5716 = vmax.f32 %v5644, 0.0
      %v5717 = vmax.f32 %v5645, 0.0
      %v5718 = vmax.f32 %v5646, 0.0
      %v5719 = vmax.f32 %v5647, 0.0
      %v5720 = vmax.f32 %v5648, 0.0
      %v5721 = vmax.f32 %v5649, 0.0
      %v5722 = vmax.f32 %v5650, 0.0
      %v5723 = vmax.f32 %v5651, 0.0
      %v5724 = vmax.f32 %v5652, 0.0
      %v5725 = vmax.f32 %v5653, 0.0
      %v5726 = vmax.f32 %v5654, 0.0
      %v5727 = vmax.f32 %v5655, 0.0
      %v5728 = vmax.f32 %v5656, 0.0
      %v5729 = vmax.f32 %v5657, 0.0
      %v5730 = vmax.f32 %v5658, 0.0
      %v5731 = vmax.f32 %v5659, 0.0
      %v5732 = vmax.f32 %v5660, 0.0
      %v5733 = vmax.f32 %v5661, 0.0
      %v5734 = vmax.f32 %v5662, 0.0
      %v5735 = vmax.f32 %v5663, 0.0
      %v5736 = vmax.f32 %v5664, 0.0
      %v5737 = vmax.f32 %v5665, 0.0
      %v5738 = vmax.f32 %v5666, 0.0
      %v5739 = vmax.f32 %v5667, 0.0
      %v5740 = vmax.f32 %v5668, 0.0
      %v5741 = vmax.f32 %v5669, 0.0
      %v5742 = vmax.f32 %v5670, 0.0
      %v5743 = vmax.f32 %v5671, 0.0
      %v5744 = vmax.f32 %v5672, 0.0
      %v5745 = vmax.f32 %v5673, 0.0
      %v5746 = vmax.f32 %v5674, 0.0
      %v5747 = vmax.f32 %v5675, 0.0
      %v5748 = vmax.f32 %v5676, 0.0
      %v5749 = vmax.f32 %v5677, 0.0
      %v5750 = vmax.f32 %v5678, 0.0
      %v5751 = vmax.f32 %v5679, 0.0
      %v5752 = vmax.f32 %v5680, 0.0
      %v5753 = vmax.f32 %v5681, 0.0
      %v5754 = vmax.f32 %v5682, 0.0
      %v5755 = vmax.f32 %v5683, 0.0
      %v5756 = vmax.f32 %v5684, 0.0
      %v5757 = vmax.f32 %v5685, 0.0
      %v5758 = vmax.f32 %v5686, 0.0
      %v5759 = vmax.f32 %v5687, 0.0
      %v5760 = vmax.f32 %v5688, 0.0
      %v5761 = vmax.f32 %v5689, 0.0
      %v5762 = vmax.f32 %v5690, 0.0
      %v5763 = vmax.f32 %v5691, 0.0
      %v5764 = vmax.f32 %v5692, 0.0
      %v5765 = vmax.f32 %v5693, 0.0
      %v5766 = vmax.f32 %v5694, 0.0
      %v5767 = vmax.f32 %v5695, 0.0
      %v5768 = vmax.f32 %v5696, 0.0
      %v5769 = vmax.f32 %v5697, 0.0
      %v5770 = vmax.f32 %v5698, 0.0
      %v5771 = vmax.f32 %v5699, 0.0
      %v5772 = vmax.f32 %v5700, 0.0
      %v5773 = vmax.f32 %v5701, 0.0
      %v5774 = vmax.f32 %v5702, 0.0
      %v5775 = vmax.f32 %v5703, 0.0
      %v5776 = vmax.f32 %v5704, 0.0
      %v5777 = vmax.f32 %v5705, 0.0
      %v5778 = vmax.f32 %v5706, 0.0
      %v5779 = vmax.f32 %v5707, 0.0
      %v5780 = vmax.f32 %v5708, 0.0
      %v5781 = vmax.f32 %v5709, 0.0
      %v5782 = vmax.f32 %v5710, 0.0
      %v5783 = vld [vmem:[%s3] sm:$0xff]
      %v5784 = vld [vmem:[%s3 + $0x8] sm:$0xff]
      %v5785 = vld [vmem:[%s3 + $0x10] sm:$0xff]
      %v5786 = vld [vmem:[%s3 + $0x18] sm:$0xff]
      %v5787 = vld [vmem:[%s3 + $0x20] sm:$0xff]
      %v5788 = vld [vmem:[%s3 + $0x28] sm:$0xff]
      %v5789 = vld [vmem:[%s3 + $0x30] sm:$0xff]
      %v5790 = vld [vmem:[%s3 + $0x38] sm:$0xff]
      %v5791 = vld [vmem:[%s3 + $0x40] sm:$0xff]
      %v5792 = vld [vmem:[%s3 + $0x48] sm:$0xff]
      %v5793 = vld [vmem:[%s3 + $0x50] sm:$0xff]
      %v5794 = vld [vmem:[%s3 + $0x58] sm:$0xff]
      %v5795 = vld [vmem:[%s3 + $0x60] sm:$0xff]
      %v5796 = vld [vmem:[%s3 + $0x68] sm:$0xff]
      %v5797 = vld [vmem:[%s3 + $0x70] sm:$0xff]
      %v5798 = vld [vmem:[%s3 + $0x78] sm:$0xff]
      %v5799 = vld [vmem:[%s3 + $0x80] sm:$0xff]
      %v5800 = vld [vmem:[%s3 + $0x88] sm:$0xff]
      %v5801 = vld [vmem:[%s3 + $0x90] sm:$0xff]
      %v5802 = vld [vmem:[%s3 + $0x98] sm:$0xff]
      %v5803 = vld [vmem:[%s3 + $0xa0] sm:$0xff]
      %v5804 = vld [vmem:[%s3 + $0xa8] sm:$0xff]
      %v5805 = vld [vmem:[%s3 + $0xb0] sm:$0xff]
      %v5806 = vld [vmem:[%s3 + $0xb8] sm:$0xff]
      %v5807 = vld [vmem:[%s3 + $0xc0] sm:$0xff]
      %v5808 = vld [vmem:[%s3 + $0xc8] sm:$0xff]
      %v5809 = vld [vmem:[%s3 + $0xd0] sm:$0xff]
      %v5810 = vld [vmem:[%s3 + $0xd8] sm:$0xff]
      %v5811 = vld [vmem:[%s3 + $0xe0] sm:$0xff]
      %v5812 = vld [vmem:[%s3 + $0xe8] sm:$0xff]
      %v5813 = vld [vmem:[%s3 + $0xf0] sm:$0xff]
      %v5814 = vld [vmem:[%s3 + $0xf8] sm:$0xff]
      %v5815 = vld [vmem:[%s3 + $0x100] sm:$0xff]
      %v5816 = vld [vmem:[%s3 + $0x108] sm:$0xff]
      %v5817 = vld [vmem:[%s3 + $0x110] sm:$0xff]
      %v5818 = vld [vmem:[%s3 + $0x118] sm:$0xff]
      %v5819 = vld [vmem:[%s3 + $0x120] sm:$0xff]
      %v5820 = vld [vmem:[%s3 + $0x128] sm:$0xff]
      %v5821 = vld [vmem:[%s3 + $0x130] sm:$0xff]
      %v5822 = vld [vmem:[%s3 + $0x138] sm:$0xff]
      %v5823 = vld [vmem:[%s3 + $0x140] sm:$0xff]
      %v5824 = vld [vmem:[%s3 + $0x148] sm:$0xff]
      %v5825 = vld [vmem:[%s3 + $0x150] sm:$0xff]
      %v5826 = vld [vmem:[%s3 + $0x158] sm:$0xff]
      %v5827 = vld [vmem:[%s3 + $0x160] sm:$0xff]
      %v5828 = vld [vmem:[%s3 + $0x168] sm:$0xff]
      %v5829 = vld [vmem:[%s3 + $0x170] sm:$0xff]
      %v5830 = vld [vmem:[%s3 + $0x178] sm:$0xff]
      %v5831 = vld [vmem:[%s3 + $0x180] sm:$0xff]
      %v5832 = vld [vmem:[%s3 + $0x188] sm:$0xff]
      %v5833 = vld [vmem:[%s3 + $0x190] sm:$0xff]
      %v5834 = vld [vmem:[%s3 + $0x198] sm:$0xff]
      %v5835 = vld [vmem:[%s3 + $0x1a0] sm:$0xff]
      %v5836 = vld [vmem:[%s3 + $0x1a8] sm:$0xff]
      %v5837 = vld [vmem:[%s3 + $0x1b0] sm:$0xff]
      %v5838 = vld [vmem:[%s3 + $0x1b8] sm:$0xff]
      %v5839 = vld [vmem:[%s3 + $0x1c0] sm:$0xff]
      %v5840 = vld [vmem:[%s3 + $0x1c8] sm:$0xff]
      %v5841 = vld [vmem:[%s3 + $0x1d0] sm:$0xff]
      %v5842 = vld [vmem:[%s3 + $0x1d8] sm:$0xff]
      %v5843 = vld [vmem:[%s3 + $0x1e0] sm:$0xff]
      %v5844 = vld [vmem:[%s3 + $0x1e8] sm:$0xff]
      %v5845 = vld [vmem:[%s3 + $0x1f0] sm:$0xff]
      %v5846 = vld [vmem:[%s3 + $0x1f8] sm:$0xff]
      %v5847 = vld [vmem:[%s4] sm:$0x3]
      %v5849 = vlaneseq
      %v5850 = vshrl.u32 %v5849, 7
      %v5851 = vsub.s32 0, %v5850
      %v5852 = vrot.slane %v5847, %v5851
      %v5853 = vlaneseq
      %v5854 = vshrl.u32 %v5853, 7
      %v5855 = vsub.s32 1, %v5854
      %v5856 = vrot.slane %v5847, %v5855
      %5859 = vmatprep.subr.mxu0 %v5814
      %5860 = vmatpush1.msra.mxu0 %v5813
      %5861 = vmatprep.subr.mxu0 %v5812
      %5862 = vmatpush1.msra.mxu0 %v5811
      %5863 = vmatprep.subr.mxu0 %v5810
      %5864 = vmatpush1.msra.mxu0 %v5809
      %5865 = vmatprep.subr.mxu0 %v5808
      %5866 = vmatpush1.msra.mxu0 %v5807
      %5867 = vmatprep.subr.mxu0 %v5806
      %5868 = vmatpush1.msra.mxu0 %v5805
      %5869 = vmatprep.subr.mxu0 %v5804
      %5870 = vmatpush1.msra.mxu0 %v5803
      %5871 = vmatprep.subr.mxu0 %v5802
      %5872 = vmatpush1.msra.mxu0 %v5801
      %5873 = vmatprep.subr.mxu0 %v5800
      %5874 = vmatpush1.msra.mxu0 %v5799
      %5875 = vmatprep.subr.mxu0 %v5798
      %5876 = vmatpush1.msra.mxu0 %v5797
      %5877 = vmatprep.subr.mxu0 %v5796
      %5878 = vmatpush1.msra.mxu0 %v5795
      %5879 = vmatprep.subr.mxu0 %v5794
      %5880 = vmatpush1.msra.mxu0 %v5793
      %5881 = vmatprep.subr.mxu0 %v5792
      %5882 = vmatpush1.msra.mxu0 %v5791
      %5883 = vmatprep.subr.mxu0 %v5790
      %5884 = vmatpush1.msra.mxu0 %v5789
      %5885 = vmatprep.subr.mxu0 %v5788
      %5886 = vmatpush1.msra.mxu0 %v5787
      %5887 = vmatprep.subr.mxu0 %v5786
      %5888 = vmatpush1.msra.mxu0 %v5785
      %5889 = vmatprep.subr.mxu0 %v5784
      %5890 = vmatpush1.msra.mxu0 %v5783
      %5891 = vmatprep.subr.mxu0 %v5846
      %5892 = vmatpush2.msra.mxu0 %v5845
      %5893 = vmatprep.subr.mxu0 %v5844
      %5894 = vmatpush2.msra.mxu0 %v5843
      %5895 = vmatprep.subr.mxu0 %v5842
      %5896 = vmatpush2.msra.mxu0 %v5841
      %5897 = vmatprep.subr.mxu0 %v5840
      %5898 = vmatpush2.msra.mxu0 %v5839
      %5899 = vmatprep.subr.mxu0 %v5838
      %5900 = vmatpush2.msra.mxu0 %v5837
      %5901 = vmatprep.subr.mxu0 %v5836
      %5902 = vmatpush2.msra.mxu0 %v5835
      %5903 = vmatprep.subr.mxu0 %v5834
      %5904 = vmatpush2.msra.mxu0 %v5833
      %5905 = vmatprep.subr.mxu0 %v5832
      %5906 = vmatpush2.msra.mxu0 %v5831
      %5907 = vmatprep.subr.mxu0 %v5830
      %5908 = vmatpush2.msra.mxu0 %v5829
      %5909 = vmatprep.subr.mxu0 %v5828
      %5910 = vmatpush2.msra.mxu0 %v5827
      %5911 = vmatprep.subr.mxu0 %v5826
      %5912 = vmatpush2.msra.mxu0 %v5825
      %5913 = vmatprep.subr.mxu0 %v5824
      %5914 = vmatpush2.msra.mxu0 %v5823
      %5915 = vmatprep.subr.mxu0 %v5822
      %5916 = vmatpush2.msra.mxu0 %v5821
      %5917 = vmatprep.subr.mxu0 %v5820
      %5918 = vmatpush2.msra.mxu0 %v5819
      %5919 = vmatprep.subr.mxu0 %v5818
      %5920 = vmatpush2.msra.mxu0 %v5817
      %5921 = vmatprep.subr.mxu0 %v5816
      %5922 = vmatpush2.msra.mxu0 %v5815
      %5923 = vmatprep.mubr.f32.mxu0 %v5712
      %5924 = vmatmul.mubr.f32.gmra.mxu0 %v5711
      %v5925 = vpop.f32.mrf.mxu0
      %v5926 = vadd.f32 %v5852, %v5925
      %v5927 = vpop.f32.mrf.mxu0
      %v5928 = vadd.f32 %v5856, %v5927
      %5929 = vmatprep.mubr.f32.mxu0 %v5714
      %5930 = vmatmul.mubr.f32.gmra.mxu0 %v5713
      %v5931 = vpop.f32.mrf.mxu0
      %v5932 = vadd.f32 %v5852, %v5931
      %v5933 = vpop.f32.mrf.mxu0
      %v5934 = vadd.f32 %v5856, %v5933
      %5935 = vmatprep.mubr.f32.mxu0 %v5716
      %5936 = vmatmul.mubr.f32.gmra.mxu0 %v5715
      %v5937 = vpop.f32.mrf.mxu0
      %v5938 = vadd.f32 %v5852, %v5937
      %v5939 = vpop.f32.mrf.mxu0
      %v5940 = vadd.f32 %v5856, %v5939
      %5941 = vmatprep.mubr.f32.mxu0 %v5718
      %5942 = vmatmul.mubr.f32.gmra.mxu0 %v5717
      %v5943 = vpop.f32.mrf.mxu0
      %v5944 = vadd.f32 %v5852, %v5943
      %v5945 = vpop.f32.mrf.mxu0
      %v5946 = vadd.f32 %v5856, %v5945
      %5947 = vmatprep.mubr.f32.mxu0 %v5720
      %5948 = vmatmul.mubr.f32.gmra.mxu0 %v5719
      %v5949 = vpop.f32.mrf.mxu0
      %v5950 = vadd.f32 %v5852, %v5949
      %v5951 = vpop.f32.mrf.mxu0
      %v5952 = vadd.f32 %v5856, %v5951
      %5953 = vmatprep.mubr.f32.mxu0 %v5722
      %5954 = vmatmul.mubr.f32.gmra.mxu0 %v5721
      %v5955 = vpop.f32.mrf.mxu0
      %v5956 = vadd.f32 %v5852, %v5955
      %v5957 = vpop.f32.mrf.mxu0
      %v5958 = vadd.f32 %v5856, %v5957
      %5959 = vmatprep.mubr.f32.mxu0 %v5724
      %5960 = vmatmul.mubr.f32.gmra.mxu0 %v5723
      %v5961 = vpop.f32.mrf.mxu0
      %v5962 = vadd.f32 %v5852, %v5961
      %v5963 = vpop.f32.mrf.mxu0
      %v5964 = vadd.f32 %v5856, %v5963
      %5965 = vmatprep.mubr.f32.mxu0 %v5726
      %5966 = vmatmul.mubr.f32.gmra.mxu0 %v5725
      %v5967 = vpop.f32.mrf.mxu0
      %v5968 = vadd.f32 %v5852, %v5967
      %v5969 = vpop.f32.mrf.mxu0
      %v5970 = vadd.f32 %v5856, %v5969
      %5971 = vmatprep.mubr.f32.mxu0 %v5728
      %5972 = vmatmul.mubr.f32.gmra.mxu0 %v5727
      %v5973 = vpop.f32.mrf.mxu0
      %v5974 = vadd.f32 %v5852, %v5973
      %v5975 = vpop.f32.mrf.mxu0
      %v5976 = vadd.f32 %v5856, %v5975
      %5977 = vmatprep.mubr.f32.mxu0 %v5730
      %5978 = vmatmul.mubr.f32.gmra.mxu0 %v5729
      %v5979 = vpop.f32.mrf.mxu0
      %v5980 = vadd.f32 %v5852, %v5979
      %v5981 = vpop.f32.mrf.mxu0
      %v5982 = vadd.f32 %v5856, %v5981
      %5983 = vmatprep.mubr.f32.mxu0 %v5732
      %5984 = vmatmul.mubr.f32.gmra.mxu0 %v5731
      %v5985 = vpop.f32.mrf.mxu0
      %v5986 = vadd.f32 %v5852, %v5985
      %v5987 = vpop.f32.mrf.mxu0
      %v5988 = vadd.f32 %v5856, %v5987
      %5989 = vmatprep.mubr.f32.mxu0 %v5734
      %5990 = vmatmul.mubr.f32.gmra.mxu0 %v5733
      %v5991 = vpop.f32.mrf.mxu0
      %v5992 = vadd.f32 %v5852, %v5991
      %v5993 = vpop.f32.mrf.mxu0
      %v5994 = vadd.f32 %v5856, %v5993
      %5995 = vmatprep.mubr.f32.mxu0 %v5736
      %5996 = vmatmul.mubr.f32.gmra.mxu0 %v5735
      %v5997 = vpop.f32.mrf.mxu0
      %v5998 = vadd.f32 %v5852, %v5997
      %v5999 = vpop.f32.mrf.mxu0
      %v6000 = vadd.f32 %v5856, %v5999
      %6001 = vmatprep.mubr.f32.mxu0 %v5738
      %6002 = vmatmul.mubr.f32.gmra.mxu0 %v5737
      %v6003 = vpop.f32.mrf.mxu0
      %v6004 = vadd.f32 %v5852, %v6003
      %v6005 = vpop.f32.mrf.mxu0
      %v6006 = vadd.f32 %v5856, %v6005
      %6007 = vmatprep.mubr.f32.mxu0 %v5740
      %6008 = vmatmul.mubr.f32.gmra.mxu0 %v5739
      %v6009 = vpop.f32.mrf.mxu0
      %v6010 = vadd.f32 %v5852, %v6009
      %v6011 = vpop.f32.mrf.mxu0
      %v6012 = vadd.f32 %v5856, %v6011
      %6013 = vmatprep.mubr.f32.mxu0 %v5742
      %6014 = vmatmul.mubr.f32.gmra.mxu0 %v5741
      %v6015 = vpop.f32.mrf.mxu0
      %v6016 = vadd.f32 %v5852, %v6015
      %v6017 = vpop.f32.mrf.mxu0
      %v6018 = vadd.f32 %v5856, %v6017
      %6019 = vmatprep.mubr.f32.mxu0 %v5744
      %6020 = vmatmul.mubr.f32.gmra.mxu0 %v5743
      %v6021 = vpop.f32.mrf.mxu0
      %v6022 = vadd.f32 %v5852, %v6021
      %v6023 = vpop.f32.mrf.mxu0
      %v6024 = vadd.f32 %v5856, %v6023
      %6025 = vmatprep.mubr.f32.mxu0 %v5746
      %6026 = vmatmul.mubr.f32.gmra.mxu0 %v5745
      %v6027 = vpop.f32.mrf.mxu0
      %v6028 = vadd.f32 %v5852, %v6027
      %v6029 = vpop.f32.mrf.mxu0
      %v6030 = vadd.f32 %v5856, %v6029
      %6031 = vmatprep.mubr.f32.mxu0 %v5748
      %6032 = vmatmul.mubr.f32.gmra.mxu0 %v5747
      %v6033 = vpop.f32.mrf.mxu0
      %v6034 = vadd.f32 %v5852, %v6033
      %v6035 = vpop.f32.mrf.mxu0
      %v6036 = vadd.f32 %v5856, %v6035
      %6037 = vmatprep.mubr.f32.mxu0 %v5750
      %6038 = vmatmul.mubr.f32.gmra.mxu0 %v5749
      %v6039 = vpop.f32.mrf.mxu0
      %v6040 = vadd.f32 %v5852, %v6039
      %v6041 = vpop.f32.mrf.mxu0
      %v6042 = vadd.f32 %v5856, %v6041
      %6043 = vmatprep.mubr.f32.mxu0 %v5752
      %6044 = vmatmul.mubr.f32.gmra.mxu0 %v5751
      %v6045 = vpop.f32.mrf.mxu0
      %v6046 = vadd.f32 %v5852, %v6045
      %v6047 = vpop.f32.mrf.mxu0
      %v6048 = vadd.f32 %v5856, %v6047
      %6049 = vmatprep.mubr.f32.mxu0 %v5754
      %6050 = vmatmul.mubr.f32.gmra.mxu0 %v5753
      %v6051 = vpop.f32.mrf.mxu0
      %v6052 = vadd.f32 %v5852, %v6051
      %v6053 = vpop.f32.mrf.mxu0
      %v6054 = vadd.f32 %v5856, %v6053
      %6055 = vmatprep.mubr.f32.mxu0 %v5756
      %6056 = vmatmul.mubr.f32.gmra.mxu0 %v5755
      %v6057 = vpop.f32.mrf.mxu0
      %v6058 = vadd.f32 %v5852, %v6057
      %v6059 = vpop.f32.mrf.mxu0
      %v6060 = vadd.f32 %v5856, %v6059
      %6061 = vmatprep.mubr.f32.mxu0 %v5758
      %6062 = vmatmul.mubr.f32.gmra.mxu0 %v5757
      %v6063 = vpop.f32.mrf.mxu0
      %v6064 = vadd.f32 %v5852, %v6063
      %v6065 = vpop.f32.mrf.mxu0
      %v6066 = vadd.f32 %v5856, %v6065
      %6067 = vmatprep.mubr.f32.mxu0 %v5760
      %6068 = vmatmul.mubr.f32.gmra.mxu0 %v5759
      %v6069 = vpop.f32.mrf.mxu0
      %v6070 = vadd.f32 %v5852, %v6069
      %v6071 = vpop.f32.mrf.mxu0
      %v6072 = vadd.f32 %v5856, %v6071
      %6073 = vmatprep.mubr.f32.mxu0 %v5762
      %6074 = vmatmul.mubr.f32.gmra.mxu0 %v5761
      %v6075 = vpop.f32.mrf.mxu0
      %v6076 = vadd.f32 %v5852, %v6075
      %v6077 = vpop.f32.mrf.mxu0
      %v6078 = vadd.f32 %v5856, %v6077
      %6079 = vmatprep.mubr.f32.mxu0 %v5764
      %6080 = vmatmul.mubr.f32.gmra.mxu0 %v5763
      %v6081 = vpop.f32.mrf.mxu0
      %v6082 = vadd.f32 %v5852, %v6081
      %v6083 = vpop.f32.mrf.mxu0
      %v6084 = vadd.f32 %v5856, %v6083
      %6085 = vmatprep.mubr.f32.mxu0 %v5766
      %6086 = vmatmul.mubr.f32.gmra.mxu0 %v5765
      %v6087 = vpop.f32.mrf.mxu0
      %v6088 = vadd.f32 %v5852, %v6087
      %v6089 = vpop.f32.mrf.mxu0
      %v6090 = vadd.f32 %v5856, %v6089
      %6091 = vmatprep.mubr.f32.mxu0 %v5768
      %6092 = vmatmul.mubr.f32.gmra.mxu0 %v5767
      %v6093 = vpop.f32.mrf.mxu0
      %v6094 = vadd.f32 %v5852, %v6093
      %v6095 = vpop.f32.mrf.mxu0
      %v6096 = vadd.f32 %v5856, %v6095
      %6097 = vmatprep.mubr.f32.mxu0 %v5770
      %6098 = vmatmul.mubr.f32.gmra.mxu0 %v5769
      %v6099 = vpop.f32.mrf.mxu0
      %v6100 = vadd.f32 %v5852, %v6099
      %v6101 = vpop.f32.mrf.mxu0
      %v6102 = vadd.f32 %v5856, %v6101
      %6103 = vmatprep.mubr.f32.mxu0 %v5772
      %6104 = vmatmul.mubr.f32.gmra.mxu0 %v5771
      %v6105 = vpop.f32.mrf.mxu0
      %v6106 = vadd.f32 %v5852, %v6105
      %v6107 = vpop.f32.mrf.mxu0
      %v6108 = vadd.f32 %v5856, %v6107
      %6109 = vmatprep.mubr.f32.mxu0 %v5774
      %6110 = vmatmul.mubr.f32.gmra.mxu0 %v5773
      %v6111 = vpop.f32.mrf.mxu0
      %v6112 = vadd.f32 %v5852, %v6111
      %v6113 = vpop.f32.mrf.mxu0
      %v6114 = vadd.f32 %v5856, %v6113
      %6115 = vmatprep.mubr.f32.mxu0 %v5776
      %6116 = vmatmul.mubr.f32.gmra.mxu0 %v5775
      %v6117 = vpop.f32.mrf.mxu0
      %v6118 = vadd.f32 %v5852, %v6117
      %v6119 = vpop.f32.mrf.mxu0
      %v6120 = vadd.f32 %v5856, %v6119
      %6121 = vmatprep.mubr.f32.mxu0 %v5778
      %6122 = vmatmul.mubr.f32.gmra.mxu0 %v5777
      %v6123 = vpop.f32.mrf.mxu0
      %v6124 = vadd.f32 %v5852, %v6123
      %v6125 = vpop.f32.mrf.mxu0
      %v6126 = vadd.f32 %v5856, %v6125
      %6127 = vmatprep.mubr.f32.mxu0 %v5780
      %6128 = vmatmul.mubr.f32.gmra.mxu0 %v5779
      %v6129 = vpop.f32.mrf.mxu0
      %v6130 = vadd.f32 %v5852, %v6129
      %v6131 = vpop.f32.mrf.mxu0
      %v6132 = vadd.f32 %v5856, %v6131
      %6133 = vmatprep.mubr.f32.mxu0 %v5782
      %6134 = vmatmul.mubr.f32.gmra.mxu0 %v5781
      %v6135 = vpop.f32.mrf.mxu0
      %v6136 = vadd.f32 %v5852, %v6135
      %v6137 = vpop.f32.mrf.mxu0
      %v6138 = vadd.f32 %v5856, %v6137
      %6139 = vdwg.mxu0
      %6140 = vst [vmem:[%s224] sm:$0xff] %v5926
      %6141 = vst [vmem:[%s224 + $0x8] sm:$0xff] %v5928
      %6142 = vst [vmem:[%s224 + $0x10] sm:$0xff] %v5932
      %6143 = vst [vmem:[%s224 + $0x18] sm:$0xff] %v5934
      %6144 = vst [vmem:[%s224 + $0x20] sm:$0xff] %v5938
      %6145 = vst [vmem:[%s224 + $0x28] sm:$0xff] %v5940
      %6146 = vst [vmem:[%s224 + $0x30] sm:$0xff] %v5944
      %6147 = vst [vmem:[%s224 + $0x38] sm:$0xff] %v5946
      %6148 = vst [vmem:[%s224 + $0x40] sm:$0xff] %v5950
      %6149 = vst [vmem:[%s224 + $0x48] sm:$0xff] %v5952
      %6150 = vst [vmem:[%s224 + $0x50] sm:$0xff] %v5956
      %6151 = vst [vmem:[%s224 + $0x58] sm:$0xff] %v5958
      %6152 = vst [vmem:[%s224 + $0x60] sm:$0xff] %v5962
      %6153 = vst [vmem:[%s224 + $0x68] sm:$0xff] %v5964
      %6154 = vst [vmem:[%s224 + $0x70] sm:$0xff] %v5968
      %6155 = vst [vmem:[%s224 + $0x78] sm:$0xff] %v5970
      %6156 = vst [vmem:[%s224 + $0x80] sm:$0xff] %v5974
      %6157 = vst [vmem:[%s224 + $0x88] sm:$0xff] %v5976
      %6158 = vst [vmem:[%s224 + $0x90] sm:$0xff] %v5980
      %6159 = vst [vmem:[%s224 + $0x98] sm:$0xff] %v5982
      %6160 = vst [vmem:[%s224 + $0xa0] sm:$0xff] %v5986
      %6161 = vst [vmem:[%s224 + $0xa8] sm:$0xff] %v5988
      %6162 = vst [vmem:[%s224 + $0xb0] sm:$0xff] %v5992
      %6163 = vst [vmem:[%s224 + $0xb8] sm:$0xff] %v5994
      %6164 = vst [vmem:[%s224 + $0xc0] sm:$0xff] %v5998
      %6165 = vst [vmem:[%s224 + $0xc8] sm:$0xff] %v6000
      %6166 = vst [vmem:[%s224 + $0xd0] sm:$0xff] %v6004
      %6167 = vst [vmem:[%s224 + $0xd8] sm:$0xff] %v6006
      %6168 = vst [vmem:[%s224 + $0xe0] sm:$0xff] %v6010
      %6169 = vst [vmem:[%s224 + $0xe8] sm:$0xff] %v6012
      %6170 = vst [vmem:[%s224 + $0xf0] sm:$0xff] %v6016
      %6171 = vst [vmem:[%s224 + $0xf8] sm:$0xff] %v6018
      %6172 = vst [vmem:[%s224 + $0x100] sm:$0xff] %v6022
      %6173 = vst [vmem:[%s224 + $0x108] sm:$0xff] %v6024
      %6174 = vst [vmem:[%s224 + $0x110] sm:$0xff] %v6028
      %6175 = vst [vmem:[%s224 + $0x118] sm:$0xff] %v6030
      %6176 = vst [vmem:[%s224 + $0x120] sm:$0xff] %v6034
      %6177 = vst [vmem:[%s224 + $0x128] sm:$0xff] %v6036
      %6178 = vst [vmem:[%s224 + $0x130] sm:$0xff] %v6040
      %6179 = vst [vmem:[%s224 + $0x138] sm:$0xff] %v6042
      %6180 = vst [vmem:[%s224 + $0x140] sm:$0xff] %v6046
      %6181 = vst [vmem:[%s224 + $0x148] sm:$0xff] %v6048
      %6182 = vst [vmem:[%s224 + $0x150] sm:$0xff] %v6052
      %6183 = vst [vmem:[%s224 + $0x158] sm:$0xff] %v6054
      %6184 = vst [vmem:[%s224 + $0x160] sm:$0xff] %v6058
      %6185 = vst [vmem:[%s224 + $0x168] sm:$0xff] %v6060
      %6186 = vst [vmem:[%s224 + $0x170] sm:$0xff] %v6064
      %6187 = vst [vmem:[%s224 + $0x178] sm:$0xff] %v6066
      %6188 = vst [vmem:[%s224 + $0x180] sm:$0xff] %v6070
      %6189 = vst [vmem:[%s224 + $0x188] sm:$0xff] %v6072
      %6190 = vst [vmem:[%s224 + $0x190] sm:$0xff] %v6076
      %6191 = vst [vmem:[%s224 + $0x198] sm:$0xff] %v6078
      %6192 = vst [vmem:[%s224 + $0x1a0] sm:$0xff] %v6082
      %6193 = vst [vmem:[%s224 + $0x1a8] sm:$0xff] %v6084
      %6194 = vst [vmem:[%s224 + $0x1b0] sm:$0xff] %v6088
      %6195 = vst [vmem:[%s224 + $0x1b8] sm:$0xff] %v6090
      %6196 = vst [vmem:[%s224 + $0x1c0] sm:$0xff] %v6094
      %6197 = vst [vmem:[%s224 + $0x1c8] sm:$0xff] %v6096
      %6198 = vst [vmem:[%s224 + $0x1d0] sm:$0xff] %v6100
      %6199 = vst [vmem:[%s224 + $0x1d8] sm:$0xff] %v6102
      %6200 = vst [vmem:[%s224 + $0x1e0] sm:$0xff] %v6106
      %6201 = vst [vmem:[%s224 + $0x1e8] sm:$0xff] %v6108
      %6202 = vst [vmem:[%s224 + $0x1f0] sm:$0xff] %v6112
      %6203 = vst [vmem:[%s224 + $0x1f8] sm:$0xff] %v6114
      %6204 = vst [vmem:[%s224 + $0x200] sm:$0xff] %v6118
      %6205 = vst [vmem:[%s224 + $0x208] sm:$0xff] %v6120
      %6206 = vst [vmem:[%s224 + $0x210] sm:$0xff] %v6124
      %6207 = vst [vmem:[%s224 + $0x218] sm:$0xff] %v6126
      %6208 = vst [vmem:[%s224 + $0x220] sm:$0xff] %v6130
      %6209 = vst [vmem:[%s224 + $0x228] sm:$0xff] %v6132
      %6210 = vst [vmem:[%s224 + $0x230] sm:$0xff] %v6136
      %6211 = vst [vmem:[%s224 + $0x238] sm:$0xff] %v6138
      %p6212 = scmp.lt.s32.totalorder %s16, 1
      %s6213 = scalar_select %p6212, %s16, 1
      %s6214 = smul.addr %s6213, 72
      %s6215 = smul.addr %s6214, 8
      %s6216 = scalar_lea.vmem %s5, %s6215
      // Predicated region
      $region41: #{decoder_block_pallas.1} parent=39 // pred_check
        %p6217 = pneg %p144
      $region42: #{decoder_block_pallas.1} parent=39 // pred_check_branch
        %6219 = sbr.rel (%p6217) target = $region44
      $region43: #{decoder_block_pallas.1} parent=39 // pred_region
        _
      $region44: #{decoder_block_pallas.1} parent=39 // pred_fallthru
        _
    $region40: #{decoder_block_pallas.1} parent=5 // pred_fallthru
      _
    %p6220 = scmp.le.s32.totalorder 2, %s11
    // Predicated region
    $region45: #{decoder_block_pallas.1} parent=5 // pred_check
      %p6221 = pneg %p6220
    $region46: #{decoder_block_pallas.1} parent=5 // pred_check_branch
      %6223 = sbr.rel (%p6221) target = $region48
    $region47: #{decoder_block_pallas.1} parent=5 // pred_region
      %s6224 = ssub.s32 %s11, 2
      // Predicated region
      $region49: #{decoder_block_pallas.1} parent=47 // pred_check
        %p6225 = pneg %p150
      $region50: #{decoder_block_pallas.1} parent=47 // pred_check_branch
        %6227 = sbr.rel (%p6225) target = $region52
      $region51: #{decoder_block_pallas.1} parent=47 // pred_region
        %p6228 = scmp.lt.s32.totalorder %s17, 1
        %s6229 = scalar_select %p6228, %s17, 1
        %s6230 = smul.addr %s6229, 72
        %s6231 = smul.addr %s6230, 8
        %s6232 = scalar_lea.vmem %s5, %s6231
      $region52: #{decoder_block_pallas.1} parent=47 // pred_fallthru
        _
    $region48: #{decoder_block_pallas.1} parent=5 // pred_fallthru
      _
  $region6: #{decoder_block_pallas.1} parent=0 // loop_footer
    %s15 = sadd.s32 1, %s11
  $region7: #{decoder_block_pallas.1} parent=0 // loop_footer_branch
    %10 = sbr.rel target = $region3
  $region8: #{decoder_block_pallas.1} parent=0 // loop_exit
    _

</llo_original>
